<compile_context>
chip_gen: v6e
topology: v6e:2x2x1
jax: 0.10.0
libtpu: 0.0.40
codegen_flags: <defaults>
</compile_context>

<pallas_src>
import math
import functools

import numpy as np
import jax
import jax.numpy as jnp
from jax.experimental import pallas as pl
from jax.experimental.pallas import tpu as pltpu

SCALED_SILU_SCALE = 1.0 / 0.6  # ScaledSiLU: silu(x) / 0.6


def _round_up(v, m):
    return -(-v // m) * m


def _tpu_generation():
    """Best-effort (vmem_bytes, num_tensorcores, is_v7x) for the local TPU."""
    kind = ""
    try:
        kind = jax.devices()[0].device_kind.lower()
    except Exception:
        pass
    is_v7 = "v7" in kind
    vmem_bytes = None
    try:
        info = pltpu.get_tpu_info()
        vmem_bytes = int(getattr(info, "vmem_capacity_bytes"))
    except Exception:
        vmem_bytes = None
    if not vmem_bytes or vmem_bytes <= 0:
        vmem_bytes = (64 << 20) if is_v7 else (128 << 20)
    num_cores = 2 if is_v7 else 1
    return vmem_bytes, num_cores, is_v7


def _choose_tile_n(N, H, itemsize, vmem_bytes, num_cores):
    """Largest node tile (multiple of 8) whose double-buffered I/O tiles plus
    f32 intermediates fit VMEM next to the single-buffered resident weights.
    Single-TC chips get one largest tile; v7x aims for num_cores balanced steps."""
    weight_bytes = (7 * H * H + 4 * H) * itemsize        # resident, single-buffered
    headroom = 8 << 20                                   # compiler scratch / semaphores
    io_budget = max(vmem_bytes - weight_bytes - headroom, 4 << 20)
    # Per node row: double-buffered in/out tiles (x + 3*vec + dx + 3*dvec = 8
    # planes of (1, H) in the I/O dtype) + ~10 (1, H) f32 intermediates.
    per_row = 2 * 8 * H * itemsize + 10 * H * 4
    tn_max = max(8, (io_budget // per_row) // 8 * 8)
    target = _round_up(max(-(-N // num_cores), 1), 8)
    tn = int(min(tn_max, target))
    if num_cores > 1:
        # Prefer a step count that is a multiple of the core count (best effort).
        for cand in range(tn, max(8, tn - 64) - 1, -8):
            if (-(-N // cand)) % num_cores == 0:
                tn = cand
                break
    return tn


def _painn_update_kernel(*refs, hidden, tile_n, fuse_wide):
    H, tn = hidden, tile_n
    inv_sqrt_2 = 1.0 / math.sqrt(2.0)
    inv_sqrt_h = 1.0 / math.sqrt(H)

    if fuse_wide:
        (x_ref, vec_ref, wv_ref, w1x_ref, w1v_ref, b1_ref,
         w2_ref, b2_ref, dx_ref, dvec_ref) = refs
    else:
        (x_ref, vec_ref, wv1_ref, wv2_ref, w1x_ref, w1v_ref, b1_ref,
         w2a_ref, w2b_ref, w2c_ref, b2a_ref, b2b_ref, b2c_ref,
         dx_ref, dvec_ref) = refs

    # (3, tn, H) -> (3*tn, H): collapse the 3-vector axis into the matmul M
    # dimension (layout no-op since tn % 8 == 0) so the MXU sees one big matmul.
    vec_flat = vec_ref[...].reshape(3 * tn, H)

    # vec_proj (bias=False), f32 accumulation.
    if fuse_wide:
        vp = jnp.dot(vec_flat, wv_ref[...],
                     preferred_element_type=jnp.float32).reshape(3, tn, 2 * H)
        vec1, vec2 = vp[..., :H], vp[..., H:]          # lane-aligned slices (H % 128 == 0)
    else:
        vec1 = jnp.dot(vec_flat, wv1_ref[...],
                       preferred_element_type=jnp.float32).reshape(3, tn, H)
        vec2 = jnp.dot(vec_flat, wv2_ref[...],
                       preferred_element_type=jnp.float32).reshape(3, tn, H)

    # Reductions over the 3-vector axis (torch dim=1 / dim=-2), kept in f32.
    vec_dot = jnp.sum(vec1 * vec2, axis=0) * inv_sqrt_h            # (tn, H)
    vec2_norm = jnp.sqrt(jnp.sum(vec2 * vec2, axis=0) + 1e-8)      # (tn, H)

    # xvec_proj[0]: Linear(2H -> H) without the lane-axis concat:
    #   h1 = x @ W1[:H, :] + vec2_norm @ W1[H:, :] + b1
    h1 = (jnp.dot(x_ref[...], w1x_ref[...], preferred_element_type=jnp.float32)
          + jnp.dot(vec2_norm.astype(w1v_ref.dtype), w1v_ref[...],
                    preferred_element_type=jnp.float32)
          + b1_ref[...].astype(jnp.float32))
    # ScaledSiLU (sigmoid lowers to the EUP; math stays in f32)
    h1 = h1 * jax.nn.sigmoid(h1) * SCALED_SILU_SCALE
    h1 = h1.astype(w1x_ref.dtype)

    # xvec_proj[2]: Linear(H -> 3H).
    if fuse_wide:
        h2 = (jnp.dot(h1, w2_ref[...], preferred_element_type=jnp.float32)
              + b2_ref[...].astype(jnp.float32))
        xvec1, xvec2, xvec3 = h2[:, :H], h2[:, H:2 * H], h2[:, 2 * H:]
    else:
        xvec1 = jnp.dot(h1, w2a_ref[...], preferred_element_type=jnp.float32) + b2a_ref[...]
        xvec2 = jnp.dot(h1, w2b_ref[...], preferred_element_type=jnp.float32) + b2b_ref[...]
        xvec3 = jnp.dot(h1, w2c_ref[...], preferred_element_type=jnp.float32) + b2c_ref[...]

    dx = (xvec1 + xvec2 * vec_dot) * inv_sqrt_2                    # (tn, H)
    dvec = xvec3[None, :, :] * vec1                                # (3, tn, H)

    dx_ref[...] = dx.astype(dx_ref.dtype)
    dvec_ref[...] = dvec.astype(dvec_ref.dtype)


def painn_update(x, vec, params, *, tile_n=None, compute_dtype=None, interpret=False):
    """x: (N, H), vec: (3, N, H). Returns (dx (N, H), dvec (3, N, H))."""
    N, H = x.shape
    assert vec.shape == (3, N, H)
    wv, w1, b1, w2, b2 = params

    if compute_dtype is not None:
        x = x.astype(compute_dtype)
        vec = vec.astype(compute_dtype)
        wv, w1, b1, w2, b2 = (a.astype(compute_dtype) for a in (wv, w1, b1, w2, b2))
    dtype = x.dtype
    itemsize = jnp.dtype(dtype).itemsize

    vmem_bytes, num_cores, is_v7 = _tpu_generation()
    tn = tile_n or _choose_tile_n(N, H, itemsize, vmem_bytes, num_cores)
    tn = max(8, _round_up(int(tn), 8))

    # Pad the node axis so the grid covers it exactly: a few zero rows are far
    # cheaper than collapsing to a tiny tile on awkward N.
    n_pad = _round_up(N, tn)
    if n_pad != N:
        x = jnp.pad(x, ((0, n_pad - N), (0, 0)))
        vec = jnp.pad(vec, ((0, 0), (0, n_pad - N), (0, 0)))

    # Fuse the wide RHS matmuls when lane slices of the f32 result are aligned
    # (fills the 256-lane MXU on v6e/v7x); otherwise keep pre-split weights.
    fuse_wide = (H % 128 == 0)
    # TODO(synk): for H < 128 the dx/dvec stores are lane-masked (vst.msk) and
    # every vreg/MXU column is (128-H)/128 padded; a dense-lane repack (folding
    # node groups into the lane axis) would be needed for full store bandwidth.

    w1x, w1v = w1[:H, :], w1[H:, :]                                # xvec_proj[0] K-split
    if fuse_wide:
        operands = (x, vec, wv, w1x, w1v, b1, w2, b2)
        weight_shapes = [(H, 2 * H), (H, H), (H, H), (1, H), (H, 3 * H), (1, 3 * H)]
    else:
        wv1, wv2 = wv[:, :H], wv[:, H:]                            # vec_proj
        w2a, w2b, w2c = w2[:, :H], w2[:, H:2 * H], w2[:, 2 * H:]   # xvec_proj[2]
        b2a, b2b, b2c = b2[:, :H], b2[:, H:2 * H], b2[:, 2 * H:]
        operands = (x, vec, wv1, wv2, w1x, w1v, b1, w2a, w2b, w2c, b2a, b2b, b2c)
        weight_shapes = [(H, H)] * 4 + [(1, H)] + [(H, H)] * 3 + [(1, H)] * 3

    # Generation-aware VMEM limit (7*H^2+4H resident weights; 2x covers the
    # double-buffered fallback; f32 intermediates included).
    weight_bytes = (7 * H * H + 4 * H) * itemsize
    io_bytes = 2 * 8 * tn * H * itemsize      # double-buffered x/vec/dx/dvec tiles
    tmp_bytes = 10 * tn * H * 4               # f32 intermediates
    vmem_cap = (56 << 20) if is_v7 else (100 << 20)
    vmem_limit = int(min(vmem_cap,
                         max(32 << 20, 2 * weight_bytes + io_bytes + tmp_bytes + (4 << 20))))

    cost = pl.CostEstimate(
        flops=22 * N * H * H,                 # 12NH^2 + 4NH^2 + 6NH^2
        transcendentals=N * H,                # sigmoid
        bytes_accessed=itemsize * (8 * N * H + 7 * H * H + 4 * H))

    kernel = functools.partial(_painn_update_kernel,
                               hidden=H, tile_n=tn, fuse_wide=fuse_wide)
    x_spec = pl.BlockSpec((tn, H), lambda i: (i, 0))
    vec_spec = pl.BlockSpec((3, tn, H), lambda i: (0, i, 0))

    def build(optimized):
        def weight_spec(shape):
            idx = lambda i: (0, 0)             # resident across all grid steps
            if optimized and hasattr(pl, "Buffered"):
                try:
                    # Constant index map -> second pipeline buffer is pure waste.
                    return pl.BlockSpec(shape, idx, pipeline_mode=pl.Buffered(1))
                except TypeError:
                    pass
            return pl.BlockSpec(shape, idx)

        if optimized and is_v7 and hasattr(pltpu, "CORE_PARALLEL"):
            dims = (pltpu.CORE_PARALLEL,)      # shard node axis across both v7x TCs
        else:
            dims = ("parallel",)

        return pl.pallas_call(
            kernel,
            out_shape=(jax.ShapeDtypeStruct((n_pad, H), dtype),
                       jax.ShapeDtypeStruct((3, n_pad, H), dtype)),
            grid=(n_pad // tn,),
            in_specs=[x_spec, vec_spec] + [weight_spec(s) for s in weight_shapes],
            out_specs=(pl.BlockSpec((tn, H), lambda i: (i, 0)),
                       pl.BlockSpec((3, tn, H), lambda i: (0, i, 0))),
            compiler_params=pltpu.CompilerParams(
                dimension_semantics=dims, vmem_limit_bytes=vmem_limit),
            cost_estimate=cost,
            interpret=interpret,
        )

    try:
        dx, dvec = build(optimized=True)(*operands)
    except Exception:
        # Conservative fallback (double-buffered weights, plain "parallel") for
        # JAX/Mosaic versions that reject single-buffering / core_parallel.
        dx, dvec = build(optimized=False)(*operands)

    if n_pad != N:
        dx, dvec = dx[:N], dvec[:, :N]
    return dx, dvec


def init_params(key, hidden, dtype=jnp.float32):
    """Deterministic synthetic weights matching PaiNNUpdate.__init__ shapes
    (Xavier-uniform weights, zero biases), stored transposed (in, out)."""
    H = hidden
    k1, k2, k3 = jax.random.split(key, 3)

    def xavier(k, fan_in, fan_out):
        bound = math.sqrt(6.0 / (fan_in + fan_out))
        return jax.random.uniform(k, (fan_in, fan_out), dtype, -bound, bound)

    wv = xavier(k1, H, 2 * H)         # vec_proj (bias=False)
    w1 = xavier(k2, 2 * H, H)         # xvec_proj[0]
    b1 = jnp.zeros((1, H), dtype)
    w2 = xavier(k3, H, 3 * H)         # xvec_proj[2]
    b2 = jnp.zeros((1, 3 * H), dtype)
    return wv, w1, b1, w2, b2


def painn_update_ref(x, vec, params):
    """Plain-JAX reference mirroring the PyTorch forward (for correctness)."""
    H = x.shape[-1]
    wv, w1, b1, w2, b2 = params
    hp = jax.lax.Precision.HIGHEST
    vp = jnp.einsum('dnh,hk->dnk', vec, wv, precision=hp)
    vec1, vec2 = vp[..., :H], vp[..., H:]
    vec_dot = jnp.sum(vec1 * vec2, axis=0) / math.sqrt(H)
    xin = jnp.concatenate([x, jnp.sqrt(jnp.sum(vec2 ** 2, axis=0) + 1e-8)], axis=-1)
    h1 = jnp.dot(xin, w1, precision=hp) + b1
    h1 = h1 * jax.nn.sigmoid(h1) * SCALED_SILU_SCALE
    h2 = jnp.dot(h1, w2, precision=hp) + b2
    xvec1, xvec2, xvec3 = h2[:, :H], h2[:, H:2 * H], h2[:, 2 * H:]
    dx = (xvec1 + xvec2 * vec_dot) / math.sqrt(2.0)
    dvec = xvec3[None, :, :] * vec1
    return dx, dvec


if __name__ == "__main__":
    key = jax.random.PRNGKey(0)
    kx, kv, kp, k2 = jax.random.split(key, 4)

    # Case 1: small hidden (H < 128, masked-store lane path), matches hidden=32.
    N, H = 64, 32
    x = jax.random.normal(kx, (N, H), jnp.float32)
    vec = jax.random.normal(kv, (3, N, H), jnp.float32)   # torch (N, 3, H) -> (3, N, H)
    params = init_params(kp, H)
    dx, dvec = painn_update(x, vec, params)
    jax.block_until_ready((dx, dvec))
    dx_ref, dvec_ref = painn_update_ref(x, vec, params)
    np.testing.assert_allclose(np.asarray(dx), np.asarray(dx_ref), rtol=1e-4, atol=1e-4)
    np.testing.assert_allclose(np.asarray(dvec), np.asarray(dvec_ref), rtol=1e-4, atol=1e-4)

    # Case 2: H % 128 == 0 (fused wide MXU dots) with awkward N (exercises padding).
    N2, H2 = 50, 128
    ka, kb, kc = jax.random.split(k2, 3)
    x2 = jax.random.normal(ka, (N2, H2), jnp.float32)
    vec2 = jax.random.normal(kb, (3, N2, H2), jnp.float32)
    params2 = init_params(kc, H2)
    dx2, dvec2 = painn_update(x2, vec2, params2)
    jax.block_until_ready((dx2, dvec2))
    dx2_ref, dvec2_ref = painn_update_ref(x2, vec2, params2)
    np.testing.assert_allclose(np.asarray(dx2), np.asarray(dx2_ref), rtol=1e-4, atol=1e-4)
    np.testing.assert_allclose(np.asarray(dvec2), np.asarray(dvec2_ref), rtol=1e-4, atol=1e-4)

    # Case 3: bf16 fast path (HBM-bound regime) — shape/finiteness sanity check.
    dx3, dvec3 = painn_update(x2, vec2, params2, compute_dtype=jnp.bfloat16)
    jax.block_until_ready((dx3, dvec3))
    assert dx3.shape == (N2, H2) and dvec3.shape == (3, N2, H2)
    assert bool(jnp.all(jnp.isfinite(dx3.astype(jnp.float32))))
    assert bool(jnp.all(jnp.isfinite(dvec3.astype(jnp.float32))))

    print("KERNEL_OK")
</pallas_src>

<mosaic_0001>
module attributes {stable_mosaic.version = 11 : i64} {
  func.func @_painn_update_kernel(%arg0: i32, %arg1: memref<64x32xf32, #tpu.memory_space<vmem>>, %arg2: memref<3x64x32xf32, #tpu.memory_space<vmem>>, %arg3: memref<32x32xf32, #tpu.memory_space<vmem>>, %arg4: memref<32x32xf32, #tpu.memory_space<vmem>>, %arg5: memref<32x32xf32, #tpu.memory_space<vmem>>, %arg6: memref<32x32xf32, #tpu.memory_space<vmem>>, %arg7: memref<1x32xf32, #tpu.memory_space<vmem>>, %arg8: memref<32x32xf32, #tpu.memory_space<vmem>>, %arg9: memref<32x32xf32, #tpu.memory_space<vmem>>, %arg10: memref<32x32xf32, #tpu.memory_space<vmem>>, %arg11: memref<1x32xf32, #tpu.memory_space<vmem>>, %arg12: memref<1x32xf32, #tpu.memory_space<vmem>>, %arg13: memref<1x32xf32, #tpu.memory_space<vmem>>, %arg14: memref<64x32xf32, #tpu.memory_space<vmem>>, %arg15: memref<3x64x32xf32, #tpu.memory_space<vmem>>) attributes {dimension_semantics = [#tpu.dimension_semantics<parallel>], iteration_bounds = array<i64: 1>, scalar_prefetch = 0 : i64, scratch_operands = 0 : i64, tpu.core_type = #tpu.core_type<tc>, window_params = [{transform_indices = @transform_0, window_bounds = array<i64: 64, 32>}, {transform_indices = @transform_1, window_bounds = array<i64: 3, 64, 32>}, {pipeline_mode = #tpu.pipeline_mode<synchronous>, transform_indices = @transform_2, window_bounds = array<i64: 32, 32>}, {pipeline_mode = #tpu.pipeline_mode<synchronous>, transform_indices = @transform_3, window_bounds = array<i64: 32, 32>}, {pipeline_mode = #tpu.pipeline_mode<synchronous>, transform_indices = @transform_4, window_bounds = array<i64: 32, 32>}, {pipeline_mode = #tpu.pipeline_mode<synchronous>, transform_indices = @transform_5, window_bounds = array<i64: 32, 32>}, {pipeline_mode = #tpu.pipeline_mode<synchronous>, transform_indices = @transform_6, window_bounds = array<i64: 1, 32>}, {pipeline_mode = #tpu.pipeline_mode<synchronous>, transform_indices = @transform_7, window_bounds = array<i64: 32, 32>}, {pipeline_mode = #tpu.pipeline_mode<synchronous>, transform_indices = @transform_8, window_bounds = array<i64: 32, 32>}, {pipeline_mode = #tpu.pipeline_mode<synchronous>, transform_indices = @transform_9, window_bounds = array<i64: 32, 32>}, {pipeline_mode = #tpu.pipeline_mode<synchronous>, transform_indices = @transform_10, window_bounds = array<i64: 1, 32>}, {pipeline_mode = #tpu.pipeline_mode<synchronous>, transform_indices = @transform_11, window_bounds = array<i64: 1, 32>}, {pipeline_mode = #tpu.pipeline_mode<synchronous>, transform_indices = @transform_12, window_bounds = array<i64: 1, 32>}, {transform_indices = @transform_13, window_bounds = array<i64: 64, 32>}, {transform_indices = @transform_14, window_bounds = array<i64: 3, 64, 32>}]} {
    %c0 = arith.constant 0 : index
    %c0_0 = arith.constant 0 : index
    %c0_1 = arith.constant 0 : index
    %0 = vector.load %arg2[%c0, %c0_0, %c0_1] : memref<3x64x32xf32, #tpu.memory_space<vmem>>, vector<3x64x32xf32>
    %1 = vector.shape_cast %0 : vector<3x64x32xf32> to vector<192x32xf32>
    %c0_2 = arith.constant 0 : index
    %c0_3 = arith.constant 0 : index
    %2 = vector.load %arg3[%c0_2, %c0_3] : memref<32x32xf32, #tpu.memory_space<vmem>>, vector<32x32xf32>
    %cst = arith.constant dense<0.000000e+00> : vector<192x32xf32>
    %3 = tpu.matmul %1, %2, %cst {dimension_numbers = #tpu.dot_dimension_numbers<[1], [0], [0], [1], [0, 0, 1, 1], [], []>} : vector<192x32xf32>, vector<32x32xf32>, vector<192x32xf32> -> vector<192x32xf32>
    %4 = vector.shape_cast %3 : vector<192x32xf32> to vector<3x64x32xf32>
    %c0_4 = arith.constant 0 : index
    %c0_5 = arith.constant 0 : index
    %5 = vector.load %arg4[%c0_4, %c0_5] : memref<32x32xf32, #tpu.memory_space<vmem>>, vector<32x32xf32>
    %cst_6 = arith.constant dense<0.000000e+00> : vector<192x32xf32>
    %6 = tpu.matmul %1, %5, %cst_6 {dimension_numbers = #tpu.dot_dimension_numbers<[1], [0], [0], [1], [0, 0, 1, 1], [], []>} : vector<192x32xf32>, vector<32x32xf32>, vector<192x32xf32> -> vector<192x32xf32>
    %7 = vector.shape_cast %6 : vector<192x32xf32> to vector<3x64x32xf32>
    %8 = arith.mulf %4, %7 : vector<3x64x32xf32>
    %cst_7 = arith.constant dense<0.000000e+00> : vector<64x32xf32>
    %9 = vector.multi_reduction <add>, %8, %cst_7 [0] : vector<3x64x32xf32> to vector<64x32xf32>
    %cst_8 = arith.constant 0.176776692 : f32
    %10 = vector.broadcast %cst_8 : f32 to vector<64x32xf32>
    %11 = arith.mulf %9, %10 : vector<64x32xf32>
    %12 = arith.mulf %7, %7 : vector<3x64x32xf32>
    %cst_9 = arith.constant dense<0.000000e+00> : vector<64x32xf32>
    %13 = vector.multi_reduction <add>, %12, %cst_9 [0] : vector<3x64x32xf32> to vector<64x32xf32>
    %cst_10 = arith.constant 9.99999993E-9 : f32
    %14 = vector.broadcast %cst_10 : f32 to vector<64x32xf32>
    %15 = arith.addf %13, %14 : vector<64x32xf32>
    %16 = math.sqrt %15 : vector<64x32xf32>
    %c0_11 = arith.constant 0 : index
    %c0_12 = arith.constant 0 : index
    %17 = vector.load %arg1[%c0_11, %c0_12] : memref<64x32xf32, #tpu.memory_space<vmem>>, vector<64x32xf32>
    %c0_13 = arith.constant 0 : index
    %c0_14 = arith.constant 0 : index
    %18 = vector.load %arg5[%c0_13, %c0_14] : memref<32x32xf32, #tpu.memory_space<vmem>>, vector<32x32xf32>
    %cst_15 = arith.constant dense<0.000000e+00> : vector<64x32xf32>
    %19 = tpu.matmul %17, %18, %cst_15 {dimension_numbers = #tpu.dot_dimension_numbers<[1], [0], [0], [1], [0, 0, 1, 1], [], []>} : vector<64x32xf32>, vector<32x32xf32>, vector<64x32xf32> -> vector<64x32xf32>
    %c0_16 = arith.constant 0 : index
    %c0_17 = arith.constant 0 : index
    %20 = vector.load %arg6[%c0_16, %c0_17] : memref<32x32xf32, #tpu.memory_space<vmem>>, vector<32x32xf32>
    %cst_18 = arith.constant dense<0.000000e+00> : vector<64x32xf32>
    %21 = tpu.matmul %16, %20, %cst_18 {dimension_numbers = #tpu.dot_dimension_numbers<[1], [0], [0], [1], [0, 0, 1, 1], [], []>} : vector<64x32xf32>, vector<32x32xf32>, vector<64x32xf32> -> vector<64x32xf32>
    %22 = arith.addf %19, %21 : vector<64x32xf32>
    %c0_19 = arith.constant 0 : index
    %c0_20 = arith.constant 0 : index
    %23 = vector.load %arg7[%c0_19, %c0_20] : memref<1x32xf32, #tpu.memory_space<vmem>>, vector<1x32xf32>
    %24 = vector.broadcast %23 : vector<1x32xf32> to vector<64x32xf32>
    %25 = arith.addf %22, %24 : vector<64x32xf32>
    %26 = arith.negf %25 : vector<64x32xf32>
    %27 = math.exp %26 : vector<64x32xf32>
    %cst_21 = arith.constant 1.000000e+00 : f32
    %28 = vector.broadcast %cst_21 : f32 to vector<64x32xf32>
    %29 = arith.addf %28, %27 : vector<64x32xf32>
    %30 = arith.divf %28, %29 : vector<64x32xf32>
    %31 = arith.mulf %25, %30 : vector<64x32xf32>
    %cst_22 = arith.constant 1.66666663 : f32
    %32 = vector.broadcast %cst_22 : f32 to vector<64x32xf32>
    %33 = arith.mulf %31, %32 : vector<64x32xf32>
    %c0_23 = arith.constant 0 : index
    %c0_24 = arith.constant 0 : index
    %34 = vector.load %arg8[%c0_23, %c0_24] : memref<32x32xf32, #tpu.memory_space<vmem>>, vector<32x32xf32>
    %cst_25 = arith.constant dense<0.000000e+00> : vector<64x32xf32>
    %35 = tpu.matmul %33, %34, %cst_25 {dimension_numbers = #tpu.dot_dimension_numbers<[1], [0], [0], [1], [0, 0, 1, 1], [], []>} : vector<64x32xf32>, vector<32x32xf32>, vector<64x32xf32> -> vector<64x32xf32>
    %c0_26 = arith.constant 0 : index
    %c0_27 = arith.constant 0 : index
    %36 = vector.load %arg11[%c0_26, %c0_27] : memref<1x32xf32, #tpu.memory_space<vmem>>, vector<1x32xf32>
    %37 = vector.broadcast %36 : vector<1x32xf32> to vector<64x32xf32>
    %38 = arith.addf %35, %37 : vector<64x32xf32>
    %c0_28 = arith.constant 0 : index
    %c0_29 = arith.constant 0 : index
    %39 = vector.load %arg9[%c0_28, %c0_29] : memref<32x32xf32, #tpu.memory_space<vmem>>, vector<32x32xf32>
    %cst_30 = arith.constant dense<0.000000e+00> : vector<64x32xf32>
    %40 = tpu.matmul %33, %39, %cst_30 {dimension_numbers = #tpu.dot_dimension_numbers<[1], [0], [0], [1], [0, 0, 1, 1], [], []>} : vector<64x32xf32>, vector<32x32xf32>, vector<64x32xf32> -> vector<64x32xf32>
    %c0_31 = arith.constant 0 : index
    %c0_32 = arith.constant 0 : index
    %41 = vector.load %arg12[%c0_31, %c0_32] : memref<1x32xf32, #tpu.memory_space<vmem>>, vector<1x32xf32>
    %42 = vector.broadcast %41 : vector<1x32xf32> to vector<64x32xf32>
    %43 = arith.addf %40, %42 : vector<64x32xf32>
    %c0_33 = arith.constant 0 : index
    %c0_34 = arith.constant 0 : index
    %44 = vector.load %arg10[%c0_33, %c0_34] : memref<32x32xf32, #tpu.memory_space<vmem>>, vector<32x32xf32>
    %cst_35 = arith.constant dense<0.000000e+00> : vector<64x32xf32>
    %45 = tpu.matmul %33, %44, %cst_35 {dimension_numbers = #tpu.dot_dimension_numbers<[1], [0], [0], [1], [0, 0, 1, 1], [], []>} : vector<64x32xf32>, vector<32x32xf32>, vector<64x32xf32> -> vector<64x32xf32>
    %c0_36 = arith.constant 0 : index
    %c0_37 = arith.constant 0 : index
    %46 = vector.load %arg13[%c0_36, %c0_37] : memref<1x32xf32, #tpu.memory_space<vmem>>, vector<1x32xf32>
    %47 = vector.broadcast %46 : vector<1x32xf32> to vector<64x32xf32>
    %48 = arith.addf %45, %47 : vector<64x32xf32>
    %49 = arith.mulf %43, %11 : vector<64x32xf32>
    %50 = arith.addf %38, %49 : vector<64x32xf32>
    %cst_38 = arith.constant 0.707106769 : f32
    %51 = vector.broadcast %cst_38 : f32 to vector<64x32xf32>
    %52 = arith.mulf %50, %51 : vector<64x32xf32>
    %53 = vector.shape_cast %48 : vector<64x32xf32> to vector<1x64x32xf32>
    %54 = vector.broadcast %53 : vector<1x64x32xf32> to vector<3x64x32xf32>
    %55 = arith.mulf %54, %4 : vector<3x64x32xf32>
    %c0_39 = arith.constant 0 : index
    %c0_40 = arith.constant 0 : index
    %56 = vector.load %arg14[%c0_39, %c0_40] : memref<64x32xf32, #tpu.memory_space<vmem>>, vector<64x32xf32>
    tpu.vector_store %arg14[%c0_39, %c0_40], %52 {strides = array<i32>} : memref<64x32xf32, #tpu.memory_space<vmem>>, vector<64x32xf32>,
    %c0_41 = arith.constant 0 : index
    %c0_42 = arith.constant 0 : index
    %c0_43 = arith.constant 0 : index
    %57 = vector.load %arg15[%c0_41, %c0_42, %c0_43] : memref<3x64x32xf32, #tpu.memory_space<vmem>>, vector<3x64x32xf32>
    tpu.vector_store %arg15[%c0_41, %c0_42, %c0_43], %55 {strides = array<i32>} : memref<3x64x32xf32, #tpu.memory_space<vmem>>, vector<3x64x32xf32>,
    return
  }
  func.func @transform_0(%arg0: i32) -> (i32, i32) {
    %c0_i32 = arith.constant 0 : i32
    %c0_i32_0 = arith.constant 0 : i32
    return %arg0, %c0_i32 : i32, i32
  }
  func.func @transform_1(%arg0: i32) -> (i32, i32, i32) {
    %c0_i32 = arith.constant 0 : i32
    %c0_i32_0 = arith.constant 0 : i32
    %c0_i32_1 = arith.constant 0 : i32
    return %c0_i32, %arg0, %c0_i32_0 : i32, i32, i32
  }
  func.func @transform_2(%arg0: i32) -> (i32, i32) {
    %c0_i32 = arith.constant 0 : i32
    %c0_i32_0 = arith.constant 0 : i32
    %c0_i32_1 = arith.constant 0 : i32
    return %c0_i32, %c0_i32_0 : i32, i32
  }
  func.func @transform_3(%arg0: i32) -> (i32, i32) {
    %c0_i32 = arith.constant 0 : i32
    %c0_i32_0 = arith.constant 0 : i32
    %c0_i32_1 = arith.constant 0 : i32
    return %c0_i32, %c0_i32_0 : i32, i32
  }
  func.func @transform_4(%arg0: i32) -> (i32, i32) {
    %c0_i32 = arith.constant 0 : i32
    %c0_i32_0 = arith.constant 0 : i32
    %c0_i32_1 = arith.constant 0 : i32
    return %c0_i32, %c0_i32_0 : i32, i32
  }
  func.func @transform_5(%arg0: i32) -> (i32, i32) {
    %c0_i32 = arith.constant 0 : i32
    %c0_i32_0 = arith.constant 0 : i32
    %c0_i32_1 = arith.constant 0 : i32
    return %c0_i32, %c0_i32_0 : i32, i32
  }
  func.func @transform_6(%arg0: i32) -> (i32, i32) {
    %c0_i32 = arith.constant 0 : i32
    %c0_i32_0 = arith.constant 0 : i32
    %c0_i32_1 = arith.constant 0 : i32
    return %c0_i32, %c0_i32_0 : i32, i32
  }
  func.func @transform_7(%arg0: i32) -> (i32, i32) {
    %c0_i32 = arith.constant 0 : i32
    %c0_i32_0 = arith.constant 0 : i32
    %c0_i32_1 = arith.constant 0 : i32
    return %c0_i32, %c0_i32_0 : i32, i32
  }
  func.func @transform_8(%arg0: i32) -> (i32, i32) {
    %c0_i32 = arith.constant 0 : i32
    %c0_i32_0 = arith.constant 0 : i32
    %c0_i32_1 = arith.constant 0 : i32
    return %c0_i32, %c0_i32_0 : i32, i32
  }
  func.func @transform_9(%arg0: i32) -> (i32, i32) {
    %c0_i32 = arith.constant 0 : i32
    %c0_i32_0 = arith.constant 0 : i32
    %c0_i32_1 = arith.constant 0 : i32
    return %c0_i32, %c0_i32_0 : i32, i32
  }
  func.func @transform_10(%arg0: i32) -> (i32, i32) {
    %c0_i32 = arith.constant 0 : i32
    %c0_i32_0 = arith.constant 0 : i32
    %c0_i32_1 = arith.constant 0 : i32
    return %c0_i32, %c0_i32_0 : i32, i32
  }
  func.func @transform_11(%arg0: i32) -> (i32, i32) {
    %c0_i32 = arith.constant 0 : i32
    %c0_i32_0 = arith.constant 0 : i32
    %c0_i32_1 = arith.constant 0 : i32
    return %c0_i32, %c0_i32_0 : i32, i32
  }
  func.func @transform_12(%arg0: i32) -> (i32, i32) {
    %c0_i32 = arith.constant 0 : i32
    %c0_i32_0 = arith.constant 0 : i32
    %c0_i32_1 = arith.constant 0 : i32
    return %c0_i32, %c0_i32_0 : i32, i32
  }
  func.func @transform_13(%arg0: i32) -> (i32, i32) {
    %c0_i32 = arith.constant 0 : i32
    %c0_i32_0 = arith.constant 0 : i32
    return %arg0, %c0_i32 : i32, i32
  }
  func.func @transform_14(%arg0: i32) -> (i32, i32, i32) {
    %c0_i32 = arith.constant 0 : i32
    %c0_i32_0 = arith.constant 0 : i32
    %c0_i32_1 = arith.constant 0 : i32
    return %c0_i32, %arg0, %c0_i32_0 : i32, i32, i32
  }
}

module attributes {stable_mosaic.version = 11 : i64} {
  func.func @_painn_update_kernel(%arg0: i32, %arg1: memref<64x32xf32, #tpu.memory_space<vmem>>, %arg2: memref<3x64x32xf32, #tpu.memory_space<vmem>>, %arg3: memref<32x32xf32, #tpu.memory_space<vmem>>, %arg4: memref<32x32xf32, #tpu.memory_space<vmem>>, %arg5: memref<32x32xf32, #tpu.memory_space<vmem>>, %arg6: memref<32x32xf32, #tpu.memory_space<vmem>>, %arg7: memref<1x32xf32, #tpu.memory_space<vmem>>, %arg8: memref<32x32xf32, #tpu.memory_space<vmem>>, %arg9: memref<32x32xf32, #tpu.memory_space<vmem>>, %arg10: memref<32x32xf32, #tpu.memory_space<vmem>>, %arg11: memref<1x32xf32, #tpu.memory_space<vmem>>, %arg12: memref<1x32xf32, #tpu.memory_space<vmem>>, %arg13: memref<1x32xf32, #tpu.memory_space<vmem>>, %arg14: memref<64x32xf32, #tpu.memory_space<vmem>>, %arg15: memref<3x64x32xf32, #tpu.memory_space<vmem>>) attributes {dimension_semantics = [#tpu.dimension_semantics<parallel>], iteration_bounds = array<i64: 1>, scalar_prefetch = 0 : i64, scratch_operands = 0 : i64, tpu.core_type = #tpu.core_type<tc>, window_params = [{transform_indices = @transform_0, window_bounds = array<i64: 64, 32>}, {transform_indices = @transform_1, window_bounds = array<i64: 3, 64, 32>}, {pipeline_mode = #tpu.pipeline_mode<synchronous>, transform_indices = @transform_2, window_bounds = array<i64: 32, 32>}, {pipeline_mode = #tpu.pipeline_mode<synchronous>, transform_indices = @transform_3, window_bounds = array<i64: 32, 32>}, {pipeline_mode = #tpu.pipeline_mode<synchronous>, transform_indices = @transform_4, window_bounds = array<i64: 32, 32>}, {pipeline_mode = #tpu.pipeline_mode<synchronous>, transform_indices = @transform_5, window_bounds = array<i64: 32, 32>}, {pipeline_mode = #tpu.pipeline_mode<synchronous>, transform_indices = @transform_6, window_bounds = array<i64: 1, 32>}, {pipeline_mode = #tpu.pipeline_mode<synchronous>, transform_indices = @transform_7, window_bounds = array<i64: 32, 32>}, {pipeline_mode = #tpu.pipeline_mode<synchronous>, transform_indices = @transform_8, window_bounds = array<i64: 32, 32>}, {pipeline_mode = #tpu.pipeline_mode<synchronous>, transform_indices = @transform_9, window_bounds = array<i64: 32, 32>}, {pipeline_mode = #tpu.pipeline_mode<synchronous>, transform_indices = @transform_10, window_bounds = array<i64: 1, 32>}, {pipeline_mode = #tpu.pipeline_mode<synchronous>, transform_indices = @transform_11, window_bounds = array<i64: 1, 32>}, {pipeline_mode = #tpu.pipeline_mode<synchronous>, transform_indices = @transform_12, window_bounds = array<i64: 1, 32>}, {transform_indices = @transform_13, window_bounds = array<i64: 64, 32>}, {transform_indices = @transform_14, window_bounds = array<i64: 3, 64, 32>}]} {
    %c0 = arith.constant 0 : index
    %c0_0 = arith.constant 0 : index
    %c0_1 = arith.constant 0 : index
    %0 = vector.load %arg2[%c0, %c0_0, %c0_1] : memref<3x64x32xf32, #tpu.memory_space<vmem>>, vector<3x64x32xf32>
    %1 = vector.shape_cast %0 : vector<3x64x32xf32> to vector<192x32xf32>
    %c0_2 = arith.constant 0 : index
    %c0_3 = arith.constant 0 : index
    %2 = vector.load %arg3[%c0_2, %c0_3] : memref<32x32xf32, #tpu.memory_space<vmem>>, vector<32x32xf32>
    %cst = arith.constant dense<0.000000e+00> : vector<192x32xf32>
    %3 = tpu.matmul %1, %2, %cst {dimension_numbers = #tpu.dot_dimension_numbers<[1], [0], [0], [1], [0, 0, 1, 1], [], []>} : vector<192x32xf32>, vector<32x32xf32>, vector<192x32xf32> -> vector<192x32xf32>
    %4 = vector.shape_cast %3 : vector<192x32xf32> to vector<3x64x32xf32>
    %c0_4 = arith.constant 0 : index
    %c0_5 = arith.constant 0 : index
    %5 = vector.load %arg4[%c0_4, %c0_5] : memref<32x32xf32, #tpu.memory_space<vmem>>, vector<32x32xf32>
    %cst_6 = arith.constant dense<0.000000e+00> : vector<192x32xf32>
    %6 = tpu.matmul %1, %5, %cst_6 {dimension_numbers = #tpu.dot_dimension_numbers<[1], [0], [0], [1], [0, 0, 1, 1], [], []>} : vector<192x32xf32>, vector<32x32xf32>, vector<192x32xf32> -> vector<192x32xf32>
    %7 = vector.shape_cast %6 : vector<192x32xf32> to vector<3x64x32xf32>
    %8 = arith.mulf %4, %7 : vector<3x64x32xf32>
    %cst_7 = arith.constant dense<0.000000e+00> : vector<64x32xf32>
    %9 = vector.multi_reduction <add>, %8, %cst_7 [0] : vector<3x64x32xf32> to vector<64x32xf32>
    %cst_8 = arith.constant 0.176776692 : f32
    %10 = vector.broadcast %cst_8 : f32 to vector<64x32xf32>
    %11 = arith.mulf %9, %10 : vector<64x32xf32>
    %12 = arith.mulf %7, %7 : vector<3x64x32xf32>
    %cst_9 = arith.constant dense<0.000000e+00> : vector<64x32xf32>
    %13 = vector.multi_reduction <add>, %12, %cst_9 [0] : vector<3x64x32xf32> to vector<64x32xf32>
    %cst_10 = arith.constant 9.99999993E-9 : f32
    %14 = vector.broadcast %cst_10 : f32 to vector<64x32xf32>
    %15 = arith.addf %13, %14 : vector<64x32xf32>
    %16 = math.sqrt %15 : vector<64x32xf32>
    %c0_11 = arith.constant 0 : index
    %c0_12 = arith.constant 0 : index
    %17 = vector.load %arg1[%c0_11, %c0_12] : memref<64x32xf32, #tpu.memory_space<vmem>>, vector<64x32xf32>
    %c0_13 = arith.constant 0 : index
    %c0_14 = arith.constant 0 : index
    %18 = vector.load %arg5[%c0_13, %c0_14] : memref<32x32xf32, #tpu.memory_space<vmem>>, vector<32x32xf32>
    %cst_15 = arith.constant dense<0.000000e+00> : vector<64x32xf32>
    %19 = tpu.matmul %17, %18, %cst_15 {dimension_numbers = #tpu.dot_dimension_numbers<[1], [0], [0], [1], [0, 0, 1, 1], [], []>} : vector<64x32xf32>, vector<32x32xf32>, vector<64x32xf32> -> vector<64x32xf32>
    %c0_16 = arith.constant 0 : index
    %c0_17 = arith.constant 0 : index
    %20 = vector.load %arg6[%c0_16, %c0_17] : memref<32x32xf32, #tpu.memory_space<vmem>>, vector<32x32xf32>
    %cst_18 = arith.constant dense<0.000000e+00> : vector<64x32xf32>
    %21 = tpu.matmul %16, %20, %cst_18 {dimension_numbers = #tpu.dot_dimension_numbers<[1], [0], [0], [1], [0, 0, 1, 1], [], []>} : vector<64x32xf32>, vector<32x32xf32>, vector<64x32xf32> -> vector<64x32xf32>
    %22 = arith.addf %19, %21 : vector<64x32xf32>
    %c0_19 = arith.constant 0 : index
    %c0_20 = arith.constant 0 : index
    %23 = vector.load %arg7[%c0_19, %c0_20] : memref<1x32xf32, #tpu.memory_space<vmem>>, vector<1x32xf32>
    %24 = vector.broadcast %23 : vector<1x32xf32> to vector<64x32xf32>
    %25 = arith.addf %22, %24 : vector<64x32xf32>
    %26 = arith.negf %25 : vector<64x32xf32>
    %27 = math.exp %26 : vector<64x32xf32>
    %cst_21 = arith.constant 1.000000e+00 : f32
    %28 = vector.broadcast %cst_21 : f32 to vector<64x32xf32>
    %29 = arith.addf %28, %27 : vector<64x32xf32>
    %30 = arith.divf %28, %29 : vector<64x32xf32>
    %31 = arith.mulf %25, %30 : vector<64x32xf32>
    %cst_22 = arith.constant 1.66666663 : f32
    %32 = vector.broadcast %cst_22 : f32 to vector<64x32xf32>
    %33 = arith.mulf %31, %32 : vector<64x32xf32>
    %c0_23 = arith.constant 0 : index
    %c0_24 = arith.constant 0 : index
    %34 = vector.load %arg8[%c0_23, %c0_24] : memref<32x32xf32, #tpu.memory_space<vmem>>, vector<32x32xf32>
    %cst_25 = arith.constant dense<0.000000e+00> : vector<64x32xf32>
    %35 = tpu.matmul %33, %34, %cst_25 {dimension_numbers = #tpu.dot_dimension_numbers<[1], [0], [0], [1], [0, 0, 1, 1], [], []>} : vector<64x32xf32>, vector<32x32xf32>, vector<64x32xf32> -> vector<64x32xf32>
    %c0_26 = arith.constant 0 : index
    %c0_27 = arith.constant 0 : index
    %36 = vector.load %arg11[%c0_26, %c0_27] : memref<1x32xf32, #tpu.memory_space<vmem>>, vector<1x32xf32>
    %37 = vector.broadcast %36 : vector<1x32xf32> to vector<64x32xf32>
    %38 = arith.addf %35, %37 : vector<64x32xf32>
    %c0_28 = arith.constant 0 : index
    %c0_29 = arith.constant 0 : index
    %39 = vector.load %arg9[%c0_28, %c0_29] : memref<32x32xf32, #tpu.memory_space<vmem>>, vector<32x32xf32>
    %cst_30 = arith.constant dense<0.000000e+00> : vector<64x32xf32>
    %40 = tpu.matmul %33, %39, %cst_30 {dimension_numbers = #tpu.dot_dimension_numbers<[1], [0], [0], [1], [0, 0, 1, 1], [], []>} : vector<64x32xf32>, vector<32x32xf32>, vector<64x32xf32> -> vector<64x32xf32>
    %c0_31 = arith.constant 0 : index
    %c0_32 = arith.constant 0 : index
    %41 = vector.load %arg12[%c0_31, %c0_32] : memref<1x32xf32, #tpu.memory_space<vmem>>, vector<1x32xf32>
    %42 = vector.broadcast %41 : vector<1x32xf32> to vector<64x32xf32>
    %43 = arith.addf %40, %42 : vector<64x32xf32>
    %c0_33 = arith.constant 0 : index
    %c0_34 = arith.constant 0 : index
    %44 = vector.load %arg10[%c0_33, %c0_34] : memref<32x32xf32, #tpu.memory_space<vmem>>, vector<32x32xf32>
    %cst_35 = arith.constant dense<0.000000e+00> : vector<64x32xf32>
    %45 = tpu.matmul %33, %44, %cst_35 {dimension_numbers = #tpu.dot_dimension_numbers<[1], [0], [0], [1], [0, 0, 1, 1], [], []>} : vector<64x32xf32>, vector<32x32xf32>, vector<64x32xf32> -> vector<64x32xf32>
    %c0_36 = arith.constant 0 : index
    %c0_37 = arith.constant 0 : index
    %46 = vector.load %arg13[%c0_36, %c0_37] : memref<1x32xf32, #tpu.memory_space<vmem>>, vector<1x32xf32>
    %47 = vector.broadcast %46 : vector<1x32xf32> to vector<64x32xf32>
    %48 = arith.addf %45, %47 : vector<64x32xf32>
    %49 = arith.mulf %43, %11 : vector<64x32xf32>
    %50 = arith.addf %38, %49 : vector<64x32xf32>
    %cst_38 = arith.constant 0.707106769 : f32
    %51 = vector.broadcast %cst_38 : f32 to vector<64x32xf32>
    %52 = arith.mulf %50, %51 : vector<64x32xf32>
    %53 = vector.shape_cast %48 : vector<64x32xf32> to vector<1x64x32xf32>
    %54 = vector.broadcast %53 : vector<1x64x32xf32> to vector<3x64x32xf32>
    %55 = arith.mulf %54, %4 : vector<3x64x32xf32>
    %c0_39 = arith.constant 0 : index
    %c0_40 = arith.constant 0 : index
    %56 = vector.load %arg14[%c0_39, %c0_40] : memref<64x32xf32, #tpu.memory_space<vmem>>, vector<64x32xf32>
    tpu.vector_store %arg14[%c0_39, %c0_40], %52 {strides = array<i32>} : memref<64x32xf32, #tpu.memory_space<vmem>>, vector<64x32xf32>,
    %c0_41 = arith.constant 0 : index
    %c0_42 = arith.constant 0 : index
    %c0_43 = arith.constant 0 : index
    %57 = vector.load %arg15[%c0_41, %c0_42, %c0_43] : memref<3x64x32xf32, #tpu.memory_space<vmem>>, vector<3x64x32xf32>
    tpu.vector_store %arg15[%c0_41, %c0_42, %c0_43], %55 {strides = array<i32>} : memref<3x64x32xf32, #tpu.memory_space<vmem>>, vector<3x64x32xf32>,
    return
  }
  func.func @transform_0(%arg0: i32) -> (i32, i32) {
    %c0_i32 = arith.constant 0 : i32
    %c0_i32_0 = arith.constant 0 : i32
    return %arg0, %c0_i32 : i32, i32
  }
  func.func @transform_1(%arg0: i32) -> (i32, i32, i32) {
    %c0_i32 = arith.constant 0 : i32
    %c0_i32_0 = arith.constant 0 : i32
    %c0_i32_1 = arith.constant 0 : i32
    return %c0_i32, %arg0, %c0_i32_0 : i32, i32, i32
  }
  func.func @transform_2(%arg0: i32) -> (i32, i32) {
    %c0_i32 = arith.constant 0 : i32
    %c0_i32_0 = arith.constant 0 : i32
    %c0_i32_1 = arith.constant 0 : i32
    return %c0_i32, %c0_i32_0 : i32, i32
  }
  func.func @transform_3(%arg0: i32) -> (i32, i32) {
    %c0_i32 = arith.constant 0 : i32
    %c0_i32_0 = arith.constant 0 : i32
    %c0_i32_1 = arith.constant 0 : i32
    return %c0_i32, %c0_i32_0 : i32, i32
  }
  func.func @transform_4(%arg0: i32) -> (i32, i32) {
    %c0_i32 = arith.constant 0 : i32
    %c0_i32_0 = arith.constant 0 : i32
    %c0_i32_1 = arith.constant 0 : i32
    return %c0_i32, %c0_i32_0 : i32, i32
  }
  func.func @transform_5(%arg0: i32) -> (i32, i32) {
    %c0_i32 = arith.constant 0 : i32
    %c0_i32_0 = arith.constant 0 : i32
    %c0_i32_1 = arith.constant 0 : i32
    return %c0_i32, %c0_i32_0 : i32, i32
  }
  func.func @transform_6(%arg0: i32) -> (i32, i32) {
    %c0_i32 = arith.constant 0 : i32
    %c0_i32_0 = arith.constant 0 : i32
    %c0_i32_1 = arith.constant 0 : i32
    return %c0_i32, %c0_i32_0 : i32, i32
  }
  func.func @transform_7(%arg0: i32) -> (i32, i32) {
    %c0_i32 = arith.constant 0 : i32
    %c0_i32_0 = arith.constant 0 : i32
    %c0_i32_1 = arith.constant 0 : i32
    return %c0_i32, %c0_i32_0 : i32, i32
  }
  func.func @transform_8(%arg0: i32) -> (i32, i32) {
    %c0_i32 = arith.constant 0 : i32
    %c0_i32_0 = arith.constant 0 : i32
    %c0_i32_1 = arith.constant 0 : i32
    return %c0_i32, %c0_i32_0 : i32, i32
  }
  func.func @transform_9(%arg0: i32) -> (i32, i32) {
    %c0_i32 = arith.constant 0 : i32
    %c0_i32_0 = arith.constant 0 : i32
    %c0_i32_1 = arith.constant 0 : i32
    return %c0_i32, %c0_i32_0 : i32, i32
  }
  func.func @transform_10(%arg0: i32) -> (i32, i32) {
    %c0_i32 = arith.constant 0 : i32
    %c0_i32_0 = arith.constant 0 : i32
    %c0_i32_1 = arith.constant 0 : i32
    return %c0_i32, %c0_i32_0 : i32, i32
  }
  func.func @transform_11(%arg0: i32) -> (i32, i32) {
    %c0_i32 = arith.constant 0 : i32
    %c0_i32_0 = arith.constant 0 : i32
    %c0_i32_1 = arith.constant 0 : i32
    return %c0_i32, %c0_i32_0 : i32, i32
  }
  func.func @transform_12(%arg0: i32) -> (i32, i32) {
    %c0_i32 = arith.constant 0 : i32
    %c0_i32_0 = arith.constant 0 : i32
    %c0_i32_1 = arith.constant 0 : i32
    return %c0_i32, %c0_i32_0 : i32, i32
  }
  func.func @transform_13(%arg0: i32) -> (i32, i32) {
    %c0_i32 = arith.constant 0 : i32
    %c0_i32_0 = arith.constant 0 : i32
    return %arg0, %c0_i32 : i32, i32
  }
  func.func @transform_14(%arg0: i32) -> (i32, i32, i32) {
    %c0_i32 = arith.constant 0 : i32
    %c0_i32_0 = arith.constant 0 : i32
    %c0_i32_1 = arith.constant 0 : i32
    return %c0_i32, %arg0, %c0_i32_0 : i32, i32, i32
  }
}

</mosaic_0001>

<llo_original>
// kernel: tpu_custom_call.1
$region0: #{tpu_custom_call.1}
  #allocation0 [shape = 'u32[]', space=smem, size = 0x4, offset = 0x4, fixed_abs, tag = 'smem constant byte address 0x4 - core index']
  #allocation1 [shape = 'u32[144,128]{1,0:T(1,128)}', space=vmem, size = 0x12000, scoped, tag = 'internal scratch']
  %s0 = inlined_call_operand.vmem [shape: f32[64,32], index: 0, kind: input, shape index: {}]
  %s1 = inlined_call_operand.vmem [shape: f32[3,64,32], index: 1, kind: input, shape index: {}]
  %s2 = inlined_call_operand.vmem [shape: f32[32,32], index: 2, kind: input, shape index: {}]
  %s3 = inlined_call_operand.vmem [shape: f32[32,32], index: 3, kind: input, shape index: {}]
  %s4 = inlined_call_operand.vmem [shape: f32[32,32], index: 4, kind: input, shape index: {}]
  %s5 = inlined_call_operand.vmem [shape: f32[32,32], index: 5, kind: input, shape index: {}]
  %s6 = inlined_call_operand.vmem [shape: f32[1,32], index: 6, kind: input, shape index: {}]
  %s7 = inlined_call_operand.vmem [shape: f32[32,32], index: 7, kind: input, shape index: {}]
  %s8 = inlined_call_operand.vmem [shape: f32[32,32], index: 8, kind: input, shape index: {}]
  %s9 = inlined_call_operand.vmem [shape: f32[32,32], index: 9, kind: input, shape index: {}]
  %s10 = inlined_call_operand.vmem [shape: f32[1,32], index: 10, kind: input, shape index: {}]
  %s11 = inlined_call_operand.vmem [shape: f32[1,32], index: 11, kind: input, shape index: {}]
  %s12 = inlined_call_operand.vmem [shape: f32[1,32], index: 12, kind: input, shape index: {}]
  %s13 = inlined_call_operand.vmem [shape: f32[64,32], index: 13, kind: output, shape index: {0}]
  %s14 = inlined_call_operand.vmem [shape: f32[3,64,32], index: 14, kind: output, shape index: {1}]
  %15 = xla_tuple %s13, %s14
  %s16 = sld [smem:[#allocation0]]
  $region70: #{tpu_custom_call.1} parent=0
    _
  %s18 = ssub.s32 1, %s16
  %s19 = scalar_select 0, %s18, %s16
  // Predicated region
  $region2: #{tpu_custom_call.1} parent=0 // pred_check
    _
  $region3: #{tpu_custom_call.1} parent=0 // pred_check_branch
    %21 = sbr.rel (0) target = $region5
  $region4: #{tpu_custom_call.1} parent=0 // pred_region
    _
  $region5: #{tpu_custom_call.1} parent=0 // pred_fallthru
    _
  // Predicated region
  $region6: #{tpu_custom_call.1} parent=0 // pred_check
    _
  $region7: #{tpu_custom_call.1} parent=0 // pred_check_branch
    %23 = sbr.rel (0) target = $region9
  $region8: #{tpu_custom_call.1} parent=0 // pred_region
    _
  $region9: #{tpu_custom_call.1} parent=0 // pred_fallthru
    _
  // Predicated region
  $region10: #{tpu_custom_call.1} parent=0 // pred_check
    _
  $region11: #{tpu_custom_call.1} parent=0 // pred_check_branch
    %25 = sbr.rel (0) target = $region13
  $region12: #{tpu_custom_call.1} parent=0 // pred_region
    _
  $region13: #{tpu_custom_call.1} parent=0 // pred_fallthru
    _
  // Predicated region
  $region14: #{tpu_custom_call.1} parent=0 // pred_check
    _
  $region15: #{tpu_custom_call.1} parent=0 // pred_check_branch
    %27 = sbr.rel (0) target = $region17
  $region16: #{tpu_custom_call.1} parent=0 // pred_region
    _
  $region17: #{tpu_custom_call.1} parent=0 // pred_fallthru
    _
  // Predicated region
  $region18: #{tpu_custom_call.1} parent=0 // pred_check
    _
  $region19: #{tpu_custom_call.1} parent=0 // pred_check_branch
    %29 = sbr.rel (0) target = $region21
  $region20: #{tpu_custom_call.1} parent=0 // pred_region
    _
  $region21: #{tpu_custom_call.1} parent=0 // pred_fallthru
    _
  // Predicated region
  $region22: #{tpu_custom_call.1} parent=0 // pred_check
    _
  $region23: #{tpu_custom_call.1} parent=0 // pred_check_branch
    %31 = sbr.rel (0) target = $region25
  $region24: #{tpu_custom_call.1} parent=0 // pred_region
    _
  $region25: #{tpu_custom_call.1} parent=0 // pred_fallthru
    _
  // Predicated region
  $region26: #{tpu_custom_call.1} parent=0 // pred_check
    _
  $region27: #{tpu_custom_call.1} parent=0 // pred_check_branch
    %33 = sbr.rel (0) target = $region29
  $region28: #{tpu_custom_call.1} parent=0 // pred_region
    _
  $region29: #{tpu_custom_call.1} parent=0 // pred_fallthru
    _
  // Predicated region
  $region30: #{tpu_custom_call.1} parent=0 // pred_check
    _
  $region31: #{tpu_custom_call.1} parent=0 // pred_check_branch
    %35 = sbr.rel (0) target = $region33
  $region32: #{tpu_custom_call.1} parent=0 // pred_region
    _
  $region33: #{tpu_custom_call.1} parent=0 // pred_fallthru
    _
  // Predicated region
  $region34: #{tpu_custom_call.1} parent=0 // pred_check
    _
  $region35: #{tpu_custom_call.1} parent=0 // pred_check_branch
    %37 = sbr.rel (0) target = $region37
  $region36: #{tpu_custom_call.1} parent=0 // pred_region
    _
  $region37: #{tpu_custom_call.1} parent=0 // pred_fallthru
    _
  // Predicated region
  $region38: #{tpu_custom_call.1} parent=0 // pred_check
    _
  $region39: #{tpu_custom_call.1} parent=0 // pred_check_branch
    %39 = sbr.rel (0) target = $region41
  $region40: #{tpu_custom_call.1} parent=0 // pred_region
    _
  $region41: #{tpu_custom_call.1} parent=0 // pred_fallthru
    _
  // Predicated region
  $region42: #{tpu_custom_call.1} parent=0 // pred_check
    _
  $region43: #{tpu_custom_call.1} parent=0 // pred_check_branch
    %41 = sbr.rel (0) target = $region45
  $region44: #{tpu_custom_call.1} parent=0 // pred_region
    _
  $region45: #{tpu_custom_call.1} parent=0 // pred_fallthru
    _
  // Predicated region
  $region46: #{tpu_custom_call.1} parent=0 // pred_check
    _
  $region47: #{tpu_custom_call.1} parent=0 // pred_check_branch
    %43 = sbr.rel (0) target = $region49
  $region48: #{tpu_custom_call.1} parent=0 // pred_region
    _
  $region49: #{tpu_custom_call.1} parent=0 // pred_fallthru
    _
  // Predicated region
  $region50: #{tpu_custom_call.1} parent=0 // pred_check
    _
  $region51: #{tpu_custom_call.1} parent=0 // pred_check_branch
    %45 = sbr.rel (0) target = $region53
  $region52: #{tpu_custom_call.1} parent=0 // pred_region
    _
  $region53: #{tpu_custom_call.1} parent=0 // pred_fallthru
    _
  %v46 = vld [vmem:[%s1] sm:$0xff]
  %v47 = vld [vmem:[%s1 + $0x8] sm:$0xff]
  %v48 = vld [vmem:[%s1 + $0x10] sm:$0xff]
  %v49 = vld [vmem:[%s1 + $0x18] sm:$0xff]
  %v50 = vld [vmem:[%s1 + $0x20] sm:$0xff]
  %v51 = vld [vmem:[%s1 + $0x28] sm:$0xff]
  %v52 = vld [vmem:[%s1 + $0x30] sm:$0xff]
  %v53 = vld [vmem:[%s1 + $0x38] sm:$0xff]
  %v54 = vld [vmem:[%s1 + $0x40] sm:$0xff]
  %v55 = vld [vmem:[%s1 + $0x48] sm:$0xff]
  %v56 = vld [vmem:[%s1 + $0x50] sm:$0xff]
  %v57 = vld [vmem:[%s1 + $0x58] sm:$0xff]
  %v58 = vld [vmem:[%s1 + $0x60] sm:$0xff]
  %v59 = vld [vmem:[%s1 + $0x68] sm:$0xff]
  %v60 = vld [vmem:[%s1 + $0x70] sm:$0xff]
  %v61 = vld [vmem:[%s1 + $0x78] sm:$0xff]
  %v62 = vld [vmem:[%s1 + $0x80] sm:$0xff]
  %v63 = vld [vmem:[%s1 + $0x88] sm:$0xff]
  %v64 = vld [vmem:[%s1 + $0x90] sm:$0xff]
  %v65 = vld [vmem:[%s1 + $0x98] sm:$0xff]
  %v66 = vld [vmem:[%s1 + $0xa0] sm:$0xff]
  %v67 = vld [vmem:[%s1 + $0xa8] sm:$0xff]
  %v68 = vld [vmem:[%s1 + $0xb0] sm:$0xff]
  %v69 = vld [vmem:[%s1 + $0xb8] sm:$0xff]
  %v70 = vld [vmem:[%s2] sm:$0xff]
  %v71 = vld [vmem:[%s2 + $0x8] sm:$0xff]
  %v72 = vld [vmem:[%s2 + $0x10] sm:$0xff]
  %v73 = vld [vmem:[%s2 + $0x18] sm:$0xff]
  %vm74 = vcmask 261120
  %v76 = vsel %vm74, %v46, 0
  %v79 = vsel %vm74, %v47, 0
  %v82 = vsel %vm74, %v48, 0
  %v85 = vsel %vm74, %v49, 0
  %v88 = vsel %vm74, %v50, 0
  %v91 = vsel %vm74, %v51, 0
  %v94 = vsel %vm74, %v52, 0
  %v97 = vsel %vm74, %v53, 0
  %v100 = vsel %vm74, %v54, 0
  %v103 = vsel %vm74, %v55, 0
  %v106 = vsel %vm74, %v56, 0
  %v109 = vsel %vm74, %v57, 0
  %v112 = vsel %vm74, %v58, 0
  %v115 = vsel %vm74, %v59, 0
  %v118 = vsel %vm74, %v60, 0
  %v121 = vsel %vm74, %v61, 0
  %v124 = vsel %vm74, %v62, 0
  %v127 = vsel %vm74, %v63, 0
  %v130 = vsel %vm74, %v64, 0
  %v133 = vsel %vm74, %v65, 0
  %v136 = vsel %vm74, %v66, 0
  %v139 = vsel %vm74, %v67, 0
  %v142 = vsel %vm74, %v68, 0
  %v145 = vsel %vm74, %v69, 0
  %147 = vmatprep.subr.mxu0 0.0
  %148 = vmatpush1.msra.mxu0 0.0
  %149 = vmatprep.subr.mxu0 0.0
  %150 = vmatpush1.msra.mxu0 0.0
  %151 = vmatprep.subr.mxu0 0.0
  %152 = vmatpush1.msra.mxu0 0.0
  %153 = vmatprep.subr.mxu0 0.0
  %154 = vmatpush1.msra.mxu0 0.0
  %155 = vmatprep.subr.mxu0 0.0
  %156 = vmatpush1.msra.mxu0 0.0
  %157 = vmatprep.subr.mxu0 0.0
  %158 = vmatpush1.msra.mxu0 0.0
  %159 = vmatprep.subr.mxu0 0.0
  %160 = vmatpush1.msra.mxu0 0.0
  %161 = vmatprep.subr.mxu0 0.0
  %162 = vmatpush1.msra.mxu0 0.0
  %163 = vmatprep.subr.mxu0 0.0
  %164 = vmatpush1.msra.mxu0 0.0
  %165 = vmatprep.subr.mxu0 0.0
  %166 = vmatpush1.msra.mxu0 0.0
  %167 = vmatprep.subr.mxu0 0.0
  %168 = vmatpush1.msra.mxu0 0.0
  %169 = vmatprep.subr.mxu0 0.0
  %170 = vmatpush1.msra.mxu0 0.0
  %171 = vmatprep.subr.mxu0 0.0
  %172 = vmatpush1.msra.mxu0 %v73
  %173 = vmatprep.subr.mxu0 0.0
  %174 = vmatpush1.msra.mxu0 %v72
  %175 = vmatprep.subr.mxu0 0.0
  %176 = vmatpush1.msra.mxu0 %v71
  %177 = vmatprep.subr.mxu0 0.0
  %178 = vmatpush1.msra.mxu0 %v70
  %179 = vmatprep.subr.mxu0 0.0
  %180 = vmatpush2.msra.mxu0 0.0
  %181 = vmatprep.subr.mxu0 0.0
  %182 = vmatpush2.msra.mxu0 0.0
  %183 = vmatprep.subr.mxu0 0.0
  %184 = vmatpush2.msra.mxu0 0.0
  %185 = vmatprep.subr.mxu0 0.0
  %186 = vmatpush2.msra.mxu0 0.0
  %187 = vmatprep.subr.mxu0 0.0
  %188 = vmatpush2.msra.mxu0 0.0
  %189 = vmatprep.subr.mxu0 0.0
  %190 = vmatpush2.msra.mxu0 0.0
  %191 = vmatprep.subr.mxu0 0.0
  %192 = vmatpush2.msra.mxu0 0.0
  %193 = vmatprep.subr.mxu0 0.0
  %194 = vmatpush2.msra.mxu0 0.0
  %195 = vmatprep.subr.mxu0 0.0
  %196 = vmatpush2.msra.mxu0 0.0
  %197 = vmatprep.subr.mxu0 0.0
  %198 = vmatpush2.msra.mxu0 0.0
  %199 = vmatprep.subr.mxu0 0.0
  %200 = vmatpush2.msra.mxu0 0.0
  %201 = vmatprep.subr.mxu0 0.0
  %202 = vmatpush2.msra.mxu0 0.0
  %203 = vmatprep.subr.mxu0 0.0
  %204 = vmatpush2.msra.mxu0 0.0
  %205 = vmatprep.subr.mxu0 0.0
  %206 = vmatpush2.msra.mxu0 0.0
  %207 = vmatprep.subr.mxu0 0.0
  %208 = vmatpush2.msra.mxu0 0.0
  %209 = vmatprep.subr.mxu0 0.0
  %210 = vmatpush2.msra.mxu0 0.0
  %211 = vmatprep.mubr.f32.mxu0 0.0
  %212 = vmatmul.mubr.f32.gmra.mxu0 %v76
  %v213 = vpop.f32.mrf.mxu0
  %v214 = vadd.f32 0.0, %v213
  %v215 = vpop.f32.mrf.mxu0
  %216 = vmatprep.mubr.f32.mxu0 0.0
  %217 = vmatmul.mubr.f32.gmra.mxu0 %v79
  %v218 = vpop.f32.mrf.mxu0
  %v219 = vadd.f32 0.0, %v218
  %v220 = vpop.f32.mrf.mxu0
  %221 = vmatprep.mubr.f32.mxu0 0.0
  %222 = vmatmul.mubr.f32.gmra.mxu0 %v82
  %v223 = vpop.f32.mrf.mxu0
  %v224 = vadd.f32 0.0, %v223
  %v225 = vpop.f32.mrf.mxu0
  %226 = vmatprep.mubr.f32.mxu0 0.0
  %227 = vmatmul.mubr.f32.gmra.mxu0 %v85
  %v228 = vpop.f32.mrf.mxu0
  %v229 = vadd.f32 0.0, %v228
  %v230 = vpop.f32.mrf.mxu0
  %231 = vmatprep.mubr.f32.mxu0 0.0
  %232 = vmatmul.mubr.f32.gmra.mxu0 %v88
  %v233 = vpop.f32.mrf.mxu0
  %v234 = vadd.f32 0.0, %v233
  %v235 = vpop.f32.mrf.mxu0
  %236 = vmatprep.mubr.f32.mxu0 0.0
  %237 = vmatmul.mubr.f32.gmra.mxu0 %v91
  %v238 = vpop.f32.mrf.mxu0
  %v239 = vadd.f32 0.0, %v238
  %v240 = vpop.f32.mrf.mxu0
  %241 = vmatprep.mubr.f32.mxu0 0.0
  %242 = vmatmul.mubr.f32.gmra.mxu0 %v94
  %v243 = vpop.f32.mrf.mxu0
  %v244 = vadd.f32 0.0, %v243
  %v245 = vpop.f32.mrf.mxu0
  %246 = vmatprep.mubr.f32.mxu0 0.0
  %247 = vmatmul.mubr.f32.gmra.mxu0 %v97
  %v248 = vpop.f32.mrf.mxu0
  %v249 = vadd.f32 0.0, %v248
  %v250 = vpop.f32.mrf.mxu0
  %251 = vmatprep.mubr.f32.mxu0 0.0
  %252 = vmatmul.mubr.f32.gmra.mxu0 %v100
  %v253 = vpop.f32.mrf.mxu0
  %v254 = vadd.f32 0.0, %v253
  %v255 = vpop.f32.mrf.mxu0
  %256 = vmatprep.mubr.f32.mxu0 0.0
  %257 = vmatmul.mubr.f32.gmra.mxu0 %v103
  %v258 = vpop.f32.mrf.mxu0
  %v259 = vadd.f32 0.0, %v258
  %v260 = vpop.f32.mrf.mxu0
  %261 = vmatprep.mubr.f32.mxu0 0.0
  %262 = vmatmul.mubr.f32.gmra.mxu0 %v106
  %v263 = vpop.f32.mrf.mxu0
  %v264 = vadd.f32 0.0, %v263
  %v265 = vpop.f32.mrf.mxu0
  %266 = vmatprep.mubr.f32.mxu0 0.0
  %267 = vmatmul.mubr.f32.gmra.mxu0 %v109
  %v268 = vpop.f32.mrf.mxu0
  %v269 = vadd.f32 0.0, %v268
  %v270 = vpop.f32.mrf.mxu0
  %271 = vmatprep.mubr.f32.mxu0 0.0
  %272 = vmatmul.mubr.f32.gmra.mxu0 %v112
  %v273 = vpop.f32.mrf.mxu0
  %v274 = vadd.f32 0.0, %v273
  %v275 = vpop.f32.mrf.mxu0
  %276 = vmatprep.mubr.f32.mxu0 0.0
  %277 = vmatmul.mubr.f32.gmra.mxu0 %v115
  %v278 = vpop.f32.mrf.mxu0
  %v279 = vadd.f32 0.0, %v278
  %v280 = vpop.f32.mrf.mxu0
  %281 = vmatprep.mubr.f32.mxu0 0.0
  %282 = vmatmul.mubr.f32.gmra.mxu0 %v118
  %v283 = vpop.f32.mrf.mxu0
  %v284 = vadd.f32 0.0, %v283
  %v285 = vpop.f32.mrf.mxu0
  %286 = vmatprep.mubr.f32.mxu0 0.0
  %287 = vmatmul.mubr.f32.gmra.mxu0 %v121
  %v288 = vpop.f32.mrf.mxu0
  %v289 = vadd.f32 0.0, %v288
  %v290 = vpop.f32.mrf.mxu0
  %291 = vmatprep.mubr.f32.mxu0 0.0
  %292 = vmatmul.mubr.f32.gmra.mxu0 %v124
  %v293 = vpop.f32.mrf.mxu0
  %v294 = vadd.f32 0.0, %v293
  %v295 = vpop.f32.mrf.mxu0
  %296 = vmatprep.mubr.f32.mxu0 0.0
  %297 = vmatmul.mubr.f32.gmra.mxu0 %v127
  %v298 = vpop.f32.mrf.mxu0
  %v299 = vadd.f32 0.0, %v298
  %v300 = vpop.f32.mrf.mxu0
  %301 = vmatprep.mubr.f32.mxu0 0.0
  %302 = vmatmul.mubr.f32.gmra.mxu0 %v130
  %v303 = vpop.f32.mrf.mxu0
  %v304 = vadd.f32 0.0, %v303
  %v305 = vpop.f32.mrf.mxu0
  %306 = vmatprep.mubr.f32.mxu0 0.0
  %307 = vmatmul.mubr.f32.gmra.mxu0 %v133
  %v308 = vpop.f32.mrf.mxu0
  %v309 = vadd.f32 0.0, %v308
  %v310 = vpop.f32.mrf.mxu0
  %311 = vmatprep.mubr.f32.mxu0 0.0
  %312 = vmatmul.mubr.f32.gmra.mxu0 %v136
  %v313 = vpop.f32.mrf.mxu0
  %v314 = vadd.f32 0.0, %v313
  %v315 = vpop.f32.mrf.mxu0
  %316 = vmatprep.mubr.f32.mxu0 0.0
  %317 = vmatmul.mubr.f32.gmra.mxu0 %v139
  %v318 = vpop.f32.mrf.mxu0
  %v319 = vadd.f32 0.0, %v318
  %v320 = vpop.f32.mrf.mxu0
  %321 = vmatprep.mubr.f32.mxu0 0.0
  %322 = vmatmul.mubr.f32.gmra.mxu0 %v142
  %v323 = vpop.f32.mrf.mxu0
  %v324 = vadd.f32 0.0, %v323
  %v325 = vpop.f32.mrf.mxu0
  %326 = vmatprep.mubr.f32.mxu0 0.0
  %327 = vmatmul.mubr.f32.gmra.mxu0 %v145
  %v328 = vpop.f32.mrf.mxu0
  %v329 = vadd.f32 0.0, %v328
  %v330 = vpop.f32.mrf.mxu0
  %331 = vdwg.mxu0
  %v332 = vld [vmem:[%s3] sm:$0xff]
  %v333 = vld [vmem:[%s3 + $0x8] sm:$0xff]
  %v334 = vld [vmem:[%s3 + $0x10] sm:$0xff]
  %v335 = vld [vmem:[%s3 + $0x18] sm:$0xff]
  %336 = vmatprep.subr.mxu0 0.0
  %337 = vmatpush1.msra.mxu0 0.0
  %338 = vmatprep.subr.mxu0 0.0
  %339 = vmatpush1.msra.mxu0 0.0
  %340 = vmatprep.subr.mxu0 0.0
  %341 = vmatpush1.msra.mxu0 0.0
  %342 = vmatprep.subr.mxu0 0.0
  %343 = vmatpush1.msra.mxu0 0.0
  %344 = vmatprep.subr.mxu0 0.0
  %345 = vmatpush1.msra.mxu0 0.0
  %346 = vmatprep.subr.mxu0 0.0
  %347 = vmatpush1.msra.mxu0 0.0
  %348 = vmatprep.subr.mxu0 0.0
  %349 = vmatpush1.msra.mxu0 0.0
  %350 = vmatprep.subr.mxu0 0.0
  %351 = vmatpush1.msra.mxu0 0.0
  %352 = vmatprep.subr.mxu0 0.0
  %353 = vmatpush1.msra.mxu0 0.0
  %354 = vmatprep.subr.mxu0 0.0
  %355 = vmatpush1.msra.mxu0 0.0
  %356 = vmatprep.subr.mxu0 0.0
  %357 = vmatpush1.msra.mxu0 0.0
  %358 = vmatprep.subr.mxu0 0.0
  %359 = vmatpush1.msra.mxu0 0.0
  %360 = vmatprep.subr.mxu0 0.0
  %361 = vmatpush1.msra.mxu0 %v335
  %362 = vmatprep.subr.mxu0 0.0
  %363 = vmatpush1.msra.mxu0 %v334
  %364 = vmatprep.subr.mxu0 0.0
  %365 = vmatpush1.msra.mxu0 %v333
  %366 = vmatprep.subr.mxu0 0.0
  %367 = vmatpush1.msra.mxu0 %v332
  %368 = vmatprep.subr.mxu0 0.0
  %369 = vmatpush2.msra.mxu0 0.0
  %370 = vmatprep.subr.mxu0 0.0
  %371 = vmatpush2.msra.mxu0 0.0
  %372 = vmatprep.subr.mxu0 0.0
  %373 = vmatpush2.msra.mxu0 0.0
  %374 = vmatprep.subr.mxu0 0.0
  %375 = vmatpush2.msra.mxu0 0.0
  %376 = vmatprep.subr.mxu0 0.0
  %377 = vmatpush2.msra.mxu0 0.0
  %378 = vmatprep.subr.mxu0 0.0
  %379 = vmatpush2.msra.mxu0 0.0
  %380 = vmatprep.subr.mxu0 0.0
  %381 = vmatpush2.msra.mxu0 0.0
  %382 = vmatprep.subr.mxu0 0.0
  %383 = vmatpush2.msra.mxu0 0.0
  %384 = vmatprep.subr.mxu0 0.0
  %385 = vmatpush2.msra.mxu0 0.0
  %386 = vmatprep.subr.mxu0 0.0
  %387 = vmatpush2.msra.mxu0 0.0
  %388 = vmatprep.subr.mxu0 0.0
  %389 = vmatpush2.msra.mxu0 0.0
  %390 = vmatprep.subr.mxu0 0.0
  %391 = vmatpush2.msra.mxu0 0.0
  %392 = vmatprep.subr.mxu0 0.0
  %393 = vmatpush2.msra.mxu0 0.0
  %394 = vmatprep.subr.mxu0 0.0
  %395 = vmatpush2.msra.mxu0 0.0
  %396 = vmatprep.subr.mxu0 0.0
  %397 = vmatpush2.msra.mxu0 0.0
  %398 = vmatprep.subr.mxu0 0.0
  %399 = vmatpush2.msra.mxu0 0.0
  %400 = vmatprep.mubr.f32.mxu0 0.0
  %401 = vmatmul.mubr.f32.gmra.mxu0 %v76
  %v402 = vpop.f32.mrf.mxu0
  %v403 = vadd.f32 0.0, %v402
  %v404 = vpop.f32.mrf.mxu0
  %405 = vmatprep.mubr.f32.mxu0 0.0
  %406 = vmatmul.mubr.f32.gmra.mxu0 %v79
  %v407 = vpop.f32.mrf.mxu0
  %v408 = vadd.f32 0.0, %v407
  %v409 = vpop.f32.mrf.mxu0
  %410 = vmatprep.mubr.f32.mxu0 0.0
  %411 = vmatmul.mubr.f32.gmra.mxu0 %v82
  %v412 = vpop.f32.mrf.mxu0
  %v413 = vadd.f32 0.0, %v412
  %v414 = vpop.f32.mrf.mxu0
  %415 = vmatprep.mubr.f32.mxu0 0.0
  %416 = vmatmul.mubr.f32.gmra.mxu0 %v85
  %v417 = vpop.f32.mrf.mxu0
  %v418 = vadd.f32 0.0, %v417
  %v419 = vpop.f32.mrf.mxu0
  %420 = vmatprep.mubr.f32.mxu0 0.0
  %421 = vmatmul.mubr.f32.gmra.mxu0 %v88
  %v422 = vpop.f32.mrf.mxu0
  %v423 = vadd.f32 0.0, %v422
  %v424 = vpop.f32.mrf.mxu0
  %425 = vmatprep.mubr.f32.mxu0 0.0
  %426 = vmatmul.mubr.f32.gmra.mxu0 %v91
  %v427 = vpop.f32.mrf.mxu0
  %v428 = vadd.f32 0.0, %v427
  %v429 = vpop.f32.mrf.mxu0
  %430 = vmatprep.mubr.f32.mxu0 0.0
  %431 = vmatmul.mubr.f32.gmra.mxu0 %v94
  %v432 = vpop.f32.mrf.mxu0
  %v433 = vadd.f32 0.0, %v432
  %v434 = vpop.f32.mrf.mxu0
  %435 = vmatprep.mubr.f32.mxu0 0.0
  %436 = vmatmul.mubr.f32.gmra.mxu0 %v97
  %v437 = vpop.f32.mrf.mxu0
  %v438 = vadd.f32 0.0, %v437
  %v439 = vpop.f32.mrf.mxu0
  %440 = vmatprep.mubr.f32.mxu0 0.0
  %441 = vmatmul.mubr.f32.gmra.mxu0 %v100
  %v442 = vpop.f32.mrf.mxu0
  %v443 = vadd.f32 0.0, %v442
  %v444 = vpop.f32.mrf.mxu0
  %445 = vmatprep.mubr.f32.mxu0 0.0
  %446 = vmatmul.mubr.f32.gmra.mxu0 %v103
  %v447 = vpop.f32.mrf.mxu0
  %v448 = vadd.f32 0.0, %v447
  %v449 = vpop.f32.mrf.mxu0
  %450 = vmatprep.mubr.f32.mxu0 0.0
  %451 = vmatmul.mubr.f32.gmra.mxu0 %v106
  %v452 = vpop.f32.mrf.mxu0
  %v453 = vadd.f32 0.0, %v452
  %v454 = vpop.f32.mrf.mxu0
  %455 = vmatprep.mubr.f32.mxu0 0.0
  %456 = vmatmul.mubr.f32.gmra.mxu0 %v109
  %v457 = vpop.f32.mrf.mxu0
  %v458 = vadd.f32 0.0, %v457
  %v459 = vpop.f32.mrf.mxu0
  %460 = vmatprep.mubr.f32.mxu0 0.0
  %461 = vmatmul.mubr.f32.gmra.mxu0 %v112
  %v462 = vpop.f32.mrf.mxu0
  %v463 = vadd.f32 0.0, %v462
  %v464 = vpop.f32.mrf.mxu0
  %465 = vmatprep.mubr.f32.mxu0 0.0
  %466 = vmatmul.mubr.f32.gmra.mxu0 %v115
  %v467 = vpop.f32.mrf.mxu0
  %v468 = vadd.f32 0.0, %v467
  %v469 = vpop.f32.mrf.mxu0
  %470 = vmatprep.mubr.f32.mxu0 0.0
  %471 = vmatmul.mubr.f32.gmra.mxu0 %v118
  %v472 = vpop.f32.mrf.mxu0
  %v473 = vadd.f32 0.0, %v472
  %v474 = vpop.f32.mrf.mxu0
  %475 = vmatprep.mubr.f32.mxu0 0.0
  %476 = vmatmul.mubr.f32.gmra.mxu0 %v121
  %v477 = vpop.f32.mrf.mxu0
  %v478 = vadd.f32 0.0, %v477
  %v479 = vpop.f32.mrf.mxu0
  %480 = vmatprep.mubr.f32.mxu0 0.0
  %481 = vmatmul.mubr.f32.gmra.mxu0 %v124
  %v482 = vpop.f32.mrf.mxu0
  %v483 = vadd.f32 0.0, %v482
  %v484 = vpop.f32.mrf.mxu0
  %485 = vmatprep.mubr.f32.mxu0 0.0
  %486 = vmatmul.mubr.f32.gmra.mxu0 %v127
  %v487 = vpop.f32.mrf.mxu0
  %v488 = vadd.f32 0.0, %v487
  %v489 = vpop.f32.mrf.mxu0
  %490 = vmatprep.mubr.f32.mxu0 0.0
  %491 = vmatmul.mubr.f32.gmra.mxu0 %v130
  %v492 = vpop.f32.mrf.mxu0
  %v493 = vadd.f32 0.0, %v492
  %v494 = vpop.f32.mrf.mxu0
  %495 = vmatprep.mubr.f32.mxu0 0.0
  %496 = vmatmul.mubr.f32.gmra.mxu0 %v133
  %v497 = vpop.f32.mrf.mxu0
  %v498 = vadd.f32 0.0, %v497
  %v499 = vpop.f32.mrf.mxu0
  %500 = vmatprep.mubr.f32.mxu0 0.0
  %501 = vmatmul.mubr.f32.gmra.mxu0 %v136
  %v502 = vpop.f32.mrf.mxu0
  %v503 = vadd.f32 0.0, %v502
  %v504 = vpop.f32.mrf.mxu0
  %505 = vmatprep.mubr.f32.mxu0 0.0
  %506 = vmatmul.mubr.f32.gmra.mxu0 %v139
  %v507 = vpop.f32.mrf.mxu0
  %v508 = vadd.f32 0.0, %v507
  %v509 = vpop.f32.mrf.mxu0
  %510 = vmatprep.mubr.f32.mxu0 0.0
  %511 = vmatmul.mubr.f32.gmra.mxu0 %v142
  %v512 = vpop.f32.mrf.mxu0
  %v513 = vadd.f32 0.0, %v512
  %v514 = vpop.f32.mrf.mxu0
  %515 = vmatprep.mubr.f32.mxu0 0.0
  %516 = vmatmul.mubr.f32.gmra.mxu0 %v145
  %v517 = vpop.f32.mrf.mxu0
  %v518 = vadd.f32 0.0, %v517
  %v519 = vpop.f32.mrf.mxu0
  %520 = vdwg.mxu0
  %v521 = vmul.f32 %v214, %v403
  %v522 = vmul.f32 %v219, %v408
  %v523 = vmul.f32 %v224, %v413
  %v524 = vmul.f32 %v229, %v418
  %v525 = vmul.f32 %v234, %v423
  %v526 = vmul.f32 %v239, %v428
  %v527 = vmul.f32 %v244, %v433
  %v528 = vmul.f32 %v249, %v438
  %v529 = vmul.f32 %v254, %v443
  %v530 = vmul.f32 %v259, %v448
  %v531 = vmul.f32 %v264, %v453
  %v532 = vmul.f32 %v269, %v458
  %v533 = vmul.f32 %v274, %v463
  %v534 = vmul.f32 %v279, %v468
  %v535 = vmul.f32 %v284, %v473
  %v536 = vmul.f32 %v289, %v478
  %v537 = vmul.f32 %v294, %v483
  %v538 = vmul.f32 %v299, %v488
  %v539 = vmul.f32 %v304, %v493
  %v540 = vmul.f32 %v309, %v498
  %v541 = vmul.f32 %v314, %v503
  %v542 = vmul.f32 %v319, %v508
  %v543 = vmul.f32 %v324, %v513
  %v544 = vmul.f32 %v329, %v518
  %v545 = vsel %vm74, %v521, 0.0
  %v546 = vsel %vm74, %v529, 0.0
  %v547 = vadd.f32 %v545, %v546
  %v548 = vsel %vm74, %v537, 0.0
  %v549 = vadd.f32 %v547, %v548
  %v550 = vsel %vm74, %v522, 0.0
  %v551 = vsel %vm74, %v530, 0.0
  %v552 = vadd.f32 %v550, %v551
  %v553 = vsel %vm74, %v538, 0.0
  %v554 = vadd.f32 %v552, %v553
  %v555 = vsel %vm74, %v523, 0.0
  %v556 = vsel %vm74, %v531, 0.0
  %v557 = vadd.f32 %v555, %v556
  %v558 = vsel %vm74, %v539, 0.0
  %v559 = vadd.f32 %v557, %v558
  %v560 = vsel %vm74, %v524, 0.0
  %v561 = vsel %vm74, %v532, 0.0
  %v562 = vadd.f32 %v560, %v561
  %v563 = vsel %vm74, %v540, 0.0
  %v564 = vadd.f32 %v562, %v563
  %v565 = vsel %vm74, %v525, 0.0
  %v566 = vsel %vm74, %v533, 0.0
  %v567 = vadd.f32 %v565, %v566
  %v568 = vsel %vm74, %v541, 0.0
  %v569 = vadd.f32 %v567, %v568
  %v570 = vsel %vm74, %v526, 0.0
  %v571 = vsel %vm74, %v534, 0.0
  %v572 = vadd.f32 %v570, %v571
  %v573 = vsel %vm74, %v542, 0.0
  %v574 = vadd.f32 %v572, %v573
  %v575 = vsel %vm74, %v527, 0.0
  %v576 = vsel %vm74, %v535, 0.0
  %v577 = vadd.f32 %v575, %v576
  %v578 = vsel %vm74, %v543, 0.0
  %v579 = vadd.f32 %v577, %v578
  %v580 = vsel %vm74, %v528, 0.0
  %v581 = vsel %vm74, %v536, 0.0
  %v582 = vadd.f32 %v580, %v581
  %v583 = vsel %vm74, %v544, 0.0
  %v584 = vadd.f32 %v582, %v583
  %v585 = vmul.f32 %v549, 0.17677669
  %v586 = vmul.f32 %v554, 0.17677669
  %v587 = vmul.f32 %v559, 0.17677669
  %v588 = vmul.f32 %v564, 0.17677669
  %v589 = vmul.f32 %v569, 0.17677669
  %v590 = vmul.f32 %v574, 0.17677669
  %v591 = vmul.f32 %v579, 0.17677669
  %v592 = vmul.f32 %v584, 0.17677669
  %v593 = vmul.f32 %v403, %v403
  %v594 = vmul.f32 %v408, %v408
  %v595 = vmul.f32 %v413, %v413
  %v596 = vmul.f32 %v418, %v418
  %v597 = vmul.f32 %v423, %v423
  %v598 = vmul.f32 %v428, %v428
  %v599 = vmul.f32 %v433, %v433
  %v600 = vmul.f32 %v438, %v438
  %v601 = vmul.f32 %v443, %v443
  %v602 = vmul.f32 %v448, %v448
  %v603 = vmul.f32 %v453, %v453
  %v604 = vmul.f32 %v458, %v458
  %v605 = vmul.f32 %v463, %v463
  %v606 = vmul.f32 %v468, %v468
  %v607 = vmul.f32 %v473, %v473
  %v608 = vmul.f32 %v478, %v478
  %v609 = vmul.f32 %v483, %v483
  %v610 = vmul.f32 %v488, %v488
  %v611 = vmul.f32 %v493, %v493
  %v612 = vmul.f32 %v498, %v498
  %v613 = vmul.f32 %v503, %v503
  %v614 = vmul.f32 %v508, %v508
  %v615 = vmul.f32 %v513, %v513
  %v616 = vmul.f32 %v518, %v518
  %v617 = vsel %vm74, %v593, 0.0
  %v618 = vsel %vm74, %v601, 0.0
  %v619 = vadd.f32 %v617, %v618
  %v620 = vsel %vm74, %v609, 0.0
  %v621 = vadd.f32 %v619, %v620
  %v622 = vsel %vm74, %v594, 0.0
  %v623 = vsel %vm74, %v602, 0.0
  %v624 = vadd.f32 %v622, %v623
  %v625 = vsel %vm74, %v610, 0.0
  %v626 = vadd.f32 %v624, %v625
  %v627 = vsel %vm74, %v595, 0.0
  %v628 = vsel %vm74, %v603, 0.0
  %v629 = vadd.f32 %v627, %v628
  %v630 = vsel %vm74, %v611, 0.0
  %v631 = vadd.f32 %v629, %v630
  %v632 = vsel %vm74, %v596, 0.0
  %v633 = vsel %vm74, %v604, 0.0
  %v634 = vadd.f32 %v632, %v633
  %v635 = vsel %vm74, %v612, 0.0
  %v636 = vadd.f32 %v634, %v635
  %v637 = vsel %vm74, %v597, 0.0
  %v638 = vsel %vm74, %v605, 0.0
  %v639 = vadd.f32 %v637, %v638
  %v640 = vsel %vm74, %v613, 0.0
  %v641 = vadd.f32 %v639, %v640
  %v642 = vsel %vm74, %v598, 0.0
  %v643 = vsel %vm74, %v606, 0.0
  %v644 = vadd.f32 %v642, %v643
  %v645 = vsel %vm74, %v614, 0.0
  %v646 = vadd.f32 %v644, %v645
  %v647 = vsel %vm74, %v599, 0.0
  %v648 = vsel %vm74, %v607, 0.0
  %v649 = vadd.f32 %v647, %v648
  %v650 = vsel %vm74, %v615, 0.0
  %v651 = vadd.f32 %v649, %v650
  %v652 = vsel %vm74, %v600, 0.0
  %v653 = vsel %vm74, %v608, 0.0
  %v654 = vadd.f32 %v652, %v653
  %v655 = vsel %vm74, %v616, 0.0
  %v656 = vadd.f32 %v654, %v655
  %v657 = vadd.f32 %v621, 1e-08
  %v658 = vadd.f32 %v626, 1e-08
  %v659 = vadd.f32 %v631, 1e-08
  %v660 = vadd.f32 %v636, 1e-08
  %v661 = vadd.f32 %v641, 1e-08
  %v662 = vadd.f32 %v646, 1e-08
  %v663 = vadd.f32 %v651, 1e-08
  %v664 = vadd.f32 %v656, 1e-08
  %v665 = vrsqrt.pop %v657
  %v666 = vmul.f32 %v657, %v665
  %vm667 = vcmp.eq.f32.partialorder %v657, inf
  %v668 = vsel %vm667, %v657, %v666
  %vm669 = vcmp.eq.f32.partialorder %v657, 0.0
  %v670 = vand.u32 %v657, 2147483648
  %v671 = vsel %vm669, %v670, %v668
  %v672 = vrsqrt.pop %v658
  %v673 = vmul.f32 %v658, %v672
  %vm674 = vcmp.eq.f32.partialorder %v658, inf
  %v675 = vsel %vm674, %v658, %v673
  %vm676 = vcmp.eq.f32.partialorder %v658, 0.0
  %v677 = vand.u32 %v658, 2147483648
  %v678 = vsel %vm676, %v677, %v675
  %v679 = vrsqrt.pop %v659
  %v680 = vmul.f32 %v659, %v679
  %vm681 = vcmp.eq.f32.partialorder %v659, inf
  %v682 = vsel %vm681, %v659, %v680
  %vm683 = vcmp.eq.f32.partialorder %v659, 0.0
  %v684 = vand.u32 %v659, 2147483648
  %v685 = vsel %vm683, %v684, %v682
  %v686 = vrsqrt.pop %v660
  %v687 = vmul.f32 %v660, %v686
  %vm688 = vcmp.eq.f32.partialorder %v660, inf
  %v689 = vsel %vm688, %v660, %v687
  %vm690 = vcmp.eq.f32.partialorder %v660, 0.0
  %v691 = vand.u32 %v660, 2147483648
  %v692 = vsel %vm690, %v691, %v689
  %v693 = vrsqrt.pop %v661
  %v694 = vmul.f32 %v661, %v693
  %vm695 = vcmp.eq.f32.partialorder %v661, inf
  %v696 = vsel %vm695, %v661, %v694
  %vm697 = vcmp.eq.f32.partialorder %v661, 0.0
  %v698 = vand.u32 %v661, 2147483648
  %v699 = vsel %vm697, %v698, %v696
  %v700 = vrsqrt.pop %v662
  %v701 = vmul.f32 %v662, %v700
  %vm702 = vcmp.eq.f32.partialorder %v662, inf
  %v703 = vsel %vm702, %v662, %v701
  %vm704 = vcmp.eq.f32.partialorder %v662, 0.0
  %v705 = vand.u32 %v662, 2147483648
  %v706 = vsel %vm704, %v705, %v703
  %v707 = vrsqrt.pop %v663
  %v708 = vmul.f32 %v663, %v707
  %vm709 = vcmp.eq.f32.partialorder %v663, inf
  %v710 = vsel %vm709, %v663, %v708
  %vm711 = vcmp.eq.f32.partialorder %v663, 0.0
  %v712 = vand.u32 %v663, 2147483648
  %v713 = vsel %vm711, %v712, %v710
  %v714 = vrsqrt.pop %v664
  %v715 = vmul.f32 %v664, %v714
  %vm716 = vcmp.eq.f32.partialorder %v664, inf
  %v717 = vsel %vm716, %v664, %v715
  %vm718 = vcmp.eq.f32.partialorder %v664, 0.0
  %v719 = vand.u32 %v664, 2147483648
  %v720 = vsel %vm718, %v719, %v717
  %v721 = vld [vmem:[%s0] sm:$0xff]
  %v722 = vld [vmem:[%s0 + $0x8] sm:$0xff]
  %v723 = vld [vmem:[%s0 + $0x10] sm:$0xff]
  %v724 = vld [vmem:[%s0 + $0x18] sm:$0xff]
  %v725 = vld [vmem:[%s0 + $0x20] sm:$0xff]
  %v726 = vld [vmem:[%s0 + $0x28] sm:$0xff]
  %v727 = vld [vmem:[%s0 + $0x30] sm:$0xff]
  %v728 = vld [vmem:[%s0 + $0x38] sm:$0xff]
  %v729 = vld [vmem:[%s4] sm:$0xff]
  %v730 = vld [vmem:[%s4 + $0x8] sm:$0xff]
  %v731 = vld [vmem:[%s4 + $0x10] sm:$0xff]
  %v732 = vld [vmem:[%s4 + $0x18] sm:$0xff]
  %v733 = vld [vmem:[%s5] sm:$0xff]
  %v734 = vld [vmem:[%s5 + $0x8] sm:$0xff]
  %v735 = vld [vmem:[%s5 + $0x10] sm:$0xff]
  %v736 = vld [vmem:[%s5 + $0x18] sm:$0xff]
  %v738 = vsel %vm74, %v671, 0
  %v741 = vsel %vm74, %v678, 0
  %v744 = vsel %vm74, %v685, 0
  %v747 = vsel %vm74, %v692, 0
  %v750 = vsel %vm74, %v699, 0
  %v753 = vsel %vm74, %v706, 0
  %v756 = vsel %vm74, %v713, 0
  %v759 = vsel %vm74, %v720, 0
  %761 = vmatprep.subr.mxu0 0.0
  %762 = vmatpush1.msra.mxu0 0.0
  %763 = vmatprep.subr.mxu0 0.0
  %764 = vmatpush1.msra.mxu0 0.0
  %765 = vmatprep.subr.mxu0 0.0
  %766 = vmatpush1.msra.mxu0 0.0
  %767 = vmatprep.subr.mxu0 0.0
  %768 = vmatpush1.msra.mxu0 0.0
  %769 = vmatprep.subr.mxu0 0.0
  %770 = vmatpush1.msra.mxu0 0.0
  %771 = vmatprep.subr.mxu0 0.0
  %772 = vmatpush1.msra.mxu0 0.0
  %773 = vmatprep.subr.mxu0 0.0
  %774 = vmatpush1.msra.mxu0 0.0
  %775 = vmatprep.subr.mxu0 0.0
  %776 = vmatpush1.msra.mxu0 0.0
  %777 = vmatprep.subr.mxu0 0.0
  %778 = vmatpush1.msra.mxu0 0.0
  %779 = vmatprep.subr.mxu0 0.0
  %780 = vmatpush1.msra.mxu0 0.0
  %781 = vmatprep.subr.mxu0 0.0
  %782 = vmatpush1.msra.mxu0 0.0
  %783 = vmatprep.subr.mxu0 0.0
  %784 = vmatpush1.msra.mxu0 0.0
  %785 = vmatprep.subr.mxu0 0.0
  %786 = vmatpush1.msra.mxu0 %v736
  %787 = vmatprep.subr.mxu0 0.0
  %788 = vmatpush1.msra.mxu0 %v735
  %789 = vmatprep.subr.mxu0 0.0
  %790 = vmatpush1.msra.mxu0 %v734
  %791 = vmatprep.subr.mxu0 0.0
  %792 = vmatpush1.msra.mxu0 %v733
  %793 = vmatprep.subr.mxu0 0.0
  %794 = vmatpush2.msra.mxu0 0.0
  %795 = vmatprep.subr.mxu0 0.0
  %796 = vmatpush2.msra.mxu0 0.0
  %797 = vmatprep.subr.mxu0 0.0
  %798 = vmatpush2.msra.mxu0 0.0
  %799 = vmatprep.subr.mxu0 0.0
  %800 = vmatpush2.msra.mxu0 0.0
  %801 = vmatprep.subr.mxu0 0.0
  %802 = vmatpush2.msra.mxu0 0.0
  %803 = vmatprep.subr.mxu0 0.0
  %804 = vmatpush2.msra.mxu0 0.0
  %805 = vmatprep.subr.mxu0 0.0
  %806 = vmatpush2.msra.mxu0 0.0
  %807 = vmatprep.subr.mxu0 0.0
  %808 = vmatpush2.msra.mxu0 0.0
  %809 = vmatprep.subr.mxu0 0.0
  %810 = vmatpush2.msra.mxu0 0.0
  %811 = vmatprep.subr.mxu0 0.0
  %812 = vmatpush2.msra.mxu0 0.0
  %813 = vmatprep.subr.mxu0 0.0
  %814 = vmatpush2.msra.mxu0 0.0
  %815 = vmatprep.subr.mxu0 0.0
  %816 = vmatpush2.msra.mxu0 0.0
  %817 = vmatprep.subr.mxu0 0.0
  %818 = vmatpush2.msra.mxu0 0.0
  %819 = vmatprep.subr.mxu0 0.0
  %820 = vmatpush2.msra.mxu0 0.0
  %821 = vmatprep.subr.mxu0 0.0
  %822 = vmatpush2.msra.mxu0 0.0
  %823 = vmatprep.subr.mxu0 0.0
  %824 = vmatpush2.msra.mxu0 0.0
  %825 = vmatprep.mubr.f32.mxu0 0.0
  %826 = vmatmul.mubr.f32.gmra.mxu0 %v738
  %v827 = vpop.f32.mrf.mxu0
  %v828 = vadd.f32 0.0, %v827
  %v829 = vpop.f32.mrf.mxu0
  %830 = vmatprep.mubr.f32.mxu0 0.0
  %831 = vmatmul.mubr.f32.gmra.mxu0 %v741
  %v832 = vpop.f32.mrf.mxu0
  %v833 = vadd.f32 0.0, %v832
  %v834 = vpop.f32.mrf.mxu0
  %835 = vmatprep.mubr.f32.mxu0 0.0
  %836 = vmatmul.mubr.f32.gmra.mxu0 %v744
  %v837 = vpop.f32.mrf.mxu0
  %v838 = vadd.f32 0.0, %v837
  %v839 = vpop.f32.mrf.mxu0
  %840 = vmatprep.mubr.f32.mxu0 0.0
  %841 = vmatmul.mubr.f32.gmra.mxu0 %v747
  %v842 = vpop.f32.mrf.mxu0
  %v843 = vadd.f32 0.0, %v842
  %v844 = vpop.f32.mrf.mxu0
  %845 = vmatprep.mubr.f32.mxu0 0.0
  %846 = vmatmul.mubr.f32.gmra.mxu0 %v750
  %v847 = vpop.f32.mrf.mxu0
  %v848 = vadd.f32 0.0, %v847
  %v849 = vpop.f32.mrf.mxu0
  %850 = vmatprep.mubr.f32.mxu0 0.0
  %851 = vmatmul.mubr.f32.gmra.mxu0 %v753
  %v852 = vpop.f32.mrf.mxu0
  %v853 = vadd.f32 0.0, %v852
  %v854 = vpop.f32.mrf.mxu0
  %855 = vmatprep.mubr.f32.mxu0 0.0
  %856 = vmatmul.mubr.f32.gmra.mxu0 %v756
  %v857 = vpop.f32.mrf.mxu0
  %v858 = vadd.f32 0.0, %v857
  %v859 = vpop.f32.mrf.mxu0
  %860 = vmatprep.mubr.f32.mxu0 0.0
  %861 = vmatmul.mubr.f32.gmra.mxu0 %v759
  %v862 = vpop.f32.mrf.mxu0
  %v863 = vadd.f32 0.0, %v862
  %v864 = vpop.f32.mrf.mxu0
  %865 = vdwg.mxu0
  %v867 = vsel %vm74, %v721, 0
  %v870 = vsel %vm74, %v722, 0
  %v873 = vsel %vm74, %v723, 0
  %v876 = vsel %vm74, %v724, 0
  %v879 = vsel %vm74, %v725, 0
  %v882 = vsel %vm74, %v726, 0
  %v885 = vsel %vm74, %v727, 0
  %v888 = vsel %vm74, %v728, 0
  %890 = vmatprep.subr.mxu0 0.0
  %891 = vmatpush1.msra.mxu0 0.0
  %892 = vmatprep.subr.mxu0 0.0
  %893 = vmatpush1.msra.mxu0 0.0
  %894 = vmatprep.subr.mxu0 0.0
  %895 = vmatpush1.msra.mxu0 0.0
  %896 = vmatprep.subr.mxu0 0.0
  %897 = vmatpush1.msra.mxu0 0.0
  %898 = vmatprep.subr.mxu0 0.0
  %899 = vmatpush1.msra.mxu0 0.0
  %900 = vmatprep.subr.mxu0 0.0
  %901 = vmatpush1.msra.mxu0 0.0
  %902 = vmatprep.subr.mxu0 0.0
  %903 = vmatpush1.msra.mxu0 0.0
  %904 = vmatprep.subr.mxu0 0.0
  %905 = vmatpush1.msra.mxu0 0.0
  %906 = vmatprep.subr.mxu0 0.0
  %907 = vmatpush1.msra.mxu0 0.0
  %908 = vmatprep.subr.mxu0 0.0
  %909 = vmatpush1.msra.mxu0 0.0
  %910 = vmatprep.subr.mxu0 0.0
  %911 = vmatpush1.msra.mxu0 0.0
  %912 = vmatprep.subr.mxu0 0.0
  %913 = vmatpush1.msra.mxu0 0.0
  %914 = vmatprep.subr.mxu0 0.0
  %915 = vmatpush1.msra.mxu0 %v732
  %916 = vmatprep.subr.mxu0 0.0
  %917 = vmatpush1.msra.mxu0 %v731
  %918 = vmatprep.subr.mxu0 0.0
  %919 = vmatpush1.msra.mxu0 %v730
  %920 = vmatprep.subr.mxu0 0.0
  %921 = vmatpush1.msra.mxu0 %v729
  %922 = vmatprep.subr.mxu0 0.0
  %923 = vmatpush2.msra.mxu0 0.0
  %924 = vmatprep.subr.mxu0 0.0
  %925 = vmatpush2.msra.mxu0 0.0
  %926 = vmatprep.subr.mxu0 0.0
  %927 = vmatpush2.msra.mxu0 0.0
  %928 = vmatprep.subr.mxu0 0.0
  %929 = vmatpush2.msra.mxu0 0.0
  %930 = vmatprep.subr.mxu0 0.0
  %931 = vmatpush2.msra.mxu0 0.0
  %932 = vmatprep.subr.mxu0 0.0
  %933 = vmatpush2.msra.mxu0 0.0
  %934 = vmatprep.subr.mxu0 0.0
  %935 = vmatpush2.msra.mxu0 0.0
  %936 = vmatprep.subr.mxu0 0.0
  %937 = vmatpush2.msra.mxu0 0.0
  %938 = vmatprep.subr.mxu0 0.0
  %939 = vmatpush2.msra.mxu0 0.0
  %940 = vmatprep.subr.mxu0 0.0
  %941 = vmatpush2.msra.mxu0 0.0
  %942 = vmatprep.subr.mxu0 0.0
  %943 = vmatpush2.msra.mxu0 0.0
  %944 = vmatprep.subr.mxu0 0.0
  %945 = vmatpush2.msra.mxu0 0.0
  %946 = vmatprep.subr.mxu0 0.0
  %947 = vmatpush2.msra.mxu0 0.0
  %948 = vmatprep.subr.mxu0 0.0
  %949 = vmatpush2.msra.mxu0 0.0
  %950 = vmatprep.subr.mxu0 0.0
  %951 = vmatpush2.msra.mxu0 0.0
  %952 = vmatprep.subr.mxu0 0.0
  %953 = vmatpush2.msra.mxu0 0.0
  %954 = vmatprep.mubr.f32.mxu0 0.0
  %955 = vmatmul.mubr.f32.gmra.mxu0 %v867
  %v956 = vpop.f32.mrf.mxu0
  %v957 = vadd.f32 %v828, %v956
  %v958 = vpop.f32.mrf.mxu0
  %959 = vmatprep.mubr.f32.mxu0 0.0
  %960 = vmatmul.mubr.f32.gmra.mxu0 %v870
  %v961 = vpop.f32.mrf.mxu0
  %v962 = vadd.f32 %v833, %v961
  %v963 = vpop.f32.mrf.mxu0
  %964 = vmatprep.mubr.f32.mxu0 0.0
  %965 = vmatmul.mubr.f32.gmra.mxu0 %v873
  %v966 = vpop.f32.mrf.mxu0
  %v967 = vadd.f32 %v838, %v966
  %v968 = vpop.f32.mrf.mxu0
  %969 = vmatprep.mubr.f32.mxu0 0.0
  %970 = vmatmul.mubr.f32.gmra.mxu0 %v876
  %v971 = vpop.f32.mrf.mxu0
  %v972 = vadd.f32 %v843, %v971
  %v973 = vpop.f32.mrf.mxu0
  %974 = vmatprep.mubr.f32.mxu0 0.0
  %975 = vmatmul.mubr.f32.gmra.mxu0 %v879
  %v976 = vpop.f32.mrf.mxu0
  %v977 = vadd.f32 %v848, %v976
  %v978 = vpop.f32.mrf.mxu0
  %979 = vmatprep.mubr.f32.mxu0 0.0
  %980 = vmatmul.mubr.f32.gmra.mxu0 %v882
  %v981 = vpop.f32.mrf.mxu0
  %v982 = vadd.f32 %v853, %v981
  %v983 = vpop.f32.mrf.mxu0
  %984 = vmatprep.mubr.f32.mxu0 0.0
  %985 = vmatmul.mubr.f32.gmra.mxu0 %v885
  %v986 = vpop.f32.mrf.mxu0
  %v987 = vadd.f32 %v858, %v986
  %v988 = vpop.f32.mrf.mxu0
  %989 = vmatprep.mubr.f32.mxu0 0.0
  %990 = vmatmul.mubr.f32.gmra.mxu0 %v888
  %v991 = vpop.f32.mrf.mxu0
  %v992 = vadd.f32 %v863, %v991
  %v993 = vpop.f32.mrf.mxu0
  %994 = vdwg.mxu0
  %v995 = vld [vmem:[%s6] sm:$0x1]
  %v997 = vlaneseq
  %v998 = vshrl.u32 %v997, 7
  %v999 = vsub.s32 0, %v998
  %v1000 = vrot.slane %v995, %v999
  %v1002 = vadd.f32 %v957, %v1000
  %v1003 = vadd.f32 %v962, %v1000
  %v1004 = vadd.f32 %v967, %v1000
  %v1005 = vadd.f32 %v972, %v1000
  %v1006 = vadd.f32 %v977, %v1000
  %v1007 = vadd.f32 %v982, %v1000
  %v1008 = vadd.f32 %v987, %v1000
  %v1009 = vadd.f32 %v992, %v1000
  %v1010 = vxor.u32 %v1002, 2147483648
  %v1011 = vxor.u32 %v1003, 2147483648
  %v1012 = vxor.u32 %v1004, 2147483648
  %v1013 = vxor.u32 %v1005, 2147483648
  %v1014 = vxor.u32 %v1006, 2147483648
  %v1015 = vxor.u32 %v1007, 2147483648
  %v1016 = vxor.u32 %v1008, 2147483648
  %v1017 = vxor.u32 %v1009, 2147483648
  %v1018 = vmul.f32 %v1010, 1.442695
  %v1019 = vpow.pop %v1018
  %v1020 = vmul.f32 %v1011, 1.442695
  %v1021 = vpow.pop %v1020
  %v1022 = vmul.f32 %v1012, 1.442695
  %v1023 = vpow.pop %v1022
  %v1024 = vmul.f32 %v1013, 1.442695
  %v1025 = vpow.pop %v1024
  %v1026 = vmul.f32 %v1014, 1.442695
  %v1027 = vpow.pop %v1026
  %v1028 = vmul.f32 %v1015, 1.442695
  %v1029 = vpow.pop %v1028
  %v1030 = vmul.f32 %v1016, 1.442695
  %v1031 = vpow.pop %v1030
  %v1032 = vmul.f32 %v1017, 1.442695
  %v1033 = vpow.pop %v1032
  %v1034 = vadd.f32 %v1019, 1.0
  %v1035 = vadd.f32 %v1021, 1.0
  %v1036 = vadd.f32 %v1023, 1.0
  %v1037 = vadd.f32 %v1025, 1.0
  %v1038 = vadd.f32 %v1027, 1.0
  %v1039 = vadd.f32 %v1029, 1.0
  %v1040 = vadd.f32 %v1031, 1.0
  %v1041 = vadd.f32 %v1033, 1.0
  %v1042 = vrcp.pop %v1034
  %v1043 = vmul.f32 1.0, %v1042
  %v1044 = vrcp.pop %v1035
  %v1045 = vmul.f32 1.0, %v1044
  %v1046 = vrcp.pop %v1036
  %v1047 = vmul.f32 1.0, %v1046
  %v1048 = vrcp.pop %v1037
  %v1049 = vmul.f32 1.0, %v1048
  %v1050 = vrcp.pop %v1038
  %v1051 = vmul.f32 1.0, %v1050
  %v1052 = vrcp.pop %v1039
  %v1053 = vmul.f32 1.0, %v1052
  %v1054 = vrcp.pop %v1040
  %v1055 = vmul.f32 1.0, %v1054
  %v1056 = vrcp.pop %v1041
  %v1057 = vmul.f32 1.0, %v1056
  %v1058 = vmul.f32 %v1002, %v1043
  %v1059 = vmul.f32 %v1003, %v1045
  %v1060 = vmul.f32 %v1004, %v1047
  %v1061 = vmul.f32 %v1005, %v1049
  %v1062 = vmul.f32 %v1006, %v1051
  %v1063 = vmul.f32 %v1007, %v1053
  %v1064 = vmul.f32 %v1008, %v1055
  %v1065 = vmul.f32 %v1009, %v1057
  %v1066 = vmul.f32 %v1058, 1.6666666
  %v1067 = vmul.f32 %v1059, 1.6666666
  %v1068 = vmul.f32 %v1060, 1.6666666
  %v1069 = vmul.f32 %v1061, 1.6666666
  %v1070 = vmul.f32 %v1062, 1.6666666
  %v1071 = vmul.f32 %v1063, 1.6666666
  %v1072 = vmul.f32 %v1064, 1.6666666
  %v1073 = vmul.f32 %v1065, 1.6666666
  %v1074 = vld [vmem:[%s7] sm:$0xff]
  %v1075 = vld [vmem:[%s7 + $0x8] sm:$0xff]
  %v1076 = vld [vmem:[%s7 + $0x10] sm:$0xff]
  %v1077 = vld [vmem:[%s7 + $0x18] sm:$0xff]
  %v1078 = vld [vmem:[%s10] sm:$0x1]
  %v1080 = vlaneseq
  %v1081 = vshrl.u32 %v1080, 7
  %v1082 = vsub.s32 0, %v1081
  %v1083 = vrot.slane %v1078, %v1082
  %v1086 = vsel %vm74, %v1066, 0
  %v1089 = vsel %vm74, %v1067, 0
  %v1092 = vsel %vm74, %v1068, 0
  %v1095 = vsel %vm74, %v1069, 0
  %v1098 = vsel %vm74, %v1070, 0
  %v1101 = vsel %vm74, %v1071, 0
  %v1104 = vsel %vm74, %v1072, 0
  %v1107 = vsel %vm74, %v1073, 0
  %1109 = vmatprep.subr.mxu0 0.0
  %1110 = vmatpush1.msra.mxu0 0.0
  %1111 = vmatprep.subr.mxu0 0.0
  %1112 = vmatpush1.msra.mxu0 0.0
  %1113 = vmatprep.subr.mxu0 0.0
  %1114 = vmatpush1.msra.mxu0 0.0
  %1115 = vmatprep.subr.mxu0 0.0
  %1116 = vmatpush1.msra.mxu0 0.0
  %1117 = vmatprep.subr.mxu0 0.0
  %1118 = vmatpush1.msra.mxu0 0.0
  %1119 = vmatprep.subr.mxu0 0.0
  %1120 = vmatpush1.msra.mxu0 0.0
  %1121 = vmatprep.subr.mxu0 0.0
  %1122 = vmatpush1.msra.mxu0 0.0
  %1123 = vmatprep.subr.mxu0 0.0
  %1124 = vmatpush1.msra.mxu0 0.0
  %1125 = vmatprep.subr.mxu0 0.0
  %1126 = vmatpush1.msra.mxu0 0.0
  %1127 = vmatprep.subr.mxu0 0.0
  %1128 = vmatpush1.msra.mxu0 0.0
  %1129 = vmatprep.subr.mxu0 0.0
  %1130 = vmatpush1.msra.mxu0 0.0
  %1131 = vmatprep.subr.mxu0 0.0
  %1132 = vmatpush1.msra.mxu0 0.0
  %1133 = vmatprep.subr.mxu0 0.0
  %1134 = vmatpush1.msra.mxu0 %v1077
  %1135 = vmatprep.subr.mxu0 0.0
  %1136 = vmatpush1.msra.mxu0 %v1076
  %1137 = vmatprep.subr.mxu0 0.0
  %1138 = vmatpush1.msra.mxu0 %v1075
  %1139 = vmatprep.subr.mxu0 0.0
  %1140 = vmatpush1.msra.mxu0 %v1074
  %1141 = vmatprep.subr.mxu0 0.0
  %1142 = vmatpush2.msra.mxu0 0.0
  %1143 = vmatprep.subr.mxu0 0.0
  %1144 = vmatpush2.msra.mxu0 0.0
  %1145 = vmatprep.subr.mxu0 0.0
  %1146 = vmatpush2.msra.mxu0 0.0
  %1147 = vmatprep.subr.mxu0 0.0
  %1148 = vmatpush2.msra.mxu0 0.0
  %1149 = vmatprep.subr.mxu0 0.0
  %1150 = vmatpush2.msra.mxu0 0.0
  %1151 = vmatprep.subr.mxu0 0.0
  %1152 = vmatpush2.msra.mxu0 0.0
  %1153 = vmatprep.subr.mxu0 0.0
  %1154 = vmatpush2.msra.mxu0 0.0
  %1155 = vmatprep.subr.mxu0 0.0
  %1156 = vmatpush2.msra.mxu0 0.0
  %1157 = vmatprep.subr.mxu0 0.0
  %1158 = vmatpush2.msra.mxu0 0.0
  %1159 = vmatprep.subr.mxu0 0.0
  %1160 = vmatpush2.msra.mxu0 0.0
  %1161 = vmatprep.subr.mxu0 0.0
  %1162 = vmatpush2.msra.mxu0 0.0
  %1163 = vmatprep.subr.mxu0 0.0
  %1164 = vmatpush2.msra.mxu0 0.0
  %1165 = vmatprep.subr.mxu0 0.0
  %1166 = vmatpush2.msra.mxu0 0.0
  %1167 = vmatprep.subr.mxu0 0.0
  %1168 = vmatpush2.msra.mxu0 0.0
  %1169 = vmatprep.subr.mxu0 0.0
  %1170 = vmatpush2.msra.mxu0 0.0
  %1171 = vmatprep.subr.mxu0 0.0
  %1172 = vmatpush2.msra.mxu0 0.0
  %1173 = vmatprep.mubr.f32.mxu0 0.0
  %1174 = vmatmul.mubr.f32.gmra.mxu0 %v1086
  %v1175 = vpop.f32.mrf.mxu0
  %v1176 = vadd.f32 %v1083, %v1175
  %v1177 = vpop.f32.mrf.mxu0
  %1178 = vmatprep.mubr.f32.mxu0 0.0
  %1179 = vmatmul.mubr.f32.gmra.mxu0 %v1089
  %v1180 = vpop.f32.mrf.mxu0
  %v1181 = vadd.f32 %v1083, %v1180
  %v1182 = vpop.f32.mrf.mxu0
  %1183 = vmatprep.mubr.f32.mxu0 0.0
  %1184 = vmatmul.mubr.f32.gmra.mxu0 %v1092
  %v1185 = vpop.f32.mrf.mxu0
  %v1186 = vadd.f32 %v1083, %v1185
  %v1187 = vpop.f32.mrf.mxu0
  %1188 = vmatprep.mubr.f32.mxu0 0.0
  %1189 = vmatmul.mubr.f32.gmra.mxu0 %v1095
  %v1190 = vpop.f32.mrf.mxu0
  %v1191 = vadd.f32 %v1083, %v1190
  %v1192 = vpop.f32.mrf.mxu0
  %1193 = vmatprep.mubr.f32.mxu0 0.0
  %1194 = vmatmul.mubr.f32.gmra.mxu0 %v1098
  %v1195 = vpop.f32.mrf.mxu0
  %v1196 = vadd.f32 %v1083, %v1195
  %v1197 = vpop.f32.mrf.mxu0
  %1198 = vmatprep.mubr.f32.mxu0 0.0
  %1199 = vmatmul.mubr.f32.gmra.mxu0 %v1101
  %v1200 = vpop.f32.mrf.mxu0
  %v1201 = vadd.f32 %v1083, %v1200
  %v1202 = vpop.f32.mrf.mxu0
  %1203 = vmatprep.mubr.f32.mxu0 0.0
  %1204 = vmatmul.mubr.f32.gmra.mxu0 %v1104
  %v1205 = vpop.f32.mrf.mxu0
  %v1206 = vadd.f32 %v1083, %v1205
  %v1207 = vpop.f32.mrf.mxu0
  %1208 = vmatprep.mubr.f32.mxu0 0.0
  %1209 = vmatmul.mubr.f32.gmra.mxu0 %v1107
  %v1210 = vpop.f32.mrf.mxu0
  %v1211 = vadd.f32 %v1083, %v1210
  %v1212 = vpop.f32.mrf.mxu0
  %1213 = vdwg.mxu0
  %v1214 = vld [vmem:[%s8] sm:$0xff]
  %v1215 = vld [vmem:[%s8 + $0x8] sm:$0xff]
  %v1216 = vld [vmem:[%s8 + $0x10] sm:$0xff]
  %v1217 = vld [vmem:[%s8 + $0x18] sm:$0xff]
  %v1218 = vld [vmem:[%s11] sm:$0x1]
  %v1220 = vlaneseq
  %v1221 = vshrl.u32 %v1220, 7
  %v1222 = vsub.s32 0, %v1221
  %v1223 = vrot.slane %v1218, %v1222
  %1225 = vmatprep.subr.mxu0 0.0
  %1226 = vmatpush1.msra.mxu0 0.0
  %1227 = vmatprep.subr.mxu0 0.0
  %1228 = vmatpush1.msra.mxu0 0.0
  %1229 = vmatprep.subr.mxu0 0.0
  %1230 = vmatpush1.msra.mxu0 0.0
  %1231 = vmatprep.subr.mxu0 0.0
  %1232 = vmatpush1.msra.mxu0 0.0
  %1233 = vmatprep.subr.mxu0 0.0
  %1234 = vmatpush1.msra.mxu0 0.0
  %1235 = vmatprep.subr.mxu0 0.0
  %1236 = vmatpush1.msra.mxu0 0.0
  %1237 = vmatprep.subr.mxu0 0.0
  %1238 = vmatpush1.msra.mxu0 0.0
  %1239 = vmatprep.subr.mxu0 0.0
  %1240 = vmatpush1.msra.mxu0 0.0
  %1241 = vmatprep.subr.mxu0 0.0
  %1242 = vmatpush1.msra.mxu0 0.0
  %1243 = vmatprep.subr.mxu0 0.0
  %1244 = vmatpush1.msra.mxu0 0.0
  %1245 = vmatprep.subr.mxu0 0.0
  %1246 = vmatpush1.msra.mxu0 0.0
  %1247 = vmatprep.subr.mxu0 0.0
  %1248 = vmatpush1.msra.mxu0 0.0
  %1249 = vmatprep.subr.mxu0 0.0
  %1250 = vmatpush1.msra.mxu0 %v1217
  %1251 = vmatprep.subr.mxu0 0.0
  %1252 = vmatpush1.msra.mxu0 %v1216
  %1253 = vmatprep.subr.mxu0 0.0
  %1254 = vmatpush1.msra.mxu0 %v1215
  %1255 = vmatprep.subr.mxu0 0.0
  %1256 = vmatpush1.msra.mxu0 %v1214
  %1257 = vmatprep.subr.mxu0 0.0
  %1258 = vmatpush2.msra.mxu0 0.0
  %1259 = vmatprep.subr.mxu0 0.0
  %1260 = vmatpush2.msra.mxu0 0.0
  %1261 = vmatprep.subr.mxu0 0.0
  %1262 = vmatpush2.msra.mxu0 0.0
  %1263 = vmatprep.subr.mxu0 0.0
  %1264 = vmatpush2.msra.mxu0 0.0
  %1265 = vmatprep.subr.mxu0 0.0
  %1266 = vmatpush2.msra.mxu0 0.0
  %1267 = vmatprep.subr.mxu0 0.0
  %1268 = vmatpush2.msra.mxu0 0.0
  %1269 = vmatprep.subr.mxu0 0.0
  %1270 = vmatpush2.msra.mxu0 0.0
  %1271 = vmatprep.subr.mxu0 0.0
  %1272 = vmatpush2.msra.mxu0 0.0
  %1273 = vmatprep.subr.mxu0 0.0
  %1274 = vmatpush2.msra.mxu0 0.0
  %1275 = vmatprep.subr.mxu0 0.0
  %1276 = vmatpush2.msra.mxu0 0.0
  %1277 = vmatprep.subr.mxu0 0.0
  %1278 = vmatpush2.msra.mxu0 0.0
  %1279 = vmatprep.subr.mxu0 0.0
  %1280 = vmatpush2.msra.mxu0 0.0
  %1281 = vmatprep.subr.mxu0 0.0
  %1282 = vmatpush2.msra.mxu0 0.0
  %1283 = vmatprep.subr.mxu0 0.0
  %1284 = vmatpush2.msra.mxu0 0.0
  %1285 = vmatprep.subr.mxu0 0.0
  %1286 = vmatpush2.msra.mxu0 0.0
  %1287 = vmatprep.subr.mxu0 0.0
  %1288 = vmatpush2.msra.mxu0 0.0
  %1289 = vmatprep.mubr.f32.mxu0 0.0
  %1290 = vmatmul.mubr.f32.gmra.mxu0 %v1086
  %v1291 = vpop.f32.mrf.mxu0
  %v1292 = vadd.f32 %v1223, %v1291
  %v1293 = vpop.f32.mrf.mxu0
  %1294 = vmatprep.mubr.f32.mxu0 0.0
  %1295 = vmatmul.mubr.f32.gmra.mxu0 %v1089
  %v1296 = vpop.f32.mrf.mxu0
  %v1297 = vadd.f32 %v1223, %v1296
  %v1298 = vpop.f32.mrf.mxu0
  %1299 = vmatprep.mubr.f32.mxu0 0.0
  %1300 = vmatmul.mubr.f32.gmra.mxu0 %v1092
  %v1301 = vpop.f32.mrf.mxu0
  %v1302 = vadd.f32 %v1223, %v1301
  %v1303 = vpop.f32.mrf.mxu0
  %1304 = vmatprep.mubr.f32.mxu0 0.0
  %1305 = vmatmul.mubr.f32.gmra.mxu0 %v1095
  %v1306 = vpop.f32.mrf.mxu0
  %v1307 = vadd.f32 %v1223, %v1306
  %v1308 = vpop.f32.mrf.mxu0
  %1309 = vmatprep.mubr.f32.mxu0 0.0
  %1310 = vmatmul.mubr.f32.gmra.mxu0 %v1098
  %v1311 = vpop.f32.mrf.mxu0
  %v1312 = vadd.f32 %v1223, %v1311
  %v1313 = vpop.f32.mrf.mxu0
  %1314 = vmatprep.mubr.f32.mxu0 0.0
  %1315 = vmatmul.mubr.f32.gmra.mxu0 %v1101
  %v1316 = vpop.f32.mrf.mxu0
  %v1317 = vadd.f32 %v1223, %v1316
  %v1318 = vpop.f32.mrf.mxu0
  %1319 = vmatprep.mubr.f32.mxu0 0.0
  %1320 = vmatmul.mubr.f32.gmra.mxu0 %v1104
  %v1321 = vpop.f32.mrf.mxu0
  %v1322 = vadd.f32 %v1223, %v1321
  %v1323 = vpop.f32.mrf.mxu0
  %1324 = vmatprep.mubr.f32.mxu0 0.0
  %1325 = vmatmul.mubr.f32.gmra.mxu0 %v1107
  %v1326 = vpop.f32.mrf.mxu0
  %v1327 = vadd.f32 %v1223, %v1326
  %v1328 = vpop.f32.mrf.mxu0
  %1329 = vdwg.mxu0
  %v1330 = vld [vmem:[%s9] sm:$0xff]
  %v1331 = vld [vmem:[%s9 + $0x8] sm:$0xff]
  %v1332 = vld [vmem:[%s9 + $0x10] sm:$0xff]
  %v1333 = vld [vmem:[%s9 + $0x18] sm:$0xff]
  %v1334 = vld [vmem:[%s12] sm:$0x1]
  %v1336 = vlaneseq
  %v1337 = vshrl.u32 %v1336, 7
  %v1338 = vsub.s32 0, %v1337
  %v1339 = vrot.slane %v1334, %v1338
  %1341 = vmatprep.subr.mxu0 0.0
  %1342 = vmatpush1.msra.mxu0 0.0
  %1343 = vmatprep.subr.mxu0 0.0
  %1344 = vmatpush1.msra.mxu0 0.0
  %1345 = vmatprep.subr.mxu0 0.0
  %1346 = vmatpush1.msra.mxu0 0.0
  %1347 = vmatprep.subr.mxu0 0.0
  %1348 = vmatpush1.msra.mxu0 0.0
  %1349 = vmatprep.subr.mxu0 0.0
  %1350 = vmatpush1.msra.mxu0 0.0
  %1351 = vmatprep.subr.mxu0 0.0
  %1352 = vmatpush1.msra.mxu0 0.0
  %1353 = vmatprep.subr.mxu0 0.0
  %1354 = vmatpush1.msra.mxu0 0.0
  %1355 = vmatprep.subr.mxu0 0.0
  %1356 = vmatpush1.msra.mxu0 0.0
  %1357 = vmatprep.subr.mxu0 0.0
  %1358 = vmatpush1.msra.mxu0 0.0
  %1359 = vmatprep.subr.mxu0 0.0
  %1360 = vmatpush1.msra.mxu0 0.0
  %1361 = vmatprep.subr.mxu0 0.0
  %1362 = vmatpush1.msra.mxu0 0.0
  %1363 = vmatprep.subr.mxu0 0.0
  %1364 = vmatpush1.msra.mxu0 0.0
  %1365 = vmatprep.subr.mxu0 0.0
  %1366 = vmatpush1.msra.mxu0 %v1333
  %1367 = vmatprep.subr.mxu0 0.0
  %1368 = vmatpush1.msra.mxu0 %v1332
  %1369 = vmatprep.subr.mxu0 0.0
  %1370 = vmatpush1.msra.mxu0 %v1331
  %1371 = vmatprep.subr.mxu0 0.0
  %1372 = vmatpush1.msra.mxu0 %v1330
  %1373 = vmatprep.subr.mxu0 0.0
  %1374 = vmatpush2.msra.mxu0 0.0
  %1375 = vmatprep.subr.mxu0 0.0
  %1376 = vmatpush2.msra.mxu0 0.0
  %1377 = vmatprep.subr.mxu0 0.0
  %1378 = vmatpush2.msra.mxu0 0.0
  %1379 = vmatprep.subr.mxu0 0.0
  %1380 = vmatpush2.msra.mxu0 0.0
  %1381 = vmatprep.subr.mxu0 0.0
  %1382 = vmatpush2.msra.mxu0 0.0
  %1383 = vmatprep.subr.mxu0 0.0
  %1384 = vmatpush2.msra.mxu0 0.0
  %1385 = vmatprep.subr.mxu0 0.0
  %1386 = vmatpush2.msra.mxu0 0.0
  %1387 = vmatprep.subr.mxu0 0.0
  %1388 = vmatpush2.msra.mxu0 0.0
  %1389 = vmatprep.subr.mxu0 0.0
  %1390 = vmatpush2.msra.mxu0 0.0
  %1391 = vmatprep.subr.mxu0 0.0
  %1392 = vmatpush2.msra.mxu0 0.0
  %1393 = vmatprep.subr.mxu0 0.0
  %1394 = vmatpush2.msra.mxu0 0.0
  %1395 = vmatprep.subr.mxu0 0.0
  %1396 = vmatpush2.msra.mxu0 0.0
  %1397 = vmatprep.subr.mxu0 0.0
  %1398 = vmatpush2.msra.mxu0 0.0
  %1399 = vmatprep.subr.mxu0 0.0
  %1400 = vmatpush2.msra.mxu0 0.0
  %1401 = vmatprep.subr.mxu0 0.0
  %1402 = vmatpush2.msra.mxu0 0.0
  %1403 = vmatprep.subr.mxu0 0.0
  %1404 = vmatpush2.msra.mxu0 0.0
  %1405 = vmatprep.mubr.f32.mxu0 0.0
  %1406 = vmatmul.mubr.f32.gmra.mxu0 %v1086
  %v1407 = vpop.f32.mrf.mxu0
  %v1408 = vadd.f32 %v1339, %v1407
  %v1409 = vpop.f32.mrf.mxu0
  %1410 = vmatprep.mubr.f32.mxu0 0.0
  %1411 = vmatmul.mubr.f32.gmra.mxu0 %v1089
  %v1412 = vpop.f32.mrf.mxu0
  %v1413 = vadd.f32 %v1339, %v1412
  %v1414 = vpop.f32.mrf.mxu0
  %1415 = vmatprep.mubr.f32.mxu0 0.0
  %1416 = vmatmul.mubr.f32.gmra.mxu0 %v1092
  %v1417 = vpop.f32.mrf.mxu0
  %v1418 = vadd.f32 %v1339, %v1417
  %v1419 = vpop.f32.mrf.mxu0
  %1420 = vmatprep.mubr.f32.mxu0 0.0
  %1421 = vmatmul.mubr.f32.gmra.mxu0 %v1095
  %v1422 = vpop.f32.mrf.mxu0
  %v1423 = vadd.f32 %v1339, %v1422
  %v1424 = vpop.f32.mrf.mxu0
  %1425 = vmatprep.mubr.f32.mxu0 0.0
  %1426 = vmatmul.mubr.f32.gmra.mxu0 %v1098
  %v1427 = vpop.f32.mrf.mxu0
  %v1428 = vadd.f32 %v1339, %v1427
  %v1429 = vpop.f32.mrf.mxu0
  %1430 = vmatprep.mubr.f32.mxu0 0.0
  %1431 = vmatmul.mubr.f32.gmra.mxu0 %v1101
  %v1432 = vpop.f32.mrf.mxu0
  %v1433 = vadd.f32 %v1339, %v1432
  %v1434 = vpop.f32.mrf.mxu0
  %1435 = vmatprep.mubr.f32.mxu0 0.0
  %1436 = vmatmul.mubr.f32.gmra.mxu0 %v1104
  %v1437 = vpop.f32.mrf.mxu0
  %v1438 = vadd.f32 %v1339, %v1437
  %v1439 = vpop.f32.mrf.mxu0
  %1440 = vmatprep.mubr.f32.mxu0 0.0
  %1441 = vmatmul.mubr.f32.gmra.mxu0 %v1107
  %v1442 = vpop.f32.mrf.mxu0
  %v1443 = vadd.f32 %v1339, %v1442
  %v1444 = vpop.f32.mrf.mxu0
  %1445 = vdwg.mxu0
  %v1446 = vmul.f32 %v1292, %v585
  %v1447 = vmul.f32 %v1297, %v586
  %v1448 = vmul.f32 %v1302, %v587
  %v1449 = vmul.f32 %v1307, %v588
  %v1450 = vmul.f32 %v1312, %v589
  %v1451 = vmul.f32 %v1317, %v590
  %v1452 = vmul.f32 %v1322, %v591
  %v1453 = vmul.f32 %v1327, %v592
  %v1454 = vadd.f32 %v1176, %v1446
  %v1455 = vadd.f32 %v1181, %v1447
  %v1456 = vadd.f32 %v1186, %v1448
  %v1457 = vadd.f32 %v1191, %v1449
  %v1458 = vadd.f32 %v1196, %v1450
  %v1459 = vadd.f32 %v1201, %v1451
  %v1460 = vadd.f32 %v1206, %v1452
  %v1461 = vadd.f32 %v1211, %v1453
  %v1462 = vmul.f32 %v1454, 0.70710677
  %v1463 = vmul.f32 %v1455, 0.70710677
  %v1464 = vmul.f32 %v1456, 0.70710677
  %v1465 = vmul.f32 %v1457, 0.70710677
  %v1466 = vmul.f32 %v1458, 0.70710677
  %v1467 = vmul.f32 %v1459, 0.70710677
  %v1468 = vmul.f32 %v1460, 0.70710677
  %v1469 = vmul.f32 %v1461, 0.70710677
  %v1470 = vmul.f32 %v1408, %v214
  %v1471 = vmul.f32 %v1413, %v219
  %v1472 = vmul.f32 %v1418, %v224
  %v1473 = vmul.f32 %v1423, %v229
  %v1474 = vmul.f32 %v1428, %v234
  %v1475 = vmul.f32 %v1433, %v239
  %v1476 = vmul.f32 %v1438, %v244
  %v1477 = vmul.f32 %v1443, %v249
  %v1478 = vmul.f32 %v1408, %v254
  %v1479 = vmul.f32 %v1413, %v259
  %v1480 = vmul.f32 %v1418, %v264
  %v1481 = vmul.f32 %v1423, %v269
  %v1482 = vmul.f32 %v1428, %v274
  %v1483 = vmul.f32 %v1433, %v279
  %v1484 = vmul.f32 %v1438, %v284
  %v1485 = vmul.f32 %v1443, %v289
  %v1486 = vmul.f32 %v1408, %v294
  %v1487 = vmul.f32 %v1413, %v299
  %v1488 = vmul.f32 %v1418, %v304
  %v1489 = vmul.f32 %v1423, %v309
  %v1490 = vmul.f32 %v1428, %v314
  %v1491 = vmul.f32 %v1433, %v319
  %v1492 = vmul.f32 %v1438, %v324
  %v1493 = vmul.f32 %v1443, %v329
  %1494 = vst.msk [vmem:[%s13] sm:$0xff] %vm74, %v1462
  %1495 = vst.msk [vmem:[%s13 + $0x8] sm:$0xff] %vm74, %v1463
  %1496 = vst.msk [vmem:[%s13 + $0x10] sm:$0xff] %vm74, %v1464
  %1497 = vst.msk [vmem:[%s13 + $0x18] sm:$0xff] %vm74, %v1465
  %1498 = vst.msk [vmem:[%s13 + $0x20] sm:$0xff] %vm74, %v1466
  %1499 = vst.msk [vmem:[%s13 + $0x28] sm:$0xff] %vm74, %v1467
  %1500 = vst.msk [vmem:[%s13 + $0x30] sm:$0xff] %vm74, %v1468
  %1501 = vst.msk [vmem:[%s13 + $0x38] sm:$0xff] %vm74, %v1469
  %1502 = vst.msk [vmem:[%s14] sm:$0xff] %vm74, %v1470
  %1503 = vst.msk [vmem:[%s14 + $0x8] sm:$0xff] %vm74, %v1471
  %1504 = vst.msk [vmem:[%s14 + $0x10] sm:$0xff] %vm74, %v1472
  %1505 = vst.msk [vmem:[%s14 + $0x18] sm:$0xff] %vm74, %v1473
  %1506 = vst.msk [vmem:[%s14 + $0x20] sm:$0xff] %vm74, %v1474
  %1507 = vst.msk [vmem:[%s14 + $0x28] sm:$0xff] %vm74, %v1475
  %1508 = vst.msk [vmem:[%s14 + $0x30] sm:$0xff] %vm74, %v1476
  %1509 = vst.msk [vmem:[%s14 + $0x38] sm:$0xff] %vm74, %v1477
  %1510 = vst.msk [vmem:[%s14 + $0x40] sm:$0xff] %vm74, %v1478
  %1511 = vst.msk [vmem:[%s14 + $0x48] sm:$0xff] %vm74, %v1479
  %1512 = vst.msk [vmem:[%s14 + $0x50] sm:$0xff] %vm74, %v1480
  %1513 = vst.msk [vmem:[%s14 + $0x58] sm:$0xff] %vm74, %v1481
  %1514 = vst.msk [vmem:[%s14 + $0x60] sm:$0xff] %vm74, %v1482
  %1515 = vst.msk [vmem:[%s14 + $0x68] sm:$0xff] %vm74, %v1483
  %1516 = vst.msk [vmem:[%s14 + $0x70] sm:$0xff] %vm74, %v1484
  %1517 = vst.msk [vmem:[%s14 + $0x78] sm:$0xff] %vm74, %v1485
  %1518 = vst.msk [vmem:[%s14 + $0x80] sm:$0xff] %vm74, %v1486
  %1519 = vst.msk [vmem:[%s14 + $0x88] sm:$0xff] %vm74, %v1487
  %1520 = vst.msk [vmem:[%s14 + $0x90] sm:$0xff] %vm74, %v1488
  %1521 = vst.msk [vmem:[%s14 + $0x98] sm:$0xff] %vm74, %v1489
  %1522 = vst.msk [vmem:[%s14 + $0xa0] sm:$0xff] %vm74, %v1490
  %1523 = vst.msk [vmem:[%s14 + $0xa8] sm:$0xff] %vm74, %v1491
  %1524 = vst.msk [vmem:[%s14 + $0xb0] sm:$0xff] %vm74, %v1492
  %1525 = vst.msk [vmem:[%s14 + $0xb8] sm:$0xff] %vm74, %v1493
  // Predicated region
  $region54: #{tpu_custom_call.1} parent=0 // pred_check
    _
  $region55: #{tpu_custom_call.1} parent=0 // pred_check_branch
    %1527 = sbr.rel (0) target = $region57
  $region56: #{tpu_custom_call.1} parent=0 // pred_region
    _
  $region57: #{tpu_custom_call.1} parent=0 // pred_fallthru
    _
  // Predicated region
  $region58: #{tpu_custom_call.1} parent=0 // pred_check
    _
  $region59: #{tpu_custom_call.1} parent=0 // pred_check_branch
    %1529 = sbr.rel (0) target = $region61
  $region60: #{tpu_custom_call.1} parent=0 // pred_region
    _
  $region61: #{tpu_custom_call.1} parent=0 // pred_fallthru
    _
  // Predicated region
  $region62: #{tpu_custom_call.1} parent=0 // pred_check
    _
  $region63: #{tpu_custom_call.1} parent=0 // pred_check_branch
    %1531 = sbr.rel (0) target = $region65
  $region64: #{tpu_custom_call.1} parent=0 // pred_region
    _
  $region65: #{tpu_custom_call.1} parent=0 // pred_fallthru
    _
  // Predicated region
  $region66: #{tpu_custom_call.1} parent=0 // pred_check
    _
  $region67: #{tpu_custom_call.1} parent=0 // pred_check_branch
    %1533 = sbr.rel (0) target = $region69
  $region68: #{tpu_custom_call.1} parent=0 // pred_region
    _
  $region69: #{tpu_custom_call.1} parent=0 // pred_fallthru
    _

// kernel: tpu_custom_call.1
$region0: #{tpu_custom_call.1}
  #allocation0 [shape = 'u32[]', space=smem, size = 0x4, offset = 0x4, fixed_abs, tag = 'smem constant byte address 0x4 - core index']
  #allocation1 [shape = 'u32[144,128]{1,0:T(1,128)}', space=vmem, size = 0x12000, scoped, tag = 'internal scratch']
  %s0 = inlined_call_operand.vmem [shape: f32[64,32], index: 0, kind: input, shape index: {}]
  %s1 = inlined_call_operand.vmem [shape: f32[3,64,32], index: 1, kind: input, shape index: {}]
  %s2 = inlined_call_operand.vmem [shape: f32[32,32], index: 2, kind: input, shape index: {}]
  %s3 = inlined_call_operand.vmem [shape: f32[32,32], index: 3, kind: input, shape index: {}]
  %s4 = inlined_call_operand.vmem [shape: f32[32,32], index: 4, kind: input, shape index: {}]
  %s5 = inlined_call_operand.vmem [shape: f32[32,32], index: 5, kind: input, shape index: {}]
  %s6 = inlined_call_operand.vmem [shape: f32[1,32], index: 6, kind: input, shape index: {}]
  %s7 = inlined_call_operand.vmem [shape: f32[32,32], index: 7, kind: input, shape index: {}]
  %s8 = inlined_call_operand.vmem [shape: f32[32,32], index: 8, kind: input, shape index: {}]
  %s9 = inlined_call_operand.vmem [shape: f32[32,32], index: 9, kind: input, shape index: {}]
  %s10 = inlined_call_operand.vmem [shape: f32[1,32], index: 10, kind: input, shape index: {}]
  %s11 = inlined_call_operand.vmem [shape: f32[1,32], index: 11, kind: input, shape index: {}]
  %s12 = inlined_call_operand.vmem [shape: f32[1,32], index: 12, kind: input, shape index: {}]
  %s13 = inlined_call_operand.vmem [shape: f32[64,32], index: 13, kind: output, shape index: {0}]
  %s14 = inlined_call_operand.vmem [shape: f32[3,64,32], index: 14, kind: output, shape index: {1}]
  %15 = xla_tuple %s13, %s14
  %s16 = sld [smem:[#allocation0]]
  $region70: #{tpu_custom_call.1} parent=0
    _
  %s18 = ssub.s32 1, %s16
  %s19 = scalar_select 0, %s18, %s16
  // Predicated region
  $region2: #{tpu_custom_call.1} parent=0 // pred_check
    _
  $region3: #{tpu_custom_call.1} parent=0 // pred_check_branch
    %21 = sbr.rel (0) target = $region5
  $region4: #{tpu_custom_call.1} parent=0 // pred_region
    _
  $region5: #{tpu_custom_call.1} parent=0 // pred_fallthru
    _
  // Predicated region
  $region6: #{tpu_custom_call.1} parent=0 // pred_check
    _
  $region7: #{tpu_custom_call.1} parent=0 // pred_check_branch
    %23 = sbr.rel (0) target = $region9
  $region8: #{tpu_custom_call.1} parent=0 // pred_region
    _
  $region9: #{tpu_custom_call.1} parent=0 // pred_fallthru
    _
  // Predicated region
  $region10: #{tpu_custom_call.1} parent=0 // pred_check
    _
  $region11: #{tpu_custom_call.1} parent=0 // pred_check_branch
    %25 = sbr.rel (0) target = $region13
  $region12: #{tpu_custom_call.1} parent=0 // pred_region
    _
  $region13: #{tpu_custom_call.1} parent=0 // pred_fallthru
    _
  // Predicated region
  $region14: #{tpu_custom_call.1} parent=0 // pred_check
    _
  $region15: #{tpu_custom_call.1} parent=0 // pred_check_branch
    %27 = sbr.rel (0) target = $region17
  $region16: #{tpu_custom_call.1} parent=0 // pred_region
    _
  $region17: #{tpu_custom_call.1} parent=0 // pred_fallthru
    _
  // Predicated region
  $region18: #{tpu_custom_call.1} parent=0 // pred_check
    _
  $region19: #{tpu_custom_call.1} parent=0 // pred_check_branch
    %29 = sbr.rel (0) target = $region21
  $region20: #{tpu_custom_call.1} parent=0 // pred_region
    _
  $region21: #{tpu_custom_call.1} parent=0 // pred_fallthru
    _
  // Predicated region
  $region22: #{tpu_custom_call.1} parent=0 // pred_check
    _
  $region23: #{tpu_custom_call.1} parent=0 // pred_check_branch
    %31 = sbr.rel (0) target = $region25
  $region24: #{tpu_custom_call.1} parent=0 // pred_region
    _
  $region25: #{tpu_custom_call.1} parent=0 // pred_fallthru
    _
  // Predicated region
  $region26: #{tpu_custom_call.1} parent=0 // pred_check
    _
  $region27: #{tpu_custom_call.1} parent=0 // pred_check_branch
    %33 = sbr.rel (0) target = $region29
  $region28: #{tpu_custom_call.1} parent=0 // pred_region
    _
  $region29: #{tpu_custom_call.1} parent=0 // pred_fallthru
    _
  // Predicated region
  $region30: #{tpu_custom_call.1} parent=0 // pred_check
    _
  $region31: #{tpu_custom_call.1} parent=0 // pred_check_branch
    %35 = sbr.rel (0) target = $region33
  $region32: #{tpu_custom_call.1} parent=0 // pred_region
    _
  $region33: #{tpu_custom_call.1} parent=0 // pred_fallthru
    _
  // Predicated region
  $region34: #{tpu_custom_call.1} parent=0 // pred_check
    _
  $region35: #{tpu_custom_call.1} parent=0 // pred_check_branch
    %37 = sbr.rel (0) target = $region37
  $region36: #{tpu_custom_call.1} parent=0 // pred_region
    _
  $region37: #{tpu_custom_call.1} parent=0 // pred_fallthru
    _
  // Predicated region
  $region38: #{tpu_custom_call.1} parent=0 // pred_check
    _
  $region39: #{tpu_custom_call.1} parent=0 // pred_check_branch
    %39 = sbr.rel (0) target = $region41
  $region40: #{tpu_custom_call.1} parent=0 // pred_region
    _
  $region41: #{tpu_custom_call.1} parent=0 // pred_fallthru
    _
  // Predicated region
  $region42: #{tpu_custom_call.1} parent=0 // pred_check
    _
  $region43: #{tpu_custom_call.1} parent=0 // pred_check_branch
    %41 = sbr.rel (0) target = $region45
  $region44: #{tpu_custom_call.1} parent=0 // pred_region
    _
  $region45: #{tpu_custom_call.1} parent=0 // pred_fallthru
    _
  // Predicated region
  $region46: #{tpu_custom_call.1} parent=0 // pred_check
    _
  $region47: #{tpu_custom_call.1} parent=0 // pred_check_branch
    %43 = sbr.rel (0) target = $region49
  $region48: #{tpu_custom_call.1} parent=0 // pred_region
    _
  $region49: #{tpu_custom_call.1} parent=0 // pred_fallthru
    _
  // Predicated region
  $region50: #{tpu_custom_call.1} parent=0 // pred_check
    _
  $region51: #{tpu_custom_call.1} parent=0 // pred_check_branch
    %45 = sbr.rel (0) target = $region53
  $region52: #{tpu_custom_call.1} parent=0 // pred_region
    _
  $region53: #{tpu_custom_call.1} parent=0 // pred_fallthru
    _
  %v46 = vld [vmem:[%s1] sm:$0xff]
  %v47 = vld [vmem:[%s1 + $0x8] sm:$0xff]
  %v48 = vld [vmem:[%s1 + $0x10] sm:$0xff]
  %v49 = vld [vmem:[%s1 + $0x18] sm:$0xff]
  %v50 = vld [vmem:[%s1 + $0x20] sm:$0xff]
  %v51 = vld [vmem:[%s1 + $0x28] sm:$0xff]
  %v52 = vld [vmem:[%s1 + $0x30] sm:$0xff]
  %v53 = vld [vmem:[%s1 + $0x38] sm:$0xff]
  %v54 = vld [vmem:[%s1 + $0x40] sm:$0xff]
  %v55 = vld [vmem:[%s1 + $0x48] sm:$0xff]
  %v56 = vld [vmem:[%s1 + $0x50] sm:$0xff]
  %v57 = vld [vmem:[%s1 + $0x58] sm:$0xff]
  %v58 = vld [vmem:[%s1 + $0x60] sm:$0xff]
  %v59 = vld [vmem:[%s1 + $0x68] sm:$0xff]
  %v60 = vld [vmem:[%s1 + $0x70] sm:$0xff]
  %v61 = vld [vmem:[%s1 + $0x78] sm:$0xff]
  %v62 = vld [vmem:[%s1 + $0x80] sm:$0xff]
  %v63 = vld [vmem:[%s1 + $0x88] sm:$0xff]
  %v64 = vld [vmem:[%s1 + $0x90] sm:$0xff]
  %v65 = vld [vmem:[%s1 + $0x98] sm:$0xff]
  %v66 = vld [vmem:[%s1 + $0xa0] sm:$0xff]
  %v67 = vld [vmem:[%s1 + $0xa8] sm:$0xff]
  %v68 = vld [vmem:[%s1 + $0xb0] sm:$0xff]
  %v69 = vld [vmem:[%s1 + $0xb8] sm:$0xff]
  %v70 = vld [vmem:[%s2] sm:$0xff]
  %v71 = vld [vmem:[%s2 + $0x8] sm:$0xff]
  %v72 = vld [vmem:[%s2 + $0x10] sm:$0xff]
  %v73 = vld [vmem:[%s2 + $0x18] sm:$0xff]
  %vm74 = vcmask 261120
  %v76 = vsel %vm74, %v46, 0
  %v79 = vsel %vm74, %v47, 0
  %v82 = vsel %vm74, %v48, 0
  %v85 = vsel %vm74, %v49, 0
  %v88 = vsel %vm74, %v50, 0
  %v91 = vsel %vm74, %v51, 0
  %v94 = vsel %vm74, %v52, 0
  %v97 = vsel %vm74, %v53, 0
  %v100 = vsel %vm74, %v54, 0
  %v103 = vsel %vm74, %v55, 0
  %v106 = vsel %vm74, %v56, 0
  %v109 = vsel %vm74, %v57, 0
  %v112 = vsel %vm74, %v58, 0
  %v115 = vsel %vm74, %v59, 0
  %v118 = vsel %vm74, %v60, 0
  %v121 = vsel %vm74, %v61, 0
  %v124 = vsel %vm74, %v62, 0
  %v127 = vsel %vm74, %v63, 0
  %v130 = vsel %vm74, %v64, 0
  %v133 = vsel %vm74, %v65, 0
  %v136 = vsel %vm74, %v66, 0
  %v139 = vsel %vm74, %v67, 0
  %v142 = vsel %vm74, %v68, 0
  %v145 = vsel %vm74, %v69, 0
  %147 = vmatprep.subr.mxu0 0.0
  %148 = vmatpush1.msra.mxu0 0.0
  %149 = vmatprep.subr.mxu0 0.0
  %150 = vmatpush1.msra.mxu0 0.0
  %151 = vmatprep.subr.mxu0 0.0
  %152 = vmatpush1.msra.mxu0 0.0
  %153 = vmatprep.subr.mxu0 0.0
  %154 = vmatpush1.msra.mxu0 0.0
  %155 = vmatprep.subr.mxu0 0.0
  %156 = vmatpush1.msra.mxu0 0.0
  %157 = vmatprep.subr.mxu0 0.0
  %158 = vmatpush1.msra.mxu0 0.0
  %159 = vmatprep.subr.mxu0 0.0
  %160 = vmatpush1.msra.mxu0 0.0
  %161 = vmatprep.subr.mxu0 0.0
  %162 = vmatpush1.msra.mxu0 0.0
  %163 = vmatprep.subr.mxu0 0.0
  %164 = vmatpush1.msra.mxu0 0.0
  %165 = vmatprep.subr.mxu0 0.0
  %166 = vmatpush1.msra.mxu0 0.0
  %167 = vmatprep.subr.mxu0 0.0
  %168 = vmatpush1.msra.mxu0 0.0
  %169 = vmatprep.subr.mxu0 0.0
  %170 = vmatpush1.msra.mxu0 0.0
  %171 = vmatprep.subr.mxu0 0.0
  %172 = vmatpush1.msra.mxu0 %v73
  %173 = vmatprep.subr.mxu0 0.0
  %174 = vmatpush1.msra.mxu0 %v72
  %175 = vmatprep.subr.mxu0 0.0
  %176 = vmatpush1.msra.mxu0 %v71
  %177 = vmatprep.subr.mxu0 0.0
  %178 = vmatpush1.msra.mxu0 %v70
  %179 = vmatprep.subr.mxu0 0.0
  %180 = vmatpush2.msra.mxu0 0.0
  %181 = vmatprep.subr.mxu0 0.0
  %182 = vmatpush2.msra.mxu0 0.0
  %183 = vmatprep.subr.mxu0 0.0
  %184 = vmatpush2.msra.mxu0 0.0
  %185 = vmatprep.subr.mxu0 0.0
  %186 = vmatpush2.msra.mxu0 0.0
  %187 = vmatprep.subr.mxu0 0.0
  %188 = vmatpush2.msra.mxu0 0.0
  %189 = vmatprep.subr.mxu0 0.0
  %190 = vmatpush2.msra.mxu0 0.0
  %191 = vmatprep.subr.mxu0 0.0
  %192 = vmatpush2.msra.mxu0 0.0
  %193 = vmatprep.subr.mxu0 0.0
  %194 = vmatpush2.msra.mxu0 0.0
  %195 = vmatprep.subr.mxu0 0.0
  %196 = vmatpush2.msra.mxu0 0.0
  %197 = vmatprep.subr.mxu0 0.0
  %198 = vmatpush2.msra.mxu0 0.0
  %199 = vmatprep.subr.mxu0 0.0
  %200 = vmatpush2.msra.mxu0 0.0
  %201 = vmatprep.subr.mxu0 0.0
  %202 = vmatpush2.msra.mxu0 0.0
  %203 = vmatprep.subr.mxu0 0.0
  %204 = vmatpush2.msra.mxu0 0.0
  %205 = vmatprep.subr.mxu0 0.0
  %206 = vmatpush2.msra.mxu0 0.0
  %207 = vmatprep.subr.mxu0 0.0
  %208 = vmatpush2.msra.mxu0 0.0
  %209 = vmatprep.subr.mxu0 0.0
  %210 = vmatpush2.msra.mxu0 0.0
  %211 = vmatprep.mubr.f32.mxu0 0.0
  %212 = vmatmul.mubr.f32.gmra.mxu0 %v76
  %v213 = vpop.f32.mrf.mxu0
  %v214 = vadd.f32 0.0, %v213
  %v215 = vpop.f32.mrf.mxu0
  %216 = vmatprep.mubr.f32.mxu0 0.0
  %217 = vmatmul.mubr.f32.gmra.mxu0 %v79
  %v218 = vpop.f32.mrf.mxu0
  %v219 = vadd.f32 0.0, %v218
  %v220 = vpop.f32.mrf.mxu0
  %221 = vmatprep.mubr.f32.mxu0 0.0
  %222 = vmatmul.mubr.f32.gmra.mxu0 %v82
  %v223 = vpop.f32.mrf.mxu0
  %v224 = vadd.f32 0.0, %v223
  %v225 = vpop.f32.mrf.mxu0
  %226 = vmatprep.mubr.f32.mxu0 0.0
  %227 = vmatmul.mubr.f32.gmra.mxu0 %v85
  %v228 = vpop.f32.mrf.mxu0
  %v229 = vadd.f32 0.0, %v228
  %v230 = vpop.f32.mrf.mxu0
  %231 = vmatprep.mubr.f32.mxu0 0.0
  %232 = vmatmul.mubr.f32.gmra.mxu0 %v88
  %v233 = vpop.f32.mrf.mxu0
  %v234 = vadd.f32 0.0, %v233
  %v235 = vpop.f32.mrf.mxu0
  %236 = vmatprep.mubr.f32.mxu0 0.0
  %237 = vmatmul.mubr.f32.gmra.mxu0 %v91
  %v238 = vpop.f32.mrf.mxu0
  %v239 = vadd.f32 0.0, %v238
  %v240 = vpop.f32.mrf.mxu0
  %241 = vmatprep.mubr.f32.mxu0 0.0
  %242 = vmatmul.mubr.f32.gmra.mxu0 %v94
  %v243 = vpop.f32.mrf.mxu0
  %v244 = vadd.f32 0.0, %v243
  %v245 = vpop.f32.mrf.mxu0
  %246 = vmatprep.mubr.f32.mxu0 0.0
  %247 = vmatmul.mubr.f32.gmra.mxu0 %v97
  %v248 = vpop.f32.mrf.mxu0
  %v249 = vadd.f32 0.0, %v248
  %v250 = vpop.f32.mrf.mxu0
  %251 = vmatprep.mubr.f32.mxu0 0.0
  %252 = vmatmul.mubr.f32.gmra.mxu0 %v100
  %v253 = vpop.f32.mrf.mxu0
  %v254 = vadd.f32 0.0, %v253
  %v255 = vpop.f32.mrf.mxu0
  %256 = vmatprep.mubr.f32.mxu0 0.0
  %257 = vmatmul.mubr.f32.gmra.mxu0 %v103
  %v258 = vpop.f32.mrf.mxu0
  %v259 = vadd.f32 0.0, %v258
  %v260 = vpop.f32.mrf.mxu0
  %261 = vmatprep.mubr.f32.mxu0 0.0
  %262 = vmatmul.mubr.f32.gmra.mxu0 %v106
  %v263 = vpop.f32.mrf.mxu0
  %v264 = vadd.f32 0.0, %v263
  %v265 = vpop.f32.mrf.mxu0
  %266 = vmatprep.mubr.f32.mxu0 0.0
  %267 = vmatmul.mubr.f32.gmra.mxu0 %v109
  %v268 = vpop.f32.mrf.mxu0
  %v269 = vadd.f32 0.0, %v268
  %v270 = vpop.f32.mrf.mxu0
  %271 = vmatprep.mubr.f32.mxu0 0.0
  %272 = vmatmul.mubr.f32.gmra.mxu0 %v112
  %v273 = vpop.f32.mrf.mxu0
  %v274 = vadd.f32 0.0, %v273
  %v275 = vpop.f32.mrf.mxu0
  %276 = vmatprep.mubr.f32.mxu0 0.0
  %277 = vmatmul.mubr.f32.gmra.mxu0 %v115
  %v278 = vpop.f32.mrf.mxu0
  %v279 = vadd.f32 0.0, %v278
  %v280 = vpop.f32.mrf.mxu0
  %281 = vmatprep.mubr.f32.mxu0 0.0
  %282 = vmatmul.mubr.f32.gmra.mxu0 %v118
  %v283 = vpop.f32.mrf.mxu0
  %v284 = vadd.f32 0.0, %v283
  %v285 = vpop.f32.mrf.mxu0
  %286 = vmatprep.mubr.f32.mxu0 0.0
  %287 = vmatmul.mubr.f32.gmra.mxu0 %v121
  %v288 = vpop.f32.mrf.mxu0
  %v289 = vadd.f32 0.0, %v288
  %v290 = vpop.f32.mrf.mxu0
  %291 = vmatprep.mubr.f32.mxu0 0.0
  %292 = vmatmul.mubr.f32.gmra.mxu0 %v124
  %v293 = vpop.f32.mrf.mxu0
  %v294 = vadd.f32 0.0, %v293
  %v295 = vpop.f32.mrf.mxu0
  %296 = vmatprep.mubr.f32.mxu0 0.0
  %297 = vmatmul.mubr.f32.gmra.mxu0 %v127
  %v298 = vpop.f32.mrf.mxu0
  %v299 = vadd.f32 0.0, %v298
  %v300 = vpop.f32.mrf.mxu0
  %301 = vmatprep.mubr.f32.mxu0 0.0
  %302 = vmatmul.mubr.f32.gmra.mxu0 %v130
  %v303 = vpop.f32.mrf.mxu0
  %v304 = vadd.f32 0.0, %v303
  %v305 = vpop.f32.mrf.mxu0
  %306 = vmatprep.mubr.f32.mxu0 0.0
  %307 = vmatmul.mubr.f32.gmra.mxu0 %v133
  %v308 = vpop.f32.mrf.mxu0
  %v309 = vadd.f32 0.0, %v308
  %v310 = vpop.f32.mrf.mxu0
  %311 = vmatprep.mubr.f32.mxu0 0.0
  %312 = vmatmul.mubr.f32.gmra.mxu0 %v136
  %v313 = vpop.f32.mrf.mxu0
  %v314 = vadd.f32 0.0, %v313
  %v315 = vpop.f32.mrf.mxu0
  %316 = vmatprep.mubr.f32.mxu0 0.0
  %317 = vmatmul.mubr.f32.gmra.mxu0 %v139
  %v318 = vpop.f32.mrf.mxu0
  %v319 = vadd.f32 0.0, %v318
  %v320 = vpop.f32.mrf.mxu0
  %321 = vmatprep.mubr.f32.mxu0 0.0
  %322 = vmatmul.mubr.f32.gmra.mxu0 %v142
  %v323 = vpop.f32.mrf.mxu0
  %v324 = vadd.f32 0.0, %v323
  %v325 = vpop.f32.mrf.mxu0
  %326 = vmatprep.mubr.f32.mxu0 0.0
  %327 = vmatmul.mubr.f32.gmra.mxu0 %v145
  %v328 = vpop.f32.mrf.mxu0
  %v329 = vadd.f32 0.0, %v328
  %v330 = vpop.f32.mrf.mxu0
  %331 = vdwg.mxu0
  %v332 = vld [vmem:[%s3] sm:$0xff]
  %v333 = vld [vmem:[%s3 + $0x8] sm:$0xff]
  %v334 = vld [vmem:[%s3 + $0x10] sm:$0xff]
  %v335 = vld [vmem:[%s3 + $0x18] sm:$0xff]
  %336 = vmatprep.subr.mxu0 0.0
  %337 = vmatpush1.msra.mxu0 0.0
  %338 = vmatprep.subr.mxu0 0.0
  %339 = vmatpush1.msra.mxu0 0.0
  %340 = vmatprep.subr.mxu0 0.0
  %341 = vmatpush1.msra.mxu0 0.0
  %342 = vmatprep.subr.mxu0 0.0
  %343 = vmatpush1.msra.mxu0 0.0
  %344 = vmatprep.subr.mxu0 0.0
  %345 = vmatpush1.msra.mxu0 0.0
  %346 = vmatprep.subr.mxu0 0.0
  %347 = vmatpush1.msra.mxu0 0.0
  %348 = vmatprep.subr.mxu0 0.0
  %349 = vmatpush1.msra.mxu0 0.0
  %350 = vmatprep.subr.mxu0 0.0
  %351 = vmatpush1.msra.mxu0 0.0
  %352 = vmatprep.subr.mxu0 0.0
  %353 = vmatpush1.msra.mxu0 0.0
  %354 = vmatprep.subr.mxu0 0.0
  %355 = vmatpush1.msra.mxu0 0.0
  %356 = vmatprep.subr.mxu0 0.0
  %357 = vmatpush1.msra.mxu0 0.0
  %358 = vmatprep.subr.mxu0 0.0
  %359 = vmatpush1.msra.mxu0 0.0
  %360 = vmatprep.subr.mxu0 0.0
  %361 = vmatpush1.msra.mxu0 %v335
  %362 = vmatprep.subr.mxu0 0.0
  %363 = vmatpush1.msra.mxu0 %v334
  %364 = vmatprep.subr.mxu0 0.0
  %365 = vmatpush1.msra.mxu0 %v333
  %366 = vmatprep.subr.mxu0 0.0
  %367 = vmatpush1.msra.mxu0 %v332
  %368 = vmatprep.subr.mxu0 0.0
  %369 = vmatpush2.msra.mxu0 0.0
  %370 = vmatprep.subr.mxu0 0.0
  %371 = vmatpush2.msra.mxu0 0.0
  %372 = vmatprep.subr.mxu0 0.0
  %373 = vmatpush2.msra.mxu0 0.0
  %374 = vmatprep.subr.mxu0 0.0
  %375 = vmatpush2.msra.mxu0 0.0
  %376 = vmatprep.subr.mxu0 0.0
  %377 = vmatpush2.msra.mxu0 0.0
  %378 = vmatprep.subr.mxu0 0.0
  %379 = vmatpush2.msra.mxu0 0.0
  %380 = vmatprep.subr.mxu0 0.0
  %381 = vmatpush2.msra.mxu0 0.0
  %382 = vmatprep.subr.mxu0 0.0
  %383 = vmatpush2.msra.mxu0 0.0
  %384 = vmatprep.subr.mxu0 0.0
  %385 = vmatpush2.msra.mxu0 0.0
  %386 = vmatprep.subr.mxu0 0.0
  %387 = vmatpush2.msra.mxu0 0.0
  %388 = vmatprep.subr.mxu0 0.0
  %389 = vmatpush2.msra.mxu0 0.0
  %390 = vmatprep.subr.mxu0 0.0
  %391 = vmatpush2.msra.mxu0 0.0
  %392 = vmatprep.subr.mxu0 0.0
  %393 = vmatpush2.msra.mxu0 0.0
  %394 = vmatprep.subr.mxu0 0.0
  %395 = vmatpush2.msra.mxu0 0.0
  %396 = vmatprep.subr.mxu0 0.0
  %397 = vmatpush2.msra.mxu0 0.0
  %398 = vmatprep.subr.mxu0 0.0
  %399 = vmatpush2.msra.mxu0 0.0
  %400 = vmatprep.mubr.f32.mxu0 0.0
  %401 = vmatmul.mubr.f32.gmra.mxu0 %v76
  %v402 = vpop.f32.mrf.mxu0
  %v403 = vadd.f32 0.0, %v402
  %v404 = vpop.f32.mrf.mxu0
  %405 = vmatprep.mubr.f32.mxu0 0.0
  %406 = vmatmul.mubr.f32.gmra.mxu0 %v79
  %v407 = vpop.f32.mrf.mxu0
  %v408 = vadd.f32 0.0, %v407
  %v409 = vpop.f32.mrf.mxu0
  %410 = vmatprep.mubr.f32.mxu0 0.0
  %411 = vmatmul.mubr.f32.gmra.mxu0 %v82
  %v412 = vpop.f32.mrf.mxu0
  %v413 = vadd.f32 0.0, %v412
  %v414 = vpop.f32.mrf.mxu0
  %415 = vmatprep.mubr.f32.mxu0 0.0
  %416 = vmatmul.mubr.f32.gmra.mxu0 %v85
  %v417 = vpop.f32.mrf.mxu0
  %v418 = vadd.f32 0.0, %v417
  %v419 = vpop.f32.mrf.mxu0
  %420 = vmatprep.mubr.f32.mxu0 0.0
  %421 = vmatmul.mubr.f32.gmra.mxu0 %v88
  %v422 = vpop.f32.mrf.mxu0
  %v423 = vadd.f32 0.0, %v422
  %v424 = vpop.f32.mrf.mxu0
  %425 = vmatprep.mubr.f32.mxu0 0.0
  %426 = vmatmul.mubr.f32.gmra.mxu0 %v91
  %v427 = vpop.f32.mrf.mxu0
  %v428 = vadd.f32 0.0, %v427
  %v429 = vpop.f32.mrf.mxu0
  %430 = vmatprep.mubr.f32.mxu0 0.0
  %431 = vmatmul.mubr.f32.gmra.mxu0 %v94
  %v432 = vpop.f32.mrf.mxu0
  %v433 = vadd.f32 0.0, %v432
  %v434 = vpop.f32.mrf.mxu0
  %435 = vmatprep.mubr.f32.mxu0 0.0
  %436 = vmatmul.mubr.f32.gmra.mxu0 %v97
  %v437 = vpop.f32.mrf.mxu0
  %v438 = vadd.f32 0.0, %v437
  %v439 = vpop.f32.mrf.mxu0
  %440 = vmatprep.mubr.f32.mxu0 0.0
  %441 = vmatmul.mubr.f32.gmra.mxu0 %v100
  %v442 = vpop.f32.mrf.mxu0
  %v443 = vadd.f32 0.0, %v442
  %v444 = vpop.f32.mrf.mxu0
  %445 = vmatprep.mubr.f32.mxu0 0.0
  %446 = vmatmul.mubr.f32.gmra.mxu0 %v103
  %v447 = vpop.f32.mrf.mxu0
  %v448 = vadd.f32 0.0, %v447
  %v449 = vpop.f32.mrf.mxu0
  %450 = vmatprep.mubr.f32.mxu0 0.0
  %451 = vmatmul.mubr.f32.gmra.mxu0 %v106
  %v452 = vpop.f32.mrf.mxu0
  %v453 = vadd.f32 0.0, %v452
  %v454 = vpop.f32.mrf.mxu0
  %455 = vmatprep.mubr.f32.mxu0 0.0
  %456 = vmatmul.mubr.f32.gmra.mxu0 %v109
  %v457 = vpop.f32.mrf.mxu0
  %v458 = vadd.f32 0.0, %v457
  %v459 = vpop.f32.mrf.mxu0
  %460 = vmatprep.mubr.f32.mxu0 0.0
  %461 = vmatmul.mubr.f32.gmra.mxu0 %v112
  %v462 = vpop.f32.mrf.mxu0
  %v463 = vadd.f32 0.0, %v462
  %v464 = vpop.f32.mrf.mxu0
  %465 = vmatprep.mubr.f32.mxu0 0.0
  %466 = vmatmul.mubr.f32.gmra.mxu0 %v115
  %v467 = vpop.f32.mrf.mxu0
  %v468 = vadd.f32 0.0, %v467
  %v469 = vpop.f32.mrf.mxu0
  %470 = vmatprep.mubr.f32.mxu0 0.0
  %471 = vmatmul.mubr.f32.gmra.mxu0 %v118
  %v472 = vpop.f32.mrf.mxu0
  %v473 = vadd.f32 0.0, %v472
  %v474 = vpop.f32.mrf.mxu0
  %475 = vmatprep.mubr.f32.mxu0 0.0
  %476 = vmatmul.mubr.f32.gmra.mxu0 %v121
  %v477 = vpop.f32.mrf.mxu0
  %v478 = vadd.f32 0.0, %v477
  %v479 = vpop.f32.mrf.mxu0
  %480 = vmatprep.mubr.f32.mxu0 0.0
  %481 = vmatmul.mubr.f32.gmra.mxu0 %v124
  %v482 = vpop.f32.mrf.mxu0
  %v483 = vadd.f32 0.0, %v482
  %v484 = vpop.f32.mrf.mxu0
  %485 = vmatprep.mubr.f32.mxu0 0.0
  %486 = vmatmul.mubr.f32.gmra.mxu0 %v127
  %v487 = vpop.f32.mrf.mxu0
  %v488 = vadd.f32 0.0, %v487
  %v489 = vpop.f32.mrf.mxu0
  %490 = vmatprep.mubr.f32.mxu0 0.0
  %491 = vmatmul.mubr.f32.gmra.mxu0 %v130
  %v492 = vpop.f32.mrf.mxu0
  %v493 = vadd.f32 0.0, %v492
  %v494 = vpop.f32.mrf.mxu0
  %495 = vmatprep.mubr.f32.mxu0 0.0
  %496 = vmatmul.mubr.f32.gmra.mxu0 %v133
  %v497 = vpop.f32.mrf.mxu0
  %v498 = vadd.f32 0.0, %v497
  %v499 = vpop.f32.mrf.mxu0
  %500 = vmatprep.mubr.f32.mxu0 0.0
  %501 = vmatmul.mubr.f32.gmra.mxu0 %v136
  %v502 = vpop.f32.mrf.mxu0
  %v503 = vadd.f32 0.0, %v502
  %v504 = vpop.f32.mrf.mxu0
  %505 = vmatprep.mubr.f32.mxu0 0.0
  %506 = vmatmul.mubr.f32.gmra.mxu0 %v139
  %v507 = vpop.f32.mrf.mxu0
  %v508 = vadd.f32 0.0, %v507
  %v509 = vpop.f32.mrf.mxu0
  %510 = vmatprep.mubr.f32.mxu0 0.0
  %511 = vmatmul.mubr.f32.gmra.mxu0 %v142
  %v512 = vpop.f32.mrf.mxu0
  %v513 = vadd.f32 0.0, %v512
  %v514 = vpop.f32.mrf.mxu0
  %515 = vmatprep.mubr.f32.mxu0 0.0
  %516 = vmatmul.mubr.f32.gmra.mxu0 %v145
  %v517 = vpop.f32.mrf.mxu0
  %v518 = vadd.f32 0.0, %v517
  %v519 = vpop.f32.mrf.mxu0
  %520 = vdwg.mxu0
  %v521 = vmul.f32 %v214, %v403
  %v522 = vmul.f32 %v219, %v408
  %v523 = vmul.f32 %v224, %v413
  %v524 = vmul.f32 %v229, %v418
  %v525 = vmul.f32 %v234, %v423
  %v526 = vmul.f32 %v239, %v428
  %v527 = vmul.f32 %v244, %v433
  %v528 = vmul.f32 %v249, %v438
  %v529 = vmul.f32 %v254, %v443
  %v530 = vmul.f32 %v259, %v448
  %v531 = vmul.f32 %v264, %v453
  %v532 = vmul.f32 %v269, %v458
  %v533 = vmul.f32 %v274, %v463
  %v534 = vmul.f32 %v279, %v468
  %v535 = vmul.f32 %v284, %v473
  %v536 = vmul.f32 %v289, %v478
  %v537 = vmul.f32 %v294, %v483
  %v538 = vmul.f32 %v299, %v488
  %v539 = vmul.f32 %v304, %v493
  %v540 = vmul.f32 %v309, %v498
  %v541 = vmul.f32 %v314, %v503
  %v542 = vmul.f32 %v319, %v508
  %v543 = vmul.f32 %v324, %v513
  %v544 = vmul.f32 %v329, %v518
  %v545 = vsel %vm74, %v521, 0.0
  %v546 = vsel %vm74, %v529, 0.0
  %v547 = vadd.f32 %v545, %v546
  %v548 = vsel %vm74, %v537, 0.0
  %v549 = vadd.f32 %v547, %v548
  %v550 = vsel %vm74, %v522, 0.0
  %v551 = vsel %vm74, %v530, 0.0
  %v552 = vadd.f32 %v550, %v551
  %v553 = vsel %vm74, %v538, 0.0
  %v554 = vadd.f32 %v552, %v553
  %v555 = vsel %vm74, %v523, 0.0
  %v556 = vsel %vm74, %v531, 0.0
  %v557 = vadd.f32 %v555, %v556
  %v558 = vsel %vm74, %v539, 0.0
  %v559 = vadd.f32 %v557, %v558
  %v560 = vsel %vm74, %v524, 0.0
  %v561 = vsel %vm74, %v532, 0.0
  %v562 = vadd.f32 %v560, %v561
  %v563 = vsel %vm74, %v540, 0.0
  %v564 = vadd.f32 %v562, %v563
  %v565 = vsel %vm74, %v525, 0.0
  %v566 = vsel %vm74, %v533, 0.0
  %v567 = vadd.f32 %v565, %v566
  %v568 = vsel %vm74, %v541, 0.0
  %v569 = vadd.f32 %v567, %v568
  %v570 = vsel %vm74, %v526, 0.0
  %v571 = vsel %vm74, %v534, 0.0
  %v572 = vadd.f32 %v570, %v571
  %v573 = vsel %vm74, %v542, 0.0
  %v574 = vadd.f32 %v572, %v573
  %v575 = vsel %vm74, %v527, 0.0
  %v576 = vsel %vm74, %v535, 0.0
  %v577 = vadd.f32 %v575, %v576
  %v578 = vsel %vm74, %v543, 0.0
  %v579 = vadd.f32 %v577, %v578
  %v580 = vsel %vm74, %v528, 0.0
  %v581 = vsel %vm74, %v536, 0.0
  %v582 = vadd.f32 %v580, %v581
  %v583 = vsel %vm74, %v544, 0.0
  %v584 = vadd.f32 %v582, %v583
  %v585 = vmul.f32 %v549, 0.17677669
  %v586 = vmul.f32 %v554, 0.17677669
  %v587 = vmul.f32 %v559, 0.17677669
  %v588 = vmul.f32 %v564, 0.17677669
  %v589 = vmul.f32 %v569, 0.17677669
  %v590 = vmul.f32 %v574, 0.17677669
  %v591 = vmul.f32 %v579, 0.17677669
  %v592 = vmul.f32 %v584, 0.17677669
  %v593 = vmul.f32 %v403, %v403
  %v594 = vmul.f32 %v408, %v408
  %v595 = vmul.f32 %v413, %v413
  %v596 = vmul.f32 %v418, %v418
  %v597 = vmul.f32 %v423, %v423
  %v598 = vmul.f32 %v428, %v428
  %v599 = vmul.f32 %v433, %v433
  %v600 = vmul.f32 %v438, %v438
  %v601 = vmul.f32 %v443, %v443
  %v602 = vmul.f32 %v448, %v448
  %v603 = vmul.f32 %v453, %v453
  %v604 = vmul.f32 %v458, %v458
  %v605 = vmul.f32 %v463, %v463
  %v606 = vmul.f32 %v468, %v468
  %v607 = vmul.f32 %v473, %v473
  %v608 = vmul.f32 %v478, %v478
  %v609 = vmul.f32 %v483, %v483
  %v610 = vmul.f32 %v488, %v488
  %v611 = vmul.f32 %v493, %v493
  %v612 = vmul.f32 %v498, %v498
  %v613 = vmul.f32 %v503, %v503
  %v614 = vmul.f32 %v508, %v508
  %v615 = vmul.f32 %v513, %v513
  %v616 = vmul.f32 %v518, %v518
  %v617 = vsel %vm74, %v593, 0.0
  %v618 = vsel %vm74, %v601, 0.0
  %v619 = vadd.f32 %v617, %v618
  %v620 = vsel %vm74, %v609, 0.0
  %v621 = vadd.f32 %v619, %v620
  %v622 = vsel %vm74, %v594, 0.0
  %v623 = vsel %vm74, %v602, 0.0
  %v624 = vadd.f32 %v622, %v623
  %v625 = vsel %vm74, %v610, 0.0
  %v626 = vadd.f32 %v624, %v625
  %v627 = vsel %vm74, %v595, 0.0
  %v628 = vsel %vm74, %v603, 0.0
  %v629 = vadd.f32 %v627, %v628
  %v630 = vsel %vm74, %v611, 0.0
  %v631 = vadd.f32 %v629, %v630
  %v632 = vsel %vm74, %v596, 0.0
  %v633 = vsel %vm74, %v604, 0.0
  %v634 = vadd.f32 %v632, %v633
  %v635 = vsel %vm74, %v612, 0.0
  %v636 = vadd.f32 %v634, %v635
  %v637 = vsel %vm74, %v597, 0.0
  %v638 = vsel %vm74, %v605, 0.0
  %v639 = vadd.f32 %v637, %v638
  %v640 = vsel %vm74, %v613, 0.0
  %v641 = vadd.f32 %v639, %v640
  %v642 = vsel %vm74, %v598, 0.0
  %v643 = vsel %vm74, %v606, 0.0
  %v644 = vadd.f32 %v642, %v643
  %v645 = vsel %vm74, %v614, 0.0
  %v646 = vadd.f32 %v644, %v645
  %v647 = vsel %vm74, %v599, 0.0
  %v648 = vsel %vm74, %v607, 0.0
  %v649 = vadd.f32 %v647, %v648
  %v650 = vsel %vm74, %v615, 0.0
  %v651 = vadd.f32 %v649, %v650
  %v652 = vsel %vm74, %v600, 0.0
  %v653 = vsel %vm74, %v608, 0.0
  %v654 = vadd.f32 %v652, %v653
  %v655 = vsel %vm74, %v616, 0.0
  %v656 = vadd.f32 %v654, %v655
  %v657 = vadd.f32 %v621, 1e-08
  %v658 = vadd.f32 %v626, 1e-08
  %v659 = vadd.f32 %v631, 1e-08
  %v660 = vadd.f32 %v636, 1e-08
  %v661 = vadd.f32 %v641, 1e-08
  %v662 = vadd.f32 %v646, 1e-08
  %v663 = vadd.f32 %v651, 1e-08
  %v664 = vadd.f32 %v656, 1e-08
  %v665 = vrsqrt.pop %v657
  %v666 = vmul.f32 %v657, %v665
  %vm667 = vcmp.eq.f32.partialorder %v657, inf
  %v668 = vsel %vm667, %v657, %v666
  %vm669 = vcmp.eq.f32.partialorder %v657, 0.0
  %v670 = vand.u32 %v657, 2147483648
  %v671 = vsel %vm669, %v670, %v668
  %v672 = vrsqrt.pop %v658
  %v673 = vmul.f32 %v658, %v672
  %vm674 = vcmp.eq.f32.partialorder %v658, inf
  %v675 = vsel %vm674, %v658, %v673
  %vm676 = vcmp.eq.f32.partialorder %v658, 0.0
  %v677 = vand.u32 %v658, 2147483648
  %v678 = vsel %vm676, %v677, %v675
  %v679 = vrsqrt.pop %v659
  %v680 = vmul.f32 %v659, %v679
  %vm681 = vcmp.eq.f32.partialorder %v659, inf
  %v682 = vsel %vm681, %v659, %v680
  %vm683 = vcmp.eq.f32.partialorder %v659, 0.0
  %v684 = vand.u32 %v659, 2147483648
  %v685 = vsel %vm683, %v684, %v682
  %v686 = vrsqrt.pop %v660
  %v687 = vmul.f32 %v660, %v686
  %vm688 = vcmp.eq.f32.partialorder %v660, inf
  %v689 = vsel %vm688, %v660, %v687
  %vm690 = vcmp.eq.f32.partialorder %v660, 0.0
  %v691 = vand.u32 %v660, 2147483648
  %v692 = vsel %vm690, %v691, %v689
  %v693 = vrsqrt.pop %v661
  %v694 = vmul.f32 %v661, %v693
  %vm695 = vcmp.eq.f32.partialorder %v661, inf
  %v696 = vsel %vm695, %v661, %v694
  %vm697 = vcmp.eq.f32.partialorder %v661, 0.0
  %v698 = vand.u32 %v661, 2147483648
  %v699 = vsel %vm697, %v698, %v696
  %v700 = vrsqrt.pop %v662
  %v701 = vmul.f32 %v662, %v700
  %vm702 = vcmp.eq.f32.partialorder %v662, inf
  %v703 = vsel %vm702, %v662, %v701
  %vm704 = vcmp.eq.f32.partialorder %v662, 0.0
  %v705 = vand.u32 %v662, 2147483648
  %v706 = vsel %vm704, %v705, %v703
  %v707 = vrsqrt.pop %v663
  %v708 = vmul.f32 %v663, %v707
  %vm709 = vcmp.eq.f32.partialorder %v663, inf
  %v710 = vsel %vm709, %v663, %v708
  %vm711 = vcmp.eq.f32.partialorder %v663, 0.0
  %v712 = vand.u32 %v663, 2147483648
  %v713 = vsel %vm711, %v712, %v710
  %v714 = vrsqrt.pop %v664
  %v715 = vmul.f32 %v664, %v714
  %vm716 = vcmp.eq.f32.partialorder %v664, inf
  %v717 = vsel %vm716, %v664, %v715
  %vm718 = vcmp.eq.f32.partialorder %v664, 0.0
  %v719 = vand.u32 %v664, 2147483648
  %v720 = vsel %vm718, %v719, %v717
  %v721 = vld [vmem:[%s0] sm:$0xff]
  %v722 = vld [vmem:[%s0 + $0x8] sm:$0xff]
  %v723 = vld [vmem:[%s0 + $0x10] sm:$0xff]
  %v724 = vld [vmem:[%s0 + $0x18] sm:$0xff]
  %v725 = vld [vmem:[%s0 + $0x20] sm:$0xff]
  %v726 = vld [vmem:[%s0 + $0x28] sm:$0xff]
  %v727 = vld [vmem:[%s0 + $0x30] sm:$0xff]
  %v728 = vld [vmem:[%s0 + $0x38] sm:$0xff]
  %v729 = vld [vmem:[%s4] sm:$0xff]
  %v730 = vld [vmem:[%s4 + $0x8] sm:$0xff]
  %v731 = vld [vmem:[%s4 + $0x10] sm:$0xff]
  %v732 = vld [vmem:[%s4 + $0x18] sm:$0xff]
  %v733 = vld [vmem:[%s5] sm:$0xff]
  %v734 = vld [vmem:[%s5 + $0x8] sm:$0xff]
  %v735 = vld [vmem:[%s5 + $0x10] sm:$0xff]
  %v736 = vld [vmem:[%s5 + $0x18] sm:$0xff]
  %v738 = vsel %vm74, %v671, 0
  %v741 = vsel %vm74, %v678, 0
  %v744 = vsel %vm74, %v685, 0
  %v747 = vsel %vm74, %v692, 0
  %v750 = vsel %vm74, %v699, 0
  %v753 = vsel %vm74, %v706, 0
  %v756 = vsel %vm74, %v713, 0
  %v759 = vsel %vm74, %v720, 0
  %761 = vmatprep.subr.mxu0 0.0
  %762 = vmatpush1.msra.mxu0 0.0
  %763 = vmatprep.subr.mxu0 0.0
  %764 = vmatpush1.msra.mxu0 0.0
  %765 = vmatprep.subr.mxu0 0.0
  %766 = vmatpush1.msra.mxu0 0.0
  %767 = vmatprep.subr.mxu0 0.0
  %768 = vmatpush1.msra.mxu0 0.0
  %769 = vmatprep.subr.mxu0 0.0
  %770 = vmatpush1.msra.mxu0 0.0
  %771 = vmatprep.subr.mxu0 0.0
  %772 = vmatpush1.msra.mxu0 0.0
  %773 = vmatprep.subr.mxu0 0.0
  %774 = vmatpush1.msra.mxu0 0.0
  %775 = vmatprep.subr.mxu0 0.0
  %776 = vmatpush1.msra.mxu0 0.0
  %777 = vmatprep.subr.mxu0 0.0
  %778 = vmatpush1.msra.mxu0 0.0
  %779 = vmatprep.subr.mxu0 0.0
  %780 = vmatpush1.msra.mxu0 0.0
  %781 = vmatprep.subr.mxu0 0.0
  %782 = vmatpush1.msra.mxu0 0.0
  %783 = vmatprep.subr.mxu0 0.0
  %784 = vmatpush1.msra.mxu0 0.0
  %785 = vmatprep.subr.mxu0 0.0
  %786 = vmatpush1.msra.mxu0 %v736
  %787 = vmatprep.subr.mxu0 0.0
  %788 = vmatpush1.msra.mxu0 %v735
  %789 = vmatprep.subr.mxu0 0.0
  %790 = vmatpush1.msra.mxu0 %v734
  %791 = vmatprep.subr.mxu0 0.0
  %792 = vmatpush1.msra.mxu0 %v733
  %793 = vmatprep.subr.mxu0 0.0
  %794 = vmatpush2.msra.mxu0 0.0
  %795 = vmatprep.subr.mxu0 0.0
  %796 = vmatpush2.msra.mxu0 0.0
  %797 = vmatprep.subr.mxu0 0.0
  %798 = vmatpush2.msra.mxu0 0.0
  %799 = vmatprep.subr.mxu0 0.0
  %800 = vmatpush2.msra.mxu0 0.0
  %801 = vmatprep.subr.mxu0 0.0
  %802 = vmatpush2.msra.mxu0 0.0
  %803 = vmatprep.subr.mxu0 0.0
  %804 = vmatpush2.msra.mxu0 0.0
  %805 = vmatprep.subr.mxu0 0.0
  %806 = vmatpush2.msra.mxu0 0.0
  %807 = vmatprep.subr.mxu0 0.0
  %808 = vmatpush2.msra.mxu0 0.0
  %809 = vmatprep.subr.mxu0 0.0
  %810 = vmatpush2.msra.mxu0 0.0
  %811 = vmatprep.subr.mxu0 0.0
  %812 = vmatpush2.msra.mxu0 0.0
  %813 = vmatprep.subr.mxu0 0.0
  %814 = vmatpush2.msra.mxu0 0.0
  %815 = vmatprep.subr.mxu0 0.0
  %816 = vmatpush2.msra.mxu0 0.0
  %817 = vmatprep.subr.mxu0 0.0
  %818 = vmatpush2.msra.mxu0 0.0
  %819 = vmatprep.subr.mxu0 0.0
  %820 = vmatpush2.msra.mxu0 0.0
  %821 = vmatprep.subr.mxu0 0.0
  %822 = vmatpush2.msra.mxu0 0.0
  %823 = vmatprep.subr.mxu0 0.0
  %824 = vmatpush2.msra.mxu0 0.0
  %825 = vmatprep.mubr.f32.mxu0 0.0
  %826 = vmatmul.mubr.f32.gmra.mxu0 %v738
  %v827 = vpop.f32.mrf.mxu0
  %v828 = vadd.f32 0.0, %v827
  %v829 = vpop.f32.mrf.mxu0
  %830 = vmatprep.mubr.f32.mxu0 0.0
  %831 = vmatmul.mubr.f32.gmra.mxu0 %v741
  %v832 = vpop.f32.mrf.mxu0
  %v833 = vadd.f32 0.0, %v832
  %v834 = vpop.f32.mrf.mxu0
  %835 = vmatprep.mubr.f32.mxu0 0.0
  %836 = vmatmul.mubr.f32.gmra.mxu0 %v744
  %v837 = vpop.f32.mrf.mxu0
  %v838 = vadd.f32 0.0, %v837
  %v839 = vpop.f32.mrf.mxu0
  %840 = vmatprep.mubr.f32.mxu0 0.0
  %841 = vmatmul.mubr.f32.gmra.mxu0 %v747
  %v842 = vpop.f32.mrf.mxu0
  %v843 = vadd.f32 0.0, %v842
  %v844 = vpop.f32.mrf.mxu0
  %845 = vmatprep.mubr.f32.mxu0 0.0
  %846 = vmatmul.mubr.f32.gmra.mxu0 %v750
  %v847 = vpop.f32.mrf.mxu0
  %v848 = vadd.f32 0.0, %v847
  %v849 = vpop.f32.mrf.mxu0
  %850 = vmatprep.mubr.f32.mxu0 0.0
  %851 = vmatmul.mubr.f32.gmra.mxu0 %v753
  %v852 = vpop.f32.mrf.mxu0
  %v853 = vadd.f32 0.0, %v852
  %v854 = vpop.f32.mrf.mxu0
  %855 = vmatprep.mubr.f32.mxu0 0.0
  %856 = vmatmul.mubr.f32.gmra.mxu0 %v756
  %v857 = vpop.f32.mrf.mxu0
  %v858 = vadd.f32 0.0, %v857
  %v859 = vpop.f32.mrf.mxu0
  %860 = vmatprep.mubr.f32.mxu0 0.0
  %861 = vmatmul.mubr.f32.gmra.mxu0 %v759
  %v862 = vpop.f32.mrf.mxu0
  %v863 = vadd.f32 0.0, %v862
  %v864 = vpop.f32.mrf.mxu0
  %865 = vdwg.mxu0
  %v867 = vsel %vm74, %v721, 0
  %v870 = vsel %vm74, %v722, 0
  %v873 = vsel %vm74, %v723, 0
  %v876 = vsel %vm74, %v724, 0
  %v879 = vsel %vm74, %v725, 0
  %v882 = vsel %vm74, %v726, 0
  %v885 = vsel %vm74, %v727, 0
  %v888 = vsel %vm74, %v728, 0
  %890 = vmatprep.subr.mxu0 0.0
  %891 = vmatpush1.msra.mxu0 0.0
  %892 = vmatprep.subr.mxu0 0.0
  %893 = vmatpush1.msra.mxu0 0.0
  %894 = vmatprep.subr.mxu0 0.0
  %895 = vmatpush1.msra.mxu0 0.0
  %896 = vmatprep.subr.mxu0 0.0
  %897 = vmatpush1.msra.mxu0 0.0
  %898 = vmatprep.subr.mxu0 0.0
  %899 = vmatpush1.msra.mxu0 0.0
  %900 = vmatprep.subr.mxu0 0.0
  %901 = vmatpush1.msra.mxu0 0.0
  %902 = vmatprep.subr.mxu0 0.0
  %903 = vmatpush1.msra.mxu0 0.0
  %904 = vmatprep.subr.mxu0 0.0
  %905 = vmatpush1.msra.mxu0 0.0
  %906 = vmatprep.subr.mxu0 0.0
  %907 = vmatpush1.msra.mxu0 0.0
  %908 = vmatprep.subr.mxu0 0.0
  %909 = vmatpush1.msra.mxu0 0.0
  %910 = vmatprep.subr.mxu0 0.0
  %911 = vmatpush1.msra.mxu0 0.0
  %912 = vmatprep.subr.mxu0 0.0
  %913 = vmatpush1.msra.mxu0 0.0
  %914 = vmatprep.subr.mxu0 0.0
  %915 = vmatpush1.msra.mxu0 %v732
  %916 = vmatprep.subr.mxu0 0.0
  %917 = vmatpush1.msra.mxu0 %v731
  %918 = vmatprep.subr.mxu0 0.0
  %919 = vmatpush1.msra.mxu0 %v730
  %920 = vmatprep.subr.mxu0 0.0
  %921 = vmatpush1.msra.mxu0 %v729
  %922 = vmatprep.subr.mxu0 0.0
  %923 = vmatpush2.msra.mxu0 0.0
  %924 = vmatprep.subr.mxu0 0.0
  %925 = vmatpush2.msra.mxu0 0.0
  %926 = vmatprep.subr.mxu0 0.0
  %927 = vmatpush2.msra.mxu0 0.0
  %928 = vmatprep.subr.mxu0 0.0
  %929 = vmatpush2.msra.mxu0 0.0
  %930 = vmatprep.subr.mxu0 0.0
  %931 = vmatpush2.msra.mxu0 0.0
  %932 = vmatprep.subr.mxu0 0.0
  %933 = vmatpush2.msra.mxu0 0.0
  %934 = vmatprep.subr.mxu0 0.0
  %935 = vmatpush2.msra.mxu0 0.0
  %936 = vmatprep.subr.mxu0 0.0
  %937 = vmatpush2.msra.mxu0 0.0
  %938 = vmatprep.subr.mxu0 0.0
  %939 = vmatpush2.msra.mxu0 0.0
  %940 = vmatprep.subr.mxu0 0.0
  %941 = vmatpush2.msra.mxu0 0.0
  %942 = vmatprep.subr.mxu0 0.0
  %943 = vmatpush2.msra.mxu0 0.0
  %944 = vmatprep.subr.mxu0 0.0
  %945 = vmatpush2.msra.mxu0 0.0
  %946 = vmatprep.subr.mxu0 0.0
  %947 = vmatpush2.msra.mxu0 0.0
  %948 = vmatprep.subr.mxu0 0.0
  %949 = vmatpush2.msra.mxu0 0.0
  %950 = vmatprep.subr.mxu0 0.0
  %951 = vmatpush2.msra.mxu0 0.0
  %952 = vmatprep.subr.mxu0 0.0
  %953 = vmatpush2.msra.mxu0 0.0
  %954 = vmatprep.mubr.f32.mxu0 0.0
  %955 = vmatmul.mubr.f32.gmra.mxu0 %v867
  %v956 = vpop.f32.mrf.mxu0
  %v957 = vadd.f32 %v828, %v956
  %v958 = vpop.f32.mrf.mxu0
  %959 = vmatprep.mubr.f32.mxu0 0.0
  %960 = vmatmul.mubr.f32.gmra.mxu0 %v870
  %v961 = vpop.f32.mrf.mxu0
  %v962 = vadd.f32 %v833, %v961
  %v963 = vpop.f32.mrf.mxu0
  %964 = vmatprep.mubr.f32.mxu0 0.0
  %965 = vmatmul.mubr.f32.gmra.mxu0 %v873
  %v966 = vpop.f32.mrf.mxu0
  %v967 = vadd.f32 %v838, %v966
  %v968 = vpop.f32.mrf.mxu0
  %969 = vmatprep.mubr.f32.mxu0 0.0
  %970 = vmatmul.mubr.f32.gmra.mxu0 %v876
  %v971 = vpop.f32.mrf.mxu0
  %v972 = vadd.f32 %v843, %v971
  %v973 = vpop.f32.mrf.mxu0
  %974 = vmatprep.mubr.f32.mxu0 0.0
  %975 = vmatmul.mubr.f32.gmra.mxu0 %v879
  %v976 = vpop.f32.mrf.mxu0
  %v977 = vadd.f32 %v848, %v976
  %v978 = vpop.f32.mrf.mxu0
  %979 = vmatprep.mubr.f32.mxu0 0.0
  %980 = vmatmul.mubr.f32.gmra.mxu0 %v882
  %v981 = vpop.f32.mrf.mxu0
  %v982 = vadd.f32 %v853, %v981
  %v983 = vpop.f32.mrf.mxu0
  %984 = vmatprep.mubr.f32.mxu0 0.0
  %985 = vmatmul.mubr.f32.gmra.mxu0 %v885
  %v986 = vpop.f32.mrf.mxu0
  %v987 = vadd.f32 %v858, %v986
  %v988 = vpop.f32.mrf.mxu0
  %989 = vmatprep.mubr.f32.mxu0 0.0
  %990 = vmatmul.mubr.f32.gmra.mxu0 %v888
  %v991 = vpop.f32.mrf.mxu0
  %v992 = vadd.f32 %v863, %v991
  %v993 = vpop.f32.mrf.mxu0
  %994 = vdwg.mxu0
  %v995 = vld [vmem:[%s6] sm:$0x1]
  %v997 = vlaneseq
  %v998 = vshrl.u32 %v997, 7
  %v999 = vsub.s32 0, %v998
  %v1000 = vrot.slane %v995, %v999
  %v1002 = vadd.f32 %v957, %v1000
  %v1003 = vadd.f32 %v962, %v1000
  %v1004 = vadd.f32 %v967, %v1000
  %v1005 = vadd.f32 %v972, %v1000
  %v1006 = vadd.f32 %v977, %v1000
  %v1007 = vadd.f32 %v982, %v1000
  %v1008 = vadd.f32 %v987, %v1000
  %v1009 = vadd.f32 %v992, %v1000
  %v1010 = vxor.u32 %v1002, 2147483648
  %v1011 = vxor.u32 %v1003, 2147483648
  %v1012 = vxor.u32 %v1004, 2147483648
  %v1013 = vxor.u32 %v1005, 2147483648
  %v1014 = vxor.u32 %v1006, 2147483648
  %v1015 = vxor.u32 %v1007, 2147483648
  %v1016 = vxor.u32 %v1008, 2147483648
  %v1017 = vxor.u32 %v1009, 2147483648
  %v1018 = vmul.f32 %v1010, 1.442695
  %v1019 = vpow.pop %v1018
  %v1020 = vmul.f32 %v1011, 1.442695
  %v1021 = vpow.pop %v1020
  %v1022 = vmul.f32 %v1012, 1.442695
  %v1023 = vpow.pop %v1022
  %v1024 = vmul.f32 %v1013, 1.442695
  %v1025 = vpow.pop %v1024
  %v1026 = vmul.f32 %v1014, 1.442695
  %v1027 = vpow.pop %v1026
  %v1028 = vmul.f32 %v1015, 1.442695
  %v1029 = vpow.pop %v1028
  %v1030 = vmul.f32 %v1016, 1.442695
  %v1031 = vpow.pop %v1030
  %v1032 = vmul.f32 %v1017, 1.442695
  %v1033 = vpow.pop %v1032
  %v1034 = vadd.f32 %v1019, 1.0
  %v1035 = vadd.f32 %v1021, 1.0
  %v1036 = vadd.f32 %v1023, 1.0
  %v1037 = vadd.f32 %v1025, 1.0
  %v1038 = vadd.f32 %v1027, 1.0
  %v1039 = vadd.f32 %v1029, 1.0
  %v1040 = vadd.f32 %v1031, 1.0
  %v1041 = vadd.f32 %v1033, 1.0
  %v1042 = vrcp.pop %v1034
  %v1043 = vmul.f32 1.0, %v1042
  %v1044 = vrcp.pop %v1035
  %v1045 = vmul.f32 1.0, %v1044
  %v1046 = vrcp.pop %v1036
  %v1047 = vmul.f32 1.0, %v1046
  %v1048 = vrcp.pop %v1037
  %v1049 = vmul.f32 1.0, %v1048
  %v1050 = vrcp.pop %v1038
  %v1051 = vmul.f32 1.0, %v1050
  %v1052 = vrcp.pop %v1039
  %v1053 = vmul.f32 1.0, %v1052
  %v1054 = vrcp.pop %v1040
  %v1055 = vmul.f32 1.0, %v1054
  %v1056 = vrcp.pop %v1041
  %v1057 = vmul.f32 1.0, %v1056
  %v1058 = vmul.f32 %v1002, %v1043
  %v1059 = vmul.f32 %v1003, %v1045
  %v1060 = vmul.f32 %v1004, %v1047
  %v1061 = vmul.f32 %v1005, %v1049
  %v1062 = vmul.f32 %v1006, %v1051
  %v1063 = vmul.f32 %v1007, %v1053
  %v1064 = vmul.f32 %v1008, %v1055
  %v1065 = vmul.f32 %v1009, %v1057
  %v1066 = vmul.f32 %v1058, 1.6666666
  %v1067 = vmul.f32 %v1059, 1.6666666
  %v1068 = vmul.f32 %v1060, 1.6666666
  %v1069 = vmul.f32 %v1061, 1.6666666
  %v1070 = vmul.f32 %v1062, 1.6666666
  %v1071 = vmul.f32 %v1063, 1.6666666
  %v1072 = vmul.f32 %v1064, 1.6666666
  %v1073 = vmul.f32 %v1065, 1.6666666
  %v1074 = vld [vmem:[%s7] sm:$0xff]
  %v1075 = vld [vmem:[%s7 + $0x8] sm:$0xff]
  %v1076 = vld [vmem:[%s7 + $0x10] sm:$0xff]
  %v1077 = vld [vmem:[%s7 + $0x18] sm:$0xff]
  %v1078 = vld [vmem:[%s10] sm:$0x1]
  %v1080 = vlaneseq
  %v1081 = vshrl.u32 %v1080, 7
  %v1082 = vsub.s32 0, %v1081
  %v1083 = vrot.slane %v1078, %v1082
  %v1086 = vsel %vm74, %v1066, 0
  %v1089 = vsel %vm74, %v1067, 0
  %v1092 = vsel %vm74, %v1068, 0
  %v1095 = vsel %vm74, %v1069, 0
  %v1098 = vsel %vm74, %v1070, 0
  %v1101 = vsel %vm74, %v1071, 0
  %v1104 = vsel %vm74, %v1072, 0
  %v1107 = vsel %vm74, %v1073, 0
  %1109 = vmatprep.subr.mxu0 0.0
  %1110 = vmatpush1.msra.mxu0 0.0
  %1111 = vmatprep.subr.mxu0 0.0
  %1112 = vmatpush1.msra.mxu0 0.0
  %1113 = vmatprep.subr.mxu0 0.0
  %1114 = vmatpush1.msra.mxu0 0.0
  %1115 = vmatprep.subr.mxu0 0.0
  %1116 = vmatpush1.msra.mxu0 0.0
  %1117 = vmatprep.subr.mxu0 0.0
  %1118 = vmatpush1.msra.mxu0 0.0
  %1119 = vmatprep.subr.mxu0 0.0
  %1120 = vmatpush1.msra.mxu0 0.0
  %1121 = vmatprep.subr.mxu0 0.0
  %1122 = vmatpush1.msra.mxu0 0.0
  %1123 = vmatprep.subr.mxu0 0.0
  %1124 = vmatpush1.msra.mxu0 0.0
  %1125 = vmatprep.subr.mxu0 0.0
  %1126 = vmatpush1.msra.mxu0 0.0
  %1127 = vmatprep.subr.mxu0 0.0
  %1128 = vmatpush1.msra.mxu0 0.0
  %1129 = vmatprep.subr.mxu0 0.0
  %1130 = vmatpush1.msra.mxu0 0.0
  %1131 = vmatprep.subr.mxu0 0.0
  %1132 = vmatpush1.msra.mxu0 0.0
  %1133 = vmatprep.subr.mxu0 0.0
  %1134 = vmatpush1.msra.mxu0 %v1077
  %1135 = vmatprep.subr.mxu0 0.0
  %1136 = vmatpush1.msra.mxu0 %v1076
  %1137 = vmatprep.subr.mxu0 0.0
  %1138 = vmatpush1.msra.mxu0 %v1075
  %1139 = vmatprep.subr.mxu0 0.0
  %1140 = vmatpush1.msra.mxu0 %v1074
  %1141 = vmatprep.subr.mxu0 0.0
  %1142 = vmatpush2.msra.mxu0 0.0
  %1143 = vmatprep.subr.mxu0 0.0
  %1144 = vmatpush2.msra.mxu0 0.0
  %1145 = vmatprep.subr.mxu0 0.0
  %1146 = vmatpush2.msra.mxu0 0.0
  %1147 = vmatprep.subr.mxu0 0.0
  %1148 = vmatpush2.msra.mxu0 0.0
  %1149 = vmatprep.subr.mxu0 0.0
  %1150 = vmatpush2.msra.mxu0 0.0
  %1151 = vmatprep.subr.mxu0 0.0
  %1152 = vmatpush2.msra.mxu0 0.0
  %1153 = vmatprep.subr.mxu0 0.0
  %1154 = vmatpush2.msra.mxu0 0.0
  %1155 = vmatprep.subr.mxu0 0.0
  %1156 = vmatpush2.msra.mxu0 0.0
  %1157 = vmatprep.subr.mxu0 0.0
  %1158 = vmatpush2.msra.mxu0 0.0
  %1159 = vmatprep.subr.mxu0 0.0
  %1160 = vmatpush2.msra.mxu0 0.0
  %1161 = vmatprep.subr.mxu0 0.0
  %1162 = vmatpush2.msra.mxu0 0.0
  %1163 = vmatprep.subr.mxu0 0.0
  %1164 = vmatpush2.msra.mxu0 0.0
  %1165 = vmatprep.subr.mxu0 0.0
  %1166 = vmatpush2.msra.mxu0 0.0
  %1167 = vmatprep.subr.mxu0 0.0
  %1168 = vmatpush2.msra.mxu0 0.0
  %1169 = vmatprep.subr.mxu0 0.0
  %1170 = vmatpush2.msra.mxu0 0.0
  %1171 = vmatprep.subr.mxu0 0.0
  %1172 = vmatpush2.msra.mxu0 0.0
  %1173 = vmatprep.mubr.f32.mxu0 0.0
  %1174 = vmatmul.mubr.f32.gmra.mxu0 %v1086
  %v1175 = vpop.f32.mrf.mxu0
  %v1176 = vadd.f32 %v1083, %v1175
  %v1177 = vpop.f32.mrf.mxu0
  %1178 = vmatprep.mubr.f32.mxu0 0.0
  %1179 = vmatmul.mubr.f32.gmra.mxu0 %v1089
  %v1180 = vpop.f32.mrf.mxu0
  %v1181 = vadd.f32 %v1083, %v1180
  %v1182 = vpop.f32.mrf.mxu0
  %1183 = vmatprep.mubr.f32.mxu0 0.0
  %1184 = vmatmul.mubr.f32.gmra.mxu0 %v1092
  %v1185 = vpop.f32.mrf.mxu0
  %v1186 = vadd.f32 %v1083, %v1185
  %v1187 = vpop.f32.mrf.mxu0
  %1188 = vmatprep.mubr.f32.mxu0 0.0
  %1189 = vmatmul.mubr.f32.gmra.mxu0 %v1095
  %v1190 = vpop.f32.mrf.mxu0
  %v1191 = vadd.f32 %v1083, %v1190
  %v1192 = vpop.f32.mrf.mxu0
  %1193 = vmatprep.mubr.f32.mxu0 0.0
  %1194 = vmatmul.mubr.f32.gmra.mxu0 %v1098
  %v1195 = vpop.f32.mrf.mxu0
  %v1196 = vadd.f32 %v1083, %v1195
  %v1197 = vpop.f32.mrf.mxu0
  %1198 = vmatprep.mubr.f32.mxu0 0.0
  %1199 = vmatmul.mubr.f32.gmra.mxu0 %v1101
  %v1200 = vpop.f32.mrf.mxu0
  %v1201 = vadd.f32 %v1083, %v1200
  %v1202 = vpop.f32.mrf.mxu0
  %1203 = vmatprep.mubr.f32.mxu0 0.0
  %1204 = vmatmul.mubr.f32.gmra.mxu0 %v1104
  %v1205 = vpop.f32.mrf.mxu0
  %v1206 = vadd.f32 %v1083, %v1205
  %v1207 = vpop.f32.mrf.mxu0
  %1208 = vmatprep.mubr.f32.mxu0 0.0
  %1209 = vmatmul.mubr.f32.gmra.mxu0 %v1107
  %v1210 = vpop.f32.mrf.mxu0
  %v1211 = vadd.f32 %v1083, %v1210
  %v1212 = vpop.f32.mrf.mxu0
  %1213 = vdwg.mxu0
  %v1214 = vld [vmem:[%s8] sm:$0xff]
  %v1215 = vld [vmem:[%s8 + $0x8] sm:$0xff]
  %v1216 = vld [vmem:[%s8 + $0x10] sm:$0xff]
  %v1217 = vld [vmem:[%s8 + $0x18] sm:$0xff]
  %v1218 = vld [vmem:[%s11] sm:$0x1]
  %v1220 = vlaneseq
  %v1221 = vshrl.u32 %v1220, 7
  %v1222 = vsub.s32 0, %v1221
  %v1223 = vrot.slane %v1218, %v1222
  %1225 = vmatprep.subr.mxu0 0.0
  %1226 = vmatpush1.msra.mxu0 0.0
  %1227 = vmatprep.subr.mxu0 0.0
  %1228 = vmatpush1.msra.mxu0 0.0
  %1229 = vmatprep.subr.mxu0 0.0
  %1230 = vmatpush1.msra.mxu0 0.0
  %1231 = vmatprep.subr.mxu0 0.0
  %1232 = vmatpush1.msra.mxu0 0.0
  %1233 = vmatprep.subr.mxu0 0.0
  %1234 = vmatpush1.msra.mxu0 0.0
  %1235 = vmatprep.subr.mxu0 0.0
  %1236 = vmatpush1.msra.mxu0 0.0
  %1237 = vmatprep.subr.mxu0 0.0
  %1238 = vmatpush1.msra.mxu0 0.0
  %1239 = vmatprep.subr.mxu0 0.0
  %1240 = vmatpush1.msra.mxu0 0.0
  %1241 = vmatprep.subr.mxu0 0.0
  %1242 = vmatpush1.msra.mxu0 0.0
  %1243 = vmatprep.subr.mxu0 0.0
  %1244 = vmatpush1.msra.mxu0 0.0
  %1245 = vmatprep.subr.mxu0 0.0
  %1246 = vmatpush1.msra.mxu0 0.0
  %1247 = vmatprep.subr.mxu0 0.0
  %1248 = vmatpush1.msra.mxu0 0.0
  %1249 = vmatprep.subr.mxu0 0.0
  %1250 = vmatpush1.msra.mxu0 %v1217
  %1251 = vmatprep.subr.mxu0 0.0
  %1252 = vmatpush1.msra.mxu0 %v1216
  %1253 = vmatprep.subr.mxu0 0.0
  %1254 = vmatpush1.msra.mxu0 %v1215
  %1255 = vmatprep.subr.mxu0 0.0
  %1256 = vmatpush1.msra.mxu0 %v1214
  %1257 = vmatprep.subr.mxu0 0.0
  %1258 = vmatpush2.msra.mxu0 0.0
  %1259 = vmatprep.subr.mxu0 0.0
  %1260 = vmatpush2.msra.mxu0 0.0
  %1261 = vmatprep.subr.mxu0 0.0
  %1262 = vmatpush2.msra.mxu0 0.0
  %1263 = vmatprep.subr.mxu0 0.0
  %1264 = vmatpush2.msra.mxu0 0.0
  %1265 = vmatprep.subr.mxu0 0.0
  %1266 = vmatpush2.msra.mxu0 0.0
  %1267 = vmatprep.subr.mxu0 0.0
  %1268 = vmatpush2.msra.mxu0 0.0
  %1269 = vmatprep.subr.mxu0 0.0
  %1270 = vmatpush2.msra.mxu0 0.0
  %1271 = vmatprep.subr.mxu0 0.0
  %1272 = vmatpush2.msra.mxu0 0.0
  %1273 = vmatprep.subr.mxu0 0.0
  %1274 = vmatpush2.msra.mxu0 0.0
  %1275 = vmatprep.subr.mxu0 0.0
  %1276 = vmatpush2.msra.mxu0 0.0
  %1277 = vmatprep.subr.mxu0 0.0
  %1278 = vmatpush2.msra.mxu0 0.0
  %1279 = vmatprep.subr.mxu0 0.0
  %1280 = vmatpush2.msra.mxu0 0.0
  %1281 = vmatprep.subr.mxu0 0.0
  %1282 = vmatpush2.msra.mxu0 0.0
  %1283 = vmatprep.subr.mxu0 0.0
  %1284 = vmatpush2.msra.mxu0 0.0
  %1285 = vmatprep.subr.mxu0 0.0
  %1286 = vmatpush2.msra.mxu0 0.0
  %1287 = vmatprep.subr.mxu0 0.0
  %1288 = vmatpush2.msra.mxu0 0.0
  %1289 = vmatprep.mubr.f32.mxu0 0.0
  %1290 = vmatmul.mubr.f32.gmra.mxu0 %v1086
  %v1291 = vpop.f32.mrf.mxu0
  %v1292 = vadd.f32 %v1223, %v1291
  %v1293 = vpop.f32.mrf.mxu0
  %1294 = vmatprep.mubr.f32.mxu0 0.0
  %1295 = vmatmul.mubr.f32.gmra.mxu0 %v1089
  %v1296 = vpop.f32.mrf.mxu0
  %v1297 = vadd.f32 %v1223, %v1296
  %v1298 = vpop.f32.mrf.mxu0
  %1299 = vmatprep.mubr.f32.mxu0 0.0
  %1300 = vmatmul.mubr.f32.gmra.mxu0 %v1092
  %v1301 = vpop.f32.mrf.mxu0
  %v1302 = vadd.f32 %v1223, %v1301
  %v1303 = vpop.f32.mrf.mxu0
  %1304 = vmatprep.mubr.f32.mxu0 0.0
  %1305 = vmatmul.mubr.f32.gmra.mxu0 %v1095
  %v1306 = vpop.f32.mrf.mxu0
  %v1307 = vadd.f32 %v1223, %v1306
  %v1308 = vpop.f32.mrf.mxu0
  %1309 = vmatprep.mubr.f32.mxu0 0.0
  %1310 = vmatmul.mubr.f32.gmra.mxu0 %v1098
  %v1311 = vpop.f32.mrf.mxu0
  %v1312 = vadd.f32 %v1223, %v1311
  %v1313 = vpop.f32.mrf.mxu0
  %1314 = vmatprep.mubr.f32.mxu0 0.0
  %1315 = vmatmul.mubr.f32.gmra.mxu0 %v1101
  %v1316 = vpop.f32.mrf.mxu0
  %v1317 = vadd.f32 %v1223, %v1316
  %v1318 = vpop.f32.mrf.mxu0
  %1319 = vmatprep.mubr.f32.mxu0 0.0
  %1320 = vmatmul.mubr.f32.gmra.mxu0 %v1104
  %v1321 = vpop.f32.mrf.mxu0
  %v1322 = vadd.f32 %v1223, %v1321
  %v1323 = vpop.f32.mrf.mxu0
  %1324 = vmatprep.mubr.f32.mxu0 0.0
  %1325 = vmatmul.mubr.f32.gmra.mxu0 %v1107
  %v1326 = vpop.f32.mrf.mxu0
  %v1327 = vadd.f32 %v1223, %v1326
  %v1328 = vpop.f32.mrf.mxu0
  %1329 = vdwg.mxu0
  %v1330 = vld [vmem:[%s9] sm:$0xff]
  %v1331 = vld [vmem:[%s9 + $0x8] sm:$0xff]
  %v1332 = vld [vmem:[%s9 + $0x10] sm:$0xff]
  %v1333 = vld [vmem:[%s9 + $0x18] sm:$0xff]
  %v1334 = vld [vmem:[%s12] sm:$0x1]
  %v1336 = vlaneseq
  %v1337 = vshrl.u32 %v1336, 7
  %v1338 = vsub.s32 0, %v1337
  %v1339 = vrot.slane %v1334, %v1338
  %1341 = vmatprep.subr.mxu0 0.0
  %1342 = vmatpush1.msra.mxu0 0.0
  %1343 = vmatprep.subr.mxu0 0.0
  %1344 = vmatpush1.msra.mxu0 0.0
  %1345 = vmatprep.subr.mxu0 0.0
  %1346 = vmatpush1.msra.mxu0 0.0
  %1347 = vmatprep.subr.mxu0 0.0
  %1348 = vmatpush1.msra.mxu0 0.0
  %1349 = vmatprep.subr.mxu0 0.0
  %1350 = vmatpush1.msra.mxu0 0.0
  %1351 = vmatprep.subr.mxu0 0.0
  %1352 = vmatpush1.msra.mxu0 0.0
  %1353 = vmatprep.subr.mxu0 0.0
  %1354 = vmatpush1.msra.mxu0 0.0
  %1355 = vmatprep.subr.mxu0 0.0
  %1356 = vmatpush1.msra.mxu0 0.0
  %1357 = vmatprep.subr.mxu0 0.0
  %1358 = vmatpush1.msra.mxu0 0.0
  %1359 = vmatprep.subr.mxu0 0.0
  %1360 = vmatpush1.msra.mxu0 0.0
  %1361 = vmatprep.subr.mxu0 0.0
  %1362 = vmatpush1.msra.mxu0 0.0
  %1363 = vmatprep.subr.mxu0 0.0
  %1364 = vmatpush1.msra.mxu0 0.0
  %1365 = vmatprep.subr.mxu0 0.0
  %1366 = vmatpush1.msra.mxu0 %v1333
  %1367 = vmatprep.subr.mxu0 0.0
  %1368 = vmatpush1.msra.mxu0 %v1332
  %1369 = vmatprep.subr.mxu0 0.0
  %1370 = vmatpush1.msra.mxu0 %v1331
  %1371 = vmatprep.subr.mxu0 0.0
  %1372 = vmatpush1.msra.mxu0 %v1330
  %1373 = vmatprep.subr.mxu0 0.0
  %1374 = vmatpush2.msra.mxu0 0.0
  %1375 = vmatprep.subr.mxu0 0.0
  %1376 = vmatpush2.msra.mxu0 0.0
  %1377 = vmatprep.subr.mxu0 0.0
  %1378 = vmatpush2.msra.mxu0 0.0
  %1379 = vmatprep.subr.mxu0 0.0
  %1380 = vmatpush2.msra.mxu0 0.0
  %1381 = vmatprep.subr.mxu0 0.0
  %1382 = vmatpush2.msra.mxu0 0.0
  %1383 = vmatprep.subr.mxu0 0.0
  %1384 = vmatpush2.msra.mxu0 0.0
  %1385 = vmatprep.subr.mxu0 0.0
  %1386 = vmatpush2.msra.mxu0 0.0
  %1387 = vmatprep.subr.mxu0 0.0
  %1388 = vmatpush2.msra.mxu0 0.0
  %1389 = vmatprep.subr.mxu0 0.0
  %1390 = vmatpush2.msra.mxu0 0.0
  %1391 = vmatprep.subr.mxu0 0.0
  %1392 = vmatpush2.msra.mxu0 0.0
  %1393 = vmatprep.subr.mxu0 0.0
  %1394 = vmatpush2.msra.mxu0 0.0
  %1395 = vmatprep.subr.mxu0 0.0
  %1396 = vmatpush2.msra.mxu0 0.0
  %1397 = vmatprep.subr.mxu0 0.0
  %1398 = vmatpush2.msra.mxu0 0.0
  %1399 = vmatprep.subr.mxu0 0.0
  %1400 = vmatpush2.msra.mxu0 0.0
  %1401 = vmatprep.subr.mxu0 0.0
  %1402 = vmatpush2.msra.mxu0 0.0
  %1403 = vmatprep.subr.mxu0 0.0
  %1404 = vmatpush2.msra.mxu0 0.0
  %1405 = vmatprep.mubr.f32.mxu0 0.0
  %1406 = vmatmul.mubr.f32.gmra.mxu0 %v1086
  %v1407 = vpop.f32.mrf.mxu0
  %v1408 = vadd.f32 %v1339, %v1407
  %v1409 = vpop.f32.mrf.mxu0
  %1410 = vmatprep.mubr.f32.mxu0 0.0
  %1411 = vmatmul.mubr.f32.gmra.mxu0 %v1089
  %v1412 = vpop.f32.mrf.mxu0
  %v1413 = vadd.f32 %v1339, %v1412
  %v1414 = vpop.f32.mrf.mxu0
  %1415 = vmatprep.mubr.f32.mxu0 0.0
  %1416 = vmatmul.mubr.f32.gmra.mxu0 %v1092
  %v1417 = vpop.f32.mrf.mxu0
  %v1418 = vadd.f32 %v1339, %v1417
  %v1419 = vpop.f32.mrf.mxu0
  %1420 = vmatprep.mubr.f32.mxu0 0.0
  %1421 = vmatmul.mubr.f32.gmra.mxu0 %v1095
  %v1422 = vpop.f32.mrf.mxu0
  %v1423 = vadd.f32 %v1339, %v1422
  %v1424 = vpop.f32.mrf.mxu0
  %1425 = vmatprep.mubr.f32.mxu0 0.0
  %1426 = vmatmul.mubr.f32.gmra.mxu0 %v1098
  %v1427 = vpop.f32.mrf.mxu0
  %v1428 = vadd.f32 %v1339, %v1427
  %v1429 = vpop.f32.mrf.mxu0
  %1430 = vmatprep.mubr.f32.mxu0 0.0
  %1431 = vmatmul.mubr.f32.gmra.mxu0 %v1101
  %v1432 = vpop.f32.mrf.mxu0
  %v1433 = vadd.f32 %v1339, %v1432
  %v1434 = vpop.f32.mrf.mxu0
  %1435 = vmatprep.mubr.f32.mxu0 0.0
  %1436 = vmatmul.mubr.f32.gmra.mxu0 %v1104
  %v1437 = vpop.f32.mrf.mxu0
  %v1438 = vadd.f32 %v1339, %v1437
  %v1439 = vpop.f32.mrf.mxu0
  %1440 = vmatprep.mubr.f32.mxu0 0.0
  %1441 = vmatmul.mubr.f32.gmra.mxu0 %v1107
  %v1442 = vpop.f32.mrf.mxu0
  %v1443 = vadd.f32 %v1339, %v1442
  %v1444 = vpop.f32.mrf.mxu0
  %1445 = vdwg.mxu0
  %v1446 = vmul.f32 %v1292, %v585
  %v1447 = vmul.f32 %v1297, %v586
  %v1448 = vmul.f32 %v1302, %v587
  %v1449 = vmul.f32 %v1307, %v588
  %v1450 = vmul.f32 %v1312, %v589
  %v1451 = vmul.f32 %v1317, %v590
  %v1452 = vmul.f32 %v1322, %v591
  %v1453 = vmul.f32 %v1327, %v592
  %v1454 = vadd.f32 %v1176, %v1446
  %v1455 = vadd.f32 %v1181, %v1447
  %v1456 = vadd.f32 %v1186, %v1448
  %v1457 = vadd.f32 %v1191, %v1449
  %v1458 = vadd.f32 %v1196, %v1450
  %v1459 = vadd.f32 %v1201, %v1451
  %v1460 = vadd.f32 %v1206, %v1452
  %v1461 = vadd.f32 %v1211, %v1453
  %v1462 = vmul.f32 %v1454, 0.70710677
  %v1463 = vmul.f32 %v1455, 0.70710677
  %v1464 = vmul.f32 %v1456, 0.70710677
  %v1465 = vmul.f32 %v1457, 0.70710677
  %v1466 = vmul.f32 %v1458, 0.70710677
  %v1467 = vmul.f32 %v1459, 0.70710677
  %v1468 = vmul.f32 %v1460, 0.70710677
  %v1469 = vmul.f32 %v1461, 0.70710677
  %v1470 = vmul.f32 %v1408, %v214
  %v1471 = vmul.f32 %v1413, %v219
  %v1472 = vmul.f32 %v1418, %v224
  %v1473 = vmul.f32 %v1423, %v229
  %v1474 = vmul.f32 %v1428, %v234
  %v1475 = vmul.f32 %v1433, %v239
  %v1476 = vmul.f32 %v1438, %v244
  %v1477 = vmul.f32 %v1443, %v249
  %v1478 = vmul.f32 %v1408, %v254
  %v1479 = vmul.f32 %v1413, %v259
  %v1480 = vmul.f32 %v1418, %v264
  %v1481 = vmul.f32 %v1423, %v269
  %v1482 = vmul.f32 %v1428, %v274
  %v1483 = vmul.f32 %v1433, %v279
  %v1484 = vmul.f32 %v1438, %v284
  %v1485 = vmul.f32 %v1443, %v289
  %v1486 = vmul.f32 %v1408, %v294
  %v1487 = vmul.f32 %v1413, %v299
  %v1488 = vmul.f32 %v1418, %v304
  %v1489 = vmul.f32 %v1423, %v309
  %v1490 = vmul.f32 %v1428, %v314
  %v1491 = vmul.f32 %v1433, %v319
  %v1492 = vmul.f32 %v1438, %v324
  %v1493 = vmul.f32 %v1443, %v329
  %1494 = vst.msk [vmem:[%s13] sm:$0xff] %vm74, %v1462
  %1495 = vst.msk [vmem:[%s13 + $0x8] sm:$0xff] %vm74, %v1463
  %1496 = vst.msk [vmem:[%s13 + $0x10] sm:$0xff] %vm74, %v1464
  %1497 = vst.msk [vmem:[%s13 + $0x18] sm:$0xff] %vm74, %v1465
  %1498 = vst.msk [vmem:[%s13 + $0x20] sm:$0xff] %vm74, %v1466
  %1499 = vst.msk [vmem:[%s13 + $0x28] sm:$0xff] %vm74, %v1467
  %1500 = vst.msk [vmem:[%s13 + $0x30] sm:$0xff] %vm74, %v1468
  %1501 = vst.msk [vmem:[%s13 + $0x38] sm:$0xff] %vm74, %v1469
  %1502 = vst.msk [vmem:[%s14] sm:$0xff] %vm74, %v1470
  %1503 = vst.msk [vmem:[%s14 + $0x8] sm:$0xff] %vm74, %v1471
  %1504 = vst.msk [vmem:[%s14 + $0x10] sm:$0xff] %vm74, %v1472
  %1505 = vst.msk [vmem:[%s14 + $0x18] sm:$0xff] %vm74, %v1473
  %1506 = vst.msk [vmem:[%s14 + $0x20] sm:$0xff] %vm74, %v1474
  %1507 = vst.msk [vmem:[%s14 + $0x28] sm:$0xff] %vm74, %v1475
  %1508 = vst.msk [vmem:[%s14 + $0x30] sm:$0xff] %vm74, %v1476
  %1509 = vst.msk [vmem:[%s14 + $0x38] sm:$0xff] %vm74, %v1477
  %1510 = vst.msk [vmem:[%s14 + $0x40] sm:$0xff] %vm74, %v1478
  %1511 = vst.msk [vmem:[%s14 + $0x48] sm:$0xff] %vm74, %v1479
  %1512 = vst.msk [vmem:[%s14 + $0x50] sm:$0xff] %vm74, %v1480
  %1513 = vst.msk [vmem:[%s14 + $0x58] sm:$0xff] %vm74, %v1481
  %1514 = vst.msk [vmem:[%s14 + $0x60] sm:$0xff] %vm74, %v1482
  %1515 = vst.msk [vmem:[%s14 + $0x68] sm:$0xff] %vm74, %v1483
  %1516 = vst.msk [vmem:[%s14 + $0x70] sm:$0xff] %vm74, %v1484
  %1517 = vst.msk [vmem:[%s14 + $0x78] sm:$0xff] %vm74, %v1485
  %1518 = vst.msk [vmem:[%s14 + $0x80] sm:$0xff] %vm74, %v1486
  %1519 = vst.msk [vmem:[%s14 + $0x88] sm:$0xff] %vm74, %v1487
  %1520 = vst.msk [vmem:[%s14 + $0x90] sm:$0xff] %vm74, %v1488
  %1521 = vst.msk [vmem:[%s14 + $0x98] sm:$0xff] %vm74, %v1489
  %1522 = vst.msk [vmem:[%s14 + $0xa0] sm:$0xff] %vm74, %v1490
  %1523 = vst.msk [vmem:[%s14 + $0xa8] sm:$0xff] %vm74, %v1491
  %1524 = vst.msk [vmem:[%s14 + $0xb0] sm:$0xff] %vm74, %v1492
  %1525 = vst.msk [vmem:[%s14 + $0xb8] sm:$0xff] %vm74, %v1493
  // Predicated region
  $region54: #{tpu_custom_call.1} parent=0 // pred_check
    _
  $region55: #{tpu_custom_call.1} parent=0 // pred_check_branch
    %1527 = sbr.rel (0) target = $region57
  $region56: #{tpu_custom_call.1} parent=0 // pred_region
    _
  $region57: #{tpu_custom_call.1} parent=0 // pred_fallthru
    _
  // Predicated region
  $region58: #{tpu_custom_call.1} parent=0 // pred_check
    _
  $region59: #{tpu_custom_call.1} parent=0 // pred_check_branch
    %1529 = sbr.rel (0) target = $region61
  $region60: #{tpu_custom_call.1} parent=0 // pred_region
    _
  $region61: #{tpu_custom_call.1} parent=0 // pred_fallthru
    _
  // Predicated region
  $region62: #{tpu_custom_call.1} parent=0 // pred_check
    _
  $region63: #{tpu_custom_call.1} parent=0 // pred_check_branch
    %1531 = sbr.rel (0) target = $region65
  $region64: #{tpu_custom_call.1} parent=0 // pred_region
    _
  $region65: #{tpu_custom_call.1} parent=0 // pred_fallthru
    _
  // Predicated region
  $region66: #{tpu_custom_call.1} parent=0 // pred_check
    _
  $region67: #{tpu_custom_call.1} parent=0 // pred_check_branch
    %1533 = sbr.rel (0) target = $region69
  $region68: #{tpu_custom_call.1} parent=0 // pred_region
    _
  $region69: #{tpu_custom_call.1} parent=0 // pred_fallthru
    _

</llo_original>
